<compile_context>
chip_gen: v7x
topology: tpu7x:2x2x1
jax: 0.10.0
libtpu: 0.0.40
codegen_flags: <defaults>
</compile_context>

<pallas_src>
import math
from functools import partial

import jax
import jax.numpy as jnp
from jax.experimental import pallas as pl
from jax.experimental.pallas import tpu as pltpu


def _vmem_limit_bytes(*arrays):
    """Tight-but-generous scoped-VMEM request: double-buffered copies of every
    operand/output block plus headroom for in-kernel f32 temporaries and
    compiler-internal scratch.  Capped at 32 MiB (scoped default on v6e/v7x)
    so it never asks for a v7x core's entire physical VMEM."""
    n = sum(int(a.size) * a.dtype.itemsize for a in arrays)
    return int(min(2 * n + 16 * 1024 * 1024, 32 * 1024 * 1024))


# --------------------------- in-kernel building blocks ----------------------

def _attn_heads_projected(q, k, v, wo, n_heads):
    """Per-head softmax attention, with each head's output immediately
    projected through its row-block of wo and accumulated into a single
    [L, D] f32 array (no lane-concat of head fragments).

    q: [L, D] f32, k/v: [S, D] f32, wo: [D, D] in the MXU compute dtype.
    """
    L, D = q.shape
    dh = D // n_heads
    cd = wo.dtype                                   # MXU operand dtype (bf16/f32)
    scale = 1.0 / math.sqrt(dh)
    acc = None
    for h in range(n_heads):                        # unrolled; n_heads is small
        sl = slice(h * dh, (h + 1) * dh)
        qh = (q[:, sl] * scale).astype(cd)          # scale q: O(L*dh), not O(L*S)
        kh = k[:, sl].astype(cd)
        vh = v[:, sl].astype(cd)
        s = jax.lax.dot_general(qh, kh, (((1,), (1,)), ((), ())),
                                preferred_element_type=jnp.float32)   # [L, S]
        m = jnp.max(s, axis=-1, keepdims=True)
        p = jnp.exp(s - m)
        den = jnp.sum(p, axis=-1, keepdims=True)
        oh = jnp.dot(p.astype(cd), vh, preferred_element_type=jnp.float32)
        oh = oh * pl.reciprocal(den, approx=True)   # EUP slot; per-row normalize
        # per-head output projection, accumulated on the MXU
        ph = jnp.dot(oh.astype(cd), wo[sl, :], preferred_element_type=jnp.float32)
        acc = ph if acc is None else acc + ph
    return acc                                      # [L, D] f32


def _ffn_residual(x1, w1, b1, w2, b2):
    """out = x1 + proj2(relu(proj1(x1))); all math on the resident tile."""
    cd = w1.dtype
    h = jnp.dot(x1.astype(cd), w1, preferred_element_type=jnp.float32) + b1
    h = jnp.maximum(h, 0.0)                         # relu activation
    y = jnp.dot(h.astype(cd), w2, preferred_element_type=jnp.float32) + b2
    return x1 + y


# ------------------------------- fused kernels -------------------------------

def _fused_self_kernel(x_ref, wqkv_ref, bqkv_ref, wo_ref, bo_ref,
                       w1_ref, b1_ref, w2_ref, b2_ref, o_ref, *, n_heads):
    w_qkv = wqkv_ref[...]
    cd = w_qkv.dtype
    x = x_ref[0].astype(jnp.float32)                # [L, D]
    D = x.shape[-1]
    qkv = jnp.dot(x.astype(cd), w_qkv,
                  preferred_element_type=jnp.float32) + bqkv_ref[...]  # [L, 3D]
    q, k, v = qkv[:, :D], qkv[:, D:2 * D], qkv[:, 2 * D:]
    attn = _attn_heads_projected(q, k, v, wo_ref[...], n_heads)
    x1 = x + attn + bo_ref[...]                     # residual 1, stays in VMEM
    out = _ffn_residual(x1, w1_ref[...], b1_ref[...], w2_ref[...], b2_ref[...])
    o_ref[0] = out.astype(o_ref.dtype)


def _fused_cross_kernel(x_ref, c_ref, wq_ref, bq_ref, wkv_ref, bkv_ref,
                        wo_ref, bo_ref, w1_ref, b1_ref, w2_ref, b2_ref,
                        o_ref, *, n_heads):
    w_q = wq_ref[...]
    cd = w_q.dtype
    x = x_ref[0].astype(jnp.float32)                # [L, D]
    c = c_ref[0]                                    # [S, D]
    D = x.shape[-1]
    q = jnp.dot(x.astype(cd), w_q,
                preferred_element_type=jnp.float32) + bq_ref[...]      # [L, D]
    kv = jnp.dot(c.astype(cd), wkv_ref[...],
                 preferred_element_type=jnp.float32) + bkv_ref[...]    # [S, 2D]
    k, v = kv[:, :D], kv[:, D:]
    attn = _attn_heads_projected(q, k, v, wo_ref[...], n_heads)
    x1 = x + attn + bo_ref[...]
    out = _ffn_residual(x1, w1_ref[...], b1_ref[...], w2_ref[...], b2_ref[...])
    o_ref[0] = out.astype(o_ref.dtype)


# --------------------------------- wrappers ----------------------------------

def _encoder_layer_self(x, prep, n_heads):
    B, L, D = x.shape
    assert D % n_heads == 0, (D, n_heads)
    F = prep['w1'].shape[1]
    args = (x, prep['w_qkv'], prep['b_qkv'], prep['wo'], prep['bo'],
            prep['w1'], prep['b1'], prep['w2'], prep['b2'])
    return pl.pallas_call(
        partial(_fused_self_kernel, n_heads=n_heads),
        out_shape=jax.ShapeDtypeStruct((B, L, D), x.dtype),
        grid=(B,),
        in_specs=[pl.BlockSpec((1, L, D), lambda b: (b, 0, 0)),
                  pl.BlockSpec((D, 3 * D), lambda b: (0, 0)),
                  pl.BlockSpec((1, 3 * D), lambda b: (0, 0)),
                  pl.BlockSpec((D, D), lambda b: (0, 0)),
                  pl.BlockSpec((1, D), lambda b: (0, 0)),
                  pl.BlockSpec((D, F), lambda b: (0, 0)),
                  pl.BlockSpec((1, F), lambda b: (0, 0)),
                  pl.BlockSpec((F, D), lambda b: (0, 0)),
                  pl.BlockSpec((1, D), lambda b: (0, 0))],
        out_specs=pl.BlockSpec((1, L, D), lambda b: (b, 0, 0)),
        compiler_params=pltpu.CompilerParams(
            dimension_semantics=("parallel",),      # >=2 steps -> both v7x cores
            vmem_limit_bytes=_vmem_limit_bytes(x, x, *args[1:])),
    )(*args)


def _encoder_layer_cross(x, ctx, prep, n_heads):
    B, L, D = x.shape
    assert D % n_heads == 0, (D, n_heads)
    S = ctx.shape[1]
    F = prep['w1'].shape[1]
    args = (x, ctx, prep['w_q'], prep['b_q'], prep['w_kv'], prep['b_kv'],
            prep['wo'], prep['bo'], prep['w1'], prep['b1'],
            prep['w2'], prep['b2'])
    return pl.pallas_call(
        partial(_fused_cross_kernel, n_heads=n_heads),
        out_shape=jax.ShapeDtypeStruct((B, L, D), x.dtype),
        grid=(B,),
        in_specs=[pl.BlockSpec((1, L, D), lambda b: (b, 0, 0)),
                  pl.BlockSpec((1, S, D), lambda b: (b, 0, 0)),
                  pl.BlockSpec((D, D), lambda b: (0, 0)),
                  pl.BlockSpec((1, D), lambda b: (0, 0)),
                  pl.BlockSpec((D, 2 * D), lambda b: (0, 0)),
                  pl.BlockSpec((1, 2 * D), lambda b: (0, 0)),
                  pl.BlockSpec((D, D), lambda b: (0, 0)),
                  pl.BlockSpec((1, D), lambda b: (0, 0)),
                  pl.BlockSpec((D, F), lambda b: (0, 0)),
                  pl.BlockSpec((1, F), lambda b: (0, 0)),
                  pl.BlockSpec((F, D), lambda b: (0, 0)),
                  pl.BlockSpec((1, D), lambda b: (0, 0))],
        out_specs=pl.BlockSpec((1, L, D), lambda b: (b, 0, 0)),
        compiler_params=pltpu.CompilerParams(
            dimension_semantics=("parallel",),
            vmem_limit_bytes=_vmem_limit_bytes(x, x, *args[1:])),
    )(*args)


def encoder_layer_forward(prep, x, k=None, *, n_heads):
    """PureEncoderLayer.forward (eval mode), one fused Pallas kernel."""
    if k is None:
        return _encoder_layer_self(x, prep, n_heads)
    return _encoder_layer_cross(x, k, prep, n_heads)


# --------------------- params, hoisted prep, JAX reference -------------------

def init_params(key, d_model, d_ff):
    def dense(kk, fi, fo):
        kw, kb = jax.random.split(kk)
        w = 0.05 * jax.random.normal(kw, (fi, fo), jnp.float32)
        b = 0.05 * jax.random.normal(kb, (fo,), jnp.float32)
        return w, b

    ks = jax.random.split(key, 6)
    wq, bq = dense(ks[0], d_model, d_model)
    wk, bk = dense(ks[1], d_model, d_model)
    wv, bv = dense(ks[2], d_model, d_model)
    wo, bo = dense(ks[3], d_model, d_model)
    w1, b1 = dense(ks[4], d_model, d_ff)       # nn.Linear(d_model, d_ff)
    w2, b2 = dense(ks[5], d_ff, d_model)       # nn.Linear(d_ff, d_model)
    return dict(wq=wq, bq=bq, wk=wk, bk=bk, wv=wv, bv=bv, wo=wo, bo=bo,
                w1=w1, b1=b1, w2=w2, b2=b2)


def prepare_params(params, compute_dtype=jnp.bfloat16):
    """Hoisted once per model: fuse QKV / KV weights, lay biases out as
    [1, n], and store MXU weight operands in the compute dtype (bf16 halves
    weight DMA bytes and hits the full-rate MXU path on v6e/v7x).  Biases
    stay f32 (added to f32 accumulations)."""
    p = params
    assert p['wq'].shape == p['wk'].shape == p['wv'].shape
    D = p['wq'].shape[0]
    F = p['w1'].shape[1]
    cd = compute_dtype
    f32 = jnp.float32
    w_qkv = jnp.concatenate([p['wq'], p['wk'], p['wv']], axis=1)
    b_qkv = jnp.concatenate([p['bq'], p['bk'], p['bv']]).reshape(1, 3 * D)
    w_kv = jnp.concatenate([p['wk'], p['wv']], axis=1)
    b_kv = jnp.concatenate([p['bk'], p['bv']]).reshape(1, 2 * D)
    return dict(
        w_qkv=w_qkv.astype(cd), b_qkv=b_qkv.astype(f32),
        w_q=p['wq'].astype(cd), b_q=p['bq'].reshape(1, D).astype(f32),
        w_kv=w_kv.astype(cd),   b_kv=b_kv.astype(f32),
        wo=p['wo'].astype(cd),  bo=p['bo'].reshape(1, D).astype(f32),
        w1=p['w1'].astype(cd),  b1=p['b1'].reshape(1, F).astype(f32),
        w2=p['w2'].astype(cd),  b2=p['b2'].reshape(1, D).astype(f32),
    )


def encoder_layer_reference(params, x, k=None, *, n_heads):
    """Pure-JAX f32 reference (HIGHEST precision) of the PyTorch forward."""
    hi = jax.lax.Precision.HIGHEST
    p = params
    B, L, D = x.shape
    ctx = x if k is None else k
    S = ctx.shape[1]
    dh = D // n_heads
    q = (jnp.matmul(x, p['wq'], precision=hi) + p['bq']).reshape(B, L, n_heads, dh)
    kk = (jnp.matmul(ctx, p['wk'], precision=hi) + p['bk']).reshape(B, S, n_heads, dh)
    vv = (jnp.matmul(ctx, p['wv'], precision=hi) + p['bv']).reshape(B, S, n_heads, dh)
    s = jnp.einsum('blhd,bshd->bhls', q, kk, precision=hi) / math.sqrt(dh)
    a = jax.nn.softmax(s, axis=-1)
    o = jnp.einsum('bhls,bshd->blhd', a, vv, precision=hi).reshape(B, L, D)
    x1 = x + (jnp.matmul(o, p['wo'], precision=hi) + p['bo'])
    y = jnp.maximum(jnp.matmul(x1, p['w1'], precision=hi) + p['b1'], 0.0)
    y = jnp.matmul(y, p['w2'], precision=hi) + p['b2']
    return x1 + y


# ------------------------------------ main ------------------------------------

if __name__ == "__main__":
    B, L, S = 2, 128, 64
    d_model, n_heads, d_ff = 128, 4, 512

    key = jax.random.PRNGKey(0)
    kx, kc, kp = jax.random.split(key, 3)
    x = jax.random.normal(kx, (B, L, d_model), jnp.float32)
    ctx = jax.random.normal(kc, (B, S, d_model), jnp.float32)
    params = init_params(kp, d_model, d_ff)

    # Hoisted once (review item): weight fusion / bias layout / bf16 cast are
    # not on the per-forward path.
    prep = prepare_params(params, compute_dtype=jnp.bfloat16)

    # bf16 MXU operands (f32 accumulation) vs the exact-f32 reference:
    # tolerance widened 2e-2 -> 3e-2; observed max error is ~1e-2 here.
    TOL = 3e-2

    # self-attention path (k = None)
    out = jax.block_until_ready(
        encoder_layer_forward(prep, x, None, n_heads=n_heads))
    ref = encoder_layer_reference(params, x, None, n_heads=n_heads)
    assert out.shape == (B, L, d_model), out.shape
    assert bool(jnp.all(jnp.isfinite(out)))
    err = float(jnp.max(jnp.abs(out - ref)))
    assert err < TOL, err

    # cross-attention path (explicit k)
    out_c = jax.block_until_ready(
        encoder_layer_forward(prep, x, ctx, n_heads=n_heads))
    ref_c = encoder_layer_reference(params, x, ctx, n_heads=n_heads)
    assert out_c.shape == (B, L, d_model), out_c.shape
    assert bool(jnp.all(jnp.isfinite(out_c)))
    err_c = float(jnp.max(jnp.abs(out_c - ref_c)))
    assert err_c < TOL, err_c

    print("KERNEL_OK")
</pallas_src>

<mosaic_0001>
module attributes {stable_mosaic.version = 11 : i64} {
  func.func @_fused_self_kernel(%arg0: i32, %arg1: memref<1x128x128xf32, #tpu.memory_space<vmem>>, %arg2: memref<128x384xbf16, #tpu.memory_space<vmem>>, %arg3: memref<1x384xf32, #tpu.memory_space<vmem>>, %arg4: memref<128x128xbf16, #tpu.memory_space<vmem>>, %arg5: memref<1x128xf32, #tpu.memory_space<vmem>>, %arg6: memref<128x512xbf16, #tpu.memory_space<vmem>>, %arg7: memref<1x512xf32, #tpu.memory_space<vmem>>, %arg8: memref<512x128xbf16, #tpu.memory_space<vmem>>, %arg9: memref<1x128xf32, #tpu.memory_space<vmem>>, %arg10: memref<1x128x128xf32, #tpu.memory_space<vmem>>) attributes {dimension_semantics = [#tpu.dimension_semantics<parallel>], iteration_bounds = array<i64: 2>, scalar_prefetch = 0 : i64, scratch_operands = 0 : i64, tpu.core_type = #tpu.core_type<tc>, window_params = [{transform_indices = @transform_0, window_bounds = array<i64: 1, 128, 128>}, {pipeline_mode = #tpu.pipeline_mode<synchronous>, transform_indices = @transform_1, window_bounds = array<i64: 128, 384>}, {pipeline_mode = #tpu.pipeline_mode<synchronous>, transform_indices = @transform_2, window_bounds = array<i64: 1, 384>}, {pipeline_mode = #tpu.pipeline_mode<synchronous>, transform_indices = @transform_3, window_bounds = array<i64: 128, 128>}, {pipeline_mode = #tpu.pipeline_mode<synchronous>, transform_indices = @transform_4, window_bounds = array<i64: 1, 128>}, {pipeline_mode = #tpu.pipeline_mode<synchronous>, transform_indices = @transform_5, window_bounds = array<i64: 128, 512>}, {pipeline_mode = #tpu.pipeline_mode<synchronous>, transform_indices = @transform_6, window_bounds = array<i64: 1, 512>}, {pipeline_mode = #tpu.pipeline_mode<synchronous>, transform_indices = @transform_7, window_bounds = array<i64: 512, 128>}, {pipeline_mode = #tpu.pipeline_mode<synchronous>, transform_indices = @transform_8, window_bounds = array<i64: 1, 128>}, {transform_indices = @transform_9, window_bounds = array<i64: 1, 128, 128>}]} {
    %c0 = arith.constant 0 : index
    %c0_0 = arith.constant 0 : index
    %0 = vector.load %arg2[%c0, %c0_0] : memref<128x384xbf16, #tpu.memory_space<vmem>>, vector<128x384xbf16>
    %c0_1 = arith.constant 0 : index
    %c0_2 = arith.constant 0 : index
    %c0_3 = arith.constant 0 : index
    %1 = vector.load %arg1[%c0_1, %c0_2, %c0_3] : memref<1x128x128xf32, #tpu.memory_space<vmem>>, vector<1x128x128xf32>
    %2 = vector.shape_cast %1 : vector<1x128x128xf32> to vector<128x128xf32>
    %3 = arith.truncf %2 : vector<128x128xf32> to vector<128x128xbf16>
    %cst = arith.constant dense<0.000000e+00> : vector<128x384xf32>
    %4 = tpu.matmul %3, %0, %cst {dimension_numbers = #tpu.dot_dimension_numbers<[1], [0], [0], [1], [0, 0, 1, 1], [], []>} : vector<128x128xbf16>, vector<128x384xbf16>, vector<128x384xf32> -> vector<128x384xf32>
    %c0_4 = arith.constant 0 : index
    %c0_5 = arith.constant 0 : index
    %5 = vector.load %arg3[%c0_4, %c0_5] : memref<1x384xf32, #tpu.memory_space<vmem>>, vector<1x384xf32>
    %6 = vector.broadcast %5 : vector<1x384xf32> to vector<128x384xf32>
    %7 = arith.addf %4, %6 : vector<128x384xf32>
    %8 = vector.extract_strided_slice %7 {offsets = [0, 0], sizes = [128, 128], strides = [1, 1]} : vector<128x384xf32> to vector<128x128xf32>
    %9 = vector.extract_strided_slice %7 {offsets = [0, 128], sizes = [128, 128], strides = [1, 1]} : vector<128x384xf32> to vector<128x128xf32>
    %10 = vector.extract_strided_slice %7 {offsets = [0, 256], sizes = [128, 128], strides = [1, 1]} : vector<128x384xf32> to vector<128x128xf32>
    %c0_6 = arith.constant 0 : index
    %c0_7 = arith.constant 0 : index
    %11 = vector.load %arg4[%c0_6, %c0_7] : memref<128x128xbf16, #tpu.memory_space<vmem>>, vector<128x128xbf16>
    %12 = vector.extract_strided_slice %8 {offsets = [0, 0], sizes = [128, 32], strides = [1, 1]} : vector<128x128xf32> to vector<128x32xf32>
    %cst_8 = arith.constant 0.176776692 : f32
    %13 = vector.broadcast %cst_8 : f32 to vector<128x32xf32>
    %14 = arith.mulf %12, %13 : vector<128x32xf32>
    %15 = arith.truncf %14 : vector<128x32xf32> to vector<128x32xbf16>
    %16 = vector.extract_strided_slice %9 {offsets = [0, 0], sizes = [128, 32], strides = [1, 1]} : vector<128x128xf32> to vector<128x32xf32>
    %17 = arith.truncf %16 : vector<128x32xf32> to vector<128x32xbf16>
    %18 = vector.extract_strided_slice %10 {offsets = [0, 0], sizes = [128, 32], strides = [1, 1]} : vector<128x128xf32> to vector<128x32xf32>
    %19 = arith.truncf %18 : vector<128x32xf32> to vector<128x32xbf16>
    %cst_9 = arith.constant dense<0.000000e+00> : vector<128x128xf32>
    %20 = tpu.matmul %15, %17, %cst_9 {dimension_numbers = #tpu.dot_dimension_numbers<[1], [1], [0], [0], [0, 0, 1, 0], [], []>} : vector<128x32xbf16>, vector<128x32xbf16>, vector<128x128xf32> -> vector<128x128xf32>
    %cst_10 = arith.constant dense<0xFF800000> : vector<128xf32>
    %21 = vector.multi_reduction <maximumf>, %20, %cst_10 [1] : vector<128x128xf32> to vector<128xf32>
    %22 = vector.shape_cast %21 : vector<128xf32> to vector<128x1xf32>
    %23 = vector.broadcast %22 : vector<128x1xf32> to vector<128x128xf32>
    %24 = arith.subf %20, %23 : vector<128x128xf32>
    %25 = math.exp %24 : vector<128x128xf32>
    %cst_11 = arith.constant dense<0.000000e+00> : vector<128xf32>
    %26 = vector.multi_reduction <add>, %25, %cst_11 [1] : vector<128x128xf32> to vector<128xf32>
    %27 = vector.shape_cast %26 : vector<128xf32> to vector<128x1xf32>
    %28 = arith.truncf %25 : vector<128x128xf32> to vector<128x128xbf16>
    %cst_12 = arith.constant dense<0.000000e+00> : vector<128x32xf32>
    %29 = tpu.matmul %28, %19, %cst_12 {dimension_numbers = #tpu.dot_dimension_numbers<[1], [0], [0], [1], [0, 0, 1, 1], [], []>} : vector<128x128xbf16>, vector<128x32xbf16>, vector<128x32xf32> -> vector<128x32xf32>
    %30 = tpu.reciprocal %27 {approx = true} : vector<128x1xf32> -> vector<128x1xf32>
    %31 = vector.broadcast %30 : vector<128x1xf32> to vector<128x32xf32>
    %32 = arith.mulf %29, %31 : vector<128x32xf32>
    %33 = arith.truncf %32 : vector<128x32xf32> to vector<128x32xbf16>
    %34 = vector.extract_strided_slice %11 {offsets = [0, 0], sizes = [32, 128], strides = [1, 1]} : vector<128x128xbf16> to vector<32x128xbf16>
    %cst_13 = arith.constant dense<0.000000e+00> : vector<128x128xf32>
    %35 = tpu.matmul %33, %34, %cst_13 {dimension_numbers = #tpu.dot_dimension_numbers<[1], [0], [0], [1], [0, 0, 1, 1], [], []>} : vector<128x32xbf16>, vector<32x128xbf16>, vector<128x128xf32> -> vector<128x128xf32>
    %36 = vector.extract_strided_slice %8 {offsets = [0, 32], sizes = [128, 32], strides = [1, 1]} : vector<128x128xf32> to vector<128x32xf32>
    %cst_14 = arith.constant 0.176776692 : f32
    %37 = vector.broadcast %cst_14 : f32 to vector<128x32xf32>
    %38 = arith.mulf %36, %37 : vector<128x32xf32>
    %39 = arith.truncf %38 : vector<128x32xf32> to vector<128x32xbf16>
    %40 = vector.extract_strided_slice %9 {offsets = [0, 32], sizes = [128, 32], strides = [1, 1]} : vector<128x128xf32> to vector<128x32xf32>
    %41 = arith.truncf %40 : vector<128x32xf32> to vector<128x32xbf16>
    %42 = vector.extract_strided_slice %10 {offsets = [0, 32], sizes = [128, 32], strides = [1, 1]} : vector<128x128xf32> to vector<128x32xf32>
    %43 = arith.truncf %42 : vector<128x32xf32> to vector<128x32xbf16>
    %cst_15 = arith.constant dense<0.000000e+00> : vector<128x128xf32>
    %44 = tpu.matmul %39, %41, %cst_15 {dimension_numbers = #tpu.dot_dimension_numbers<[1], [1], [0], [0], [0, 0, 1, 0], [], []>} : vector<128x32xbf16>, vector<128x32xbf16>, vector<128x128xf32> -> vector<128x128xf32>
    %cst_16 = arith.constant dense<0xFF800000> : vector<128xf32>
    %45 = vector.multi_reduction <maximumf>, %44, %cst_16 [1] : vector<128x128xf32> to vector<128xf32>
    %46 = vector.shape_cast %45 : vector<128xf32> to vector<128x1xf32>
    %47 = vector.broadcast %46 : vector<128x1xf32> to vector<128x128xf32>
    %48 = arith.subf %44, %47 : vector<128x128xf32>
    %49 = math.exp %48 : vector<128x128xf32>
    %cst_17 = arith.constant dense<0.000000e+00> : vector<128xf32>
    %50 = vector.multi_reduction <add>, %49, %cst_17 [1] : vector<128x128xf32> to vector<128xf32>
    %51 = vector.shape_cast %50 : vector<128xf32> to vector<128x1xf32>
    %52 = arith.truncf %49 : vector<128x128xf32> to vector<128x128xbf16>
    %cst_18 = arith.constant dense<0.000000e+00> : vector<128x32xf32>
    %53 = tpu.matmul %52, %43, %cst_18 {dimension_numbers = #tpu.dot_dimension_numbers<[1], [0], [0], [1], [0, 0, 1, 1], [], []>} : vector<128x128xbf16>, vector<128x32xbf16>, vector<128x32xf32> -> vector<128x32xf32>
    %54 = tpu.reciprocal %51 {approx = true} : vector<128x1xf32> -> vector<128x1xf32>
    %55 = vector.broadcast %54 : vector<128x1xf32> to vector<128x32xf32>
    %56 = arith.mulf %53, %55 : vector<128x32xf32>
    %57 = arith.truncf %56 : vector<128x32xf32> to vector<128x32xbf16>
    %58 = vector.extract_strided_slice %11 {offsets = [32, 0], sizes = [32, 128], strides = [1, 1]} : vector<128x128xbf16> to vector<32x128xbf16>
    %cst_19 = arith.constant dense<0.000000e+00> : vector<128x128xf32>
    %59 = tpu.matmul %57, %58, %cst_19 {dimension_numbers = #tpu.dot_dimension_numbers<[1], [0], [0], [1], [0, 0, 1, 1], [], []>} : vector<128x32xbf16>, vector<32x128xbf16>, vector<128x128xf32> -> vector<128x128xf32>
    %60 = arith.addf %35, %59 : vector<128x128xf32>
    %61 = vector.extract_strided_slice %8 {offsets = [0, 64], sizes = [128, 32], strides = [1, 1]} : vector<128x128xf32> to vector<128x32xf32>
    %cst_20 = arith.constant 0.176776692 : f32
    %62 = vector.broadcast %cst_20 : f32 to vector<128x32xf32>
    %63 = arith.mulf %61, %62 : vector<128x32xf32>
    %64 = arith.truncf %63 : vector<128x32xf32> to vector<128x32xbf16>
    %65 = vector.extract_strided_slice %9 {offsets = [0, 64], sizes = [128, 32], strides = [1, 1]} : vector<128x128xf32> to vector<128x32xf32>
    %66 = arith.truncf %65 : vector<128x32xf32> to vector<128x32xbf16>
    %67 = vector.extract_strided_slice %10 {offsets = [0, 64], sizes = [128, 32], strides = [1, 1]} : vector<128x128xf32> to vector<128x32xf32>
    %68 = arith.truncf %67 : vector<128x32xf32> to vector<128x32xbf16>
    %cst_21 = arith.constant dense<0.000000e+00> : vector<128x128xf32>
    %69 = tpu.matmul %64, %66, %cst_21 {dimension_numbers = #tpu.dot_dimension_numbers<[1], [1], [0], [0], [0, 0, 1, 0], [], []>} : vector<128x32xbf16>, vector<128x32xbf16>, vector<128x128xf32> -> vector<128x128xf32>
    %cst_22 = arith.constant dense<0xFF800000> : vector<128xf32>
    %70 = vector.multi_reduction <maximumf>, %69, %cst_22 [1] : vector<128x128xf32> to vector<128xf32>
    %71 = vector.shape_cast %70 : vector<128xf32> to vector<128x1xf32>
    %72 = vector.broadcast %71 : vector<128x1xf32> to vector<128x128xf32>
    %73 = arith.subf %69, %72 : vector<128x128xf32>
    %74 = math.exp %73 : vector<128x128xf32>
    %cst_23 = arith.constant dense<0.000000e+00> : vector<128xf32>
    %75 = vector.multi_reduction <add>, %74, %cst_23 [1] : vector<128x128xf32> to vector<128xf32>
    %76 = vector.shape_cast %75 : vector<128xf32> to vector<128x1xf32>
    %77 = arith.truncf %74 : vector<128x128xf32> to vector<128x128xbf16>
    %cst_24 = arith.constant dense<0.000000e+00> : vector<128x32xf32>
    %78 = tpu.matmul %77, %68, %cst_24 {dimension_numbers = #tpu.dot_dimension_numbers<[1], [0], [0], [1], [0, 0, 1, 1], [], []>} : vector<128x128xbf16>, vector<128x32xbf16>, vector<128x32xf32> -> vector<128x32xf32>
    %79 = tpu.reciprocal %76 {approx = true} : vector<128x1xf32> -> vector<128x1xf32>
    %80 = vector.broadcast %79 : vector<128x1xf32> to vector<128x32xf32>
    %81 = arith.mulf %78, %80 : vector<128x32xf32>
    %82 = arith.truncf %81 : vector<128x32xf32> to vector<128x32xbf16>
    %83 = vector.extract_strided_slice %11 {offsets = [64, 0], sizes = [32, 128], strides = [1, 1]} : vector<128x128xbf16> to vector<32x128xbf16>
    %cst_25 = arith.constant dense<0.000000e+00> : vector<128x128xf32>
    %84 = tpu.matmul %82, %83, %cst_25 {dimension_numbers = #tpu.dot_dimension_numbers<[1], [0], [0], [1], [0, 0, 1, 1], [], []>} : vector<128x32xbf16>, vector<32x128xbf16>, vector<128x128xf32> -> vector<128x128xf32>
    %85 = arith.addf %60, %84 : vector<128x128xf32>
    %86 = vector.extract_strided_slice %8 {offsets = [0, 96], sizes = [128, 32], strides = [1, 1]} : vector<128x128xf32> to vector<128x32xf32>
    %cst_26 = arith.constant 0.176776692 : f32
    %87 = vector.broadcast %cst_26 : f32 to vector<128x32xf32>
    %88 = arith.mulf %86, %87 : vector<128x32xf32>
    %89 = arith.truncf %88 : vector<128x32xf32> to vector<128x32xbf16>
    %90 = vector.extract_strided_slice %9 {offsets = [0, 96], sizes = [128, 32], strides = [1, 1]} : vector<128x128xf32> to vector<128x32xf32>
    %91 = arith.truncf %90 : vector<128x32xf32> to vector<128x32xbf16>
    %92 = vector.extract_strided_slice %10 {offsets = [0, 96], sizes = [128, 32], strides = [1, 1]} : vector<128x128xf32> to vector<128x32xf32>
    %93 = arith.truncf %92 : vector<128x32xf32> to vector<128x32xbf16>
    %cst_27 = arith.constant dense<0.000000e+00> : vector<128x128xf32>
    %94 = tpu.matmul %89, %91, %cst_27 {dimension_numbers = #tpu.dot_dimension_numbers<[1], [1], [0], [0], [0, 0, 1, 0], [], []>} : vector<128x32xbf16>, vector<128x32xbf16>, vector<128x128xf32> -> vector<128x128xf32>
    %cst_28 = arith.constant dense<0xFF800000> : vector<128xf32>
    %95 = vector.multi_reduction <maximumf>, %94, %cst_28 [1] : vector<128x128xf32> to vector<128xf32>
    %96 = vector.shape_cast %95 : vector<128xf32> to vector<128x1xf32>
    %97 = vector.broadcast %96 : vector<128x1xf32> to vector<128x128xf32>
    %98 = arith.subf %94, %97 : vector<128x128xf32>
    %99 = math.exp %98 : vector<128x128xf32>
    %cst_29 = arith.constant dense<0.000000e+00> : vector<128xf32>
    %100 = vector.multi_reduction <add>, %99, %cst_29 [1] : vector<128x128xf32> to vector<128xf32>
    %101 = vector.shape_cast %100 : vector<128xf32> to vector<128x1xf32>
    %102 = arith.truncf %99 : vector<128x128xf32> to vector<128x128xbf16>
    %cst_30 = arith.constant dense<0.000000e+00> : vector<128x32xf32>
    %103 = tpu.matmul %102, %93, %cst_30 {dimension_numbers = #tpu.dot_dimension_numbers<[1], [0], [0], [1], [0, 0, 1, 1], [], []>} : vector<128x128xbf16>, vector<128x32xbf16>, vector<128x32xf32> -> vector<128x32xf32>
    %104 = tpu.reciprocal %101 {approx = true} : vector<128x1xf32> -> vector<128x1xf32>
    %105 = vector.broadcast %104 : vector<128x1xf32> to vector<128x32xf32>
    %106 = arith.mulf %103, %105 : vector<128x32xf32>
    %107 = arith.truncf %106 : vector<128x32xf32> to vector<128x32xbf16>
    %108 = vector.extract_strided_slice %11 {offsets = [96, 0], sizes = [32, 128], strides = [1, 1]} : vector<128x128xbf16> to vector<32x128xbf16>
    %cst_31 = arith.constant dense<0.000000e+00> : vector<128x128xf32>
    %109 = tpu.matmul %107, %108, %cst_31 {dimension_numbers = #tpu.dot_dimension_numbers<[1], [0], [0], [1], [0, 0, 1, 1], [], []>} : vector<128x32xbf16>, vector<32x128xbf16>, vector<128x128xf32> -> vector<128x128xf32>
    %110 = arith.addf %85, %109 : vector<128x128xf32>
    %111 = arith.addf %2, %110 : vector<128x128xf32>
    %c0_32 = arith.constant 0 : index
    %c0_33 = arith.constant 0 : index
    %112 = vector.load %arg5[%c0_32, %c0_33] : memref<1x128xf32, #tpu.memory_space<vmem>>, vector<1x128xf32>
    %113 = vector.broadcast %112 : vector<1x128xf32> to vector<128x128xf32>
    %114 = arith.addf %111, %113 : vector<128x128xf32>
    %c0_34 = arith.constant 0 : index
    %c0_35 = arith.constant 0 : index
    %115 = vector.load %arg6[%c0_34, %c0_35] : memref<128x512xbf16, #tpu.memory_space<vmem>>, vector<128x512xbf16>
    %c0_36 = arith.constant 0 : index
    %c0_37 = arith.constant 0 : index
    %116 = vector.load %arg7[%c0_36, %c0_37] : memref<1x512xf32, #tpu.memory_space<vmem>>, vector<1x512xf32>
    %c0_38 = arith.constant 0 : index
    %c0_39 = arith.constant 0 : index
    %117 = vector.load %arg8[%c0_38, %c0_39] : memref<512x128xbf16, #tpu.memory_space<vmem>>, vector<512x128xbf16>
    %c0_40 = arith.constant 0 : index
    %c0_41 = arith.constant 0 : index
    %118 = vector.load %arg9[%c0_40, %c0_41] : memref<1x128xf32, #tpu.memory_space<vmem>>, vector<1x128xf32>
    %119 = arith.truncf %114 : vector<128x128xf32> to vector<128x128xbf16>
    %cst_42 = arith.constant dense<0.000000e+00> : vector<128x512xf32>
    %120 = tpu.matmul %119, %115, %cst_42 {dimension_numbers = #tpu.dot_dimension_numbers<[1], [0], [0], [1], [0, 0, 1, 1], [], []>} : vector<128x128xbf16>, vector<128x512xbf16>, vector<128x512xf32> -> vector<128x512xf32>
    %121 = vector.broadcast %116 : vector<1x512xf32> to vector<128x512xf32>
    %122 = arith.addf %120, %121 : vector<128x512xf32>
    %cst_43 = arith.constant 0.000000e+00 : f32
    %123 = vector.broadcast %cst_43 : f32 to vector<128x512xf32>
    %124 = arith.maximumf %122, %123 : vector<128x512xf32>
    %125 = arith.truncf %124 : vector<128x512xf32> to vector<128x512xbf16>
    %cst_44 = arith.constant dense<0.000000e+00> : vector<128x128xf32>
    %126 = tpu.matmul %125, %117, %cst_44 {dimension_numbers = #tpu.dot_dimension_numbers<[1], [0], [0], [1], [0, 0, 1, 1], [], []>} : vector<128x512xbf16>, vector<512x128xbf16>, vector<128x128xf32> -> vector<128x128xf32>
    %127 = vector.broadcast %118 : vector<1x128xf32> to vector<128x128xf32>
    %128 = arith.addf %126, %127 : vector<128x128xf32>
    %129 = arith.addf %114, %128 : vector<128x128xf32>
    %c0_45 = arith.constant 0 : index
    %c0_46 = arith.constant 0 : index
    %c0_47 = arith.constant 0 : index
    %130 = vector.load %arg10[%c0_45, %c0_46, %c0_47] : memref<1x128x128xf32, #tpu.memory_space<vmem>>, vector<1x128x128xf32>
    %131 = vector.shape_cast %130 : vector<1x128x128xf32> to vector<128x128xf32>
    %132 = vector.shape_cast %129 : vector<128x128xf32> to vector<1x128x128xf32>
    tpu.vector_store %arg10[%c0_45, %c0_46, %c0_47], %132 {strides = array<i32>} : memref<1x128x128xf32, #tpu.memory_space<vmem>>, vector<1x128x128xf32>,
    return
  }
  func.func @transform_0(%arg0: i32) -> (i32, i32, i32) {
    %c0_i32 = arith.constant 0 : i32
    %c0_i32_0 = arith.constant 0 : i32
    %c0_i32_1 = arith.constant 0 : i32
    return %arg0, %c0_i32, %c0_i32_0 : i32, i32, i32
  }
  func.func @transform_1(%arg0: i32) -> (i32, i32) {
    %c0_i32 = arith.constant 0 : i32
    %c0_i32_0 = arith.constant 0 : i32
    %c0_i32_1 = arith.constant 0 : i32
    return %c0_i32, %c0_i32_0 : i32, i32
  }
  func.func @transform_2(%arg0: i32) -> (i32, i32) {
    %c0_i32 = arith.constant 0 : i32
    %c0_i32_0 = arith.constant 0 : i32
    %c0_i32_1 = arith.constant 0 : i32
    return %c0_i32, %c0_i32_0 : i32, i32
  }
  func.func @transform_3(%arg0: i32) -> (i32, i32) {
    %c0_i32 = arith.constant 0 : i32
    %c0_i32_0 = arith.constant 0 : i32
    %c0_i32_1 = arith.constant 0 : i32
    return %c0_i32, %c0_i32_0 : i32, i32
  }
  func.func @transform_4(%arg0: i32) -> (i32, i32) {
    %c0_i32 = arith.constant 0 : i32
    %c0_i32_0 = arith.constant 0 : i32
    %c0_i32_1 = arith.constant 0 : i32
    return %c0_i32, %c0_i32_0 : i32, i32
  }
  func.func @transform_5(%arg0: i32) -> (i32, i32) {
    %c0_i32 = arith.constant 0 : i32
    %c0_i32_0 = arith.constant 0 : i32
    %c0_i32_1 = arith.constant 0 : i32
    return %c0_i32, %c0_i32_0 : i32, i32
  }
  func.func @transform_6(%arg0: i32) -> (i32, i32) {
    %c0_i32 = arith.constant 0 : i32
    %c0_i32_0 = arith.constant 0 : i32
    %c0_i32_1 = arith.constant 0 : i32
    return %c0_i32, %c0_i32_0 : i32, i32
  }
  func.func @transform_7(%arg0: i32) -> (i32, i32) {
    %c0_i32 = arith.constant 0 : i32
    %c0_i32_0 = arith.constant 0 : i32
    %c0_i32_1 = arith.constant 0 : i32
    return %c0_i32, %c0_i32_0 : i32, i32
  }
  func.func @transform_8(%arg0: i32) -> (i32, i32) {
    %c0_i32 = arith.constant 0 : i32
    %c0_i32_0 = arith.constant 0 : i32
    %c0_i32_1 = arith.constant 0 : i32
    return %c0_i32, %c0_i32_0 : i32, i32
  }
  func.func @transform_9(%arg0: i32) -> (i32, i32, i32) {
    %c0_i32 = arith.constant 0 : i32
    %c0_i32_0 = arith.constant 0 : i32
    %c0_i32_1 = arith.constant 0 : i32
    return %arg0, %c0_i32, %c0_i32_0 : i32, i32, i32
  }
}

</mosaic_0001>

<llo_original>
// kernel: tpu_custom_call.1
$region0: #{tpu_custom_call.1}
  #allocation0 [shape = 'u32[]', space=smem, size = 0x4, offset = 0x4, fixed_abs, tag = 'smem constant byte address 0x4 - core index']
  #allocation1 [shape = 'u32[144,128]{1,0:T(1,128)}', space=vmem, size = 0x12000, scoped, tag = 'internal scratch']
  %s0 = inlined_call_operand.hbm [shape: f32[2,128,128], index: 0, kind: input, shape index: {}]
  %s1 = inlined_call_operand.hbm [shape: bf16[128,384], index: 1, kind: input, shape index: {}]
  %s2 = inlined_call_operand.vmem [shape: f32[1,384], index: 2, kind: input, shape index: {}]
  %s3 = inlined_call_operand.hbm [shape: bf16[128,128], index: 3, kind: input, shape index: {}]
  %s4 = inlined_call_operand.vmem [shape: f32[1,128], index: 4, kind: input, shape index: {}]
  %s5 = inlined_call_operand.hbm [shape: bf16[128,512], index: 5, kind: input, shape index: {}]
  %s6 = inlined_call_operand.vmem [shape: f32[1,512], index: 6, kind: input, shape index: {}]
  %s7 = inlined_call_operand.hbm [shape: bf16[512,128], index: 7, kind: input, shape index: {}]
  %s8 = inlined_call_operand.vmem [shape: f32[1,128], index: 8, kind: input, shape index: {}]
  %s9 = inlined_call_operand.hbm [shape: f32[2,128,128], index: 9, kind: output, shape index: {}]
  %s10 = sld [smem:[#allocation0]]
  $region89: #{tpu_custom_call.1} parent=0
    _
  %s12 = ssub.s32 1, %s10
  %s13 = scalar_select 0, %s12, %s10
  $region1: #{tpu_custom_call.1} parent=0
    #allocation2 [shape = 'u8[131072]{0}', space=vmem, size = 0x20000, scoped, tag = 'input window, operand 0']
    #allocation3 [shape = 's32[2]{0}', space=sflag, size = 0x8, scoped, tag = 'scoped memory for tpu_custom_call.1']
    #allocation4 [shape = 's32[2]{0}', space=sflag, size = 0x8, scoped, tag = 'scoped memory for tpu_custom_call.1']
    #allocation5 [shape = 'u8[98304]{0}', space=vmem, size = 0x18000, scoped, tag = 'input window, operand 1, single buffered']
    #allocation6 [shape = 's32[1]{0}', space=sflag, size = 0x4, scoped, tag = 'scoped memory for tpu_custom_call.1']
    #allocation7 [shape = 'u8[32768]{0}', space=vmem, size = 0x8000, scoped, tag = 'input window, operand 3, single buffered']
    #allocation8 [shape = 'u8[131072]{0}', space=vmem, size = 0x20000, scoped, tag = 'input window, operand 5, single buffered']
    #allocation9 [shape = 's32[1]{0}', space=sflag, size = 0x4, scoped, tag = 'scoped memory for tpu_custom_call.1']
    #allocation10 [shape = 'u8[131072]{0}', space=vmem, size = 0x20000, scoped, tag = 'input window, operand 7, single buffered']
    #allocation11 [shape = 'u8[131072]{0}', space=vmem, size = 0x20000, scoped, tag = 'output window, operand 0']
    %14 = vsyncpa [#allocation3], 0
    %s15 = scalar_lea.sflag [#allocation3], 1
    %16 = vsyncpa %s15, 0
    %17 = vsyncpa [#allocation6], 0
    %18 = vsyncpa [#allocation9], 0
    %19 = vsyncpa [#allocation4], 0
    %s20 = scalar_lea.sflag [#allocation4], 1
    %21 = vsyncpa %s20, 0
    loop: start=0, step=1, limit=4
    $region2: #{tpu_custom_call.1} parent=1 // loop_pre_header
      _
    $region3: #{tpu_custom_call.1} parent=1 // loop_header
      %s23 = sphi 0, %s27
      %p24 = scmp.ge.s32.totalorder %s23, 4
      %s33 = sphi 0, %s35
      %s36 = sphi 0, %s33
      %s37 = sphi 0, %s36
      %s53 = sphi 0, %s37
      %s57 = sphi 0, %s57
      %s59 = sphi 0, %s57
      %s60 = sphi 0, %s59
      %s74 = sphi 0, %s60
      %s78 = sphi 0, %s78
      %s80 = sphi 0, %s78
      %s81 = sphi 0, %s80
      %s95 = sphi 0, %s81
      %s99 = sphi 0, %s99
      %s101 = sphi 0, %s99
      %s102 = sphi 0, %s101
      %s116 = sphi 0, %s102
      %s120 = sphi 0, %s120
      %s122 = sphi 0, %s120
      %s123 = sphi 0, %s122
      %s137 = sphi 0, %s123
      %s141 = sphi 0, %s141
      %s143 = sphi 0, %s141
      %s144 = sphi 0, %s143
      %s158 = sphi 0, %s144
      %s162 = sphi 0, %s162
      %s164 = sphi 0, %s162
      %s165 = sphi 0, %s164
      %s179 = sphi 0, %s165
      %s183 = sphi 0, %s183
      %s185 = sphi 0, %s183
      %s186 = sphi 0, %s185
      %s200 = sphi 0, %s186
      %s204 = sphi 0, %s204
      %s206 = sphi 0, %s204
      %s207 = sphi 0, %s206
      %s221 = sphi 0, %s207
      %s227 = sphi 0, %s229
      %s230 = sphi 0, %s227
      %s231 = sphi 0, %s230
      %s247 = sphi 0, %s231
    $region4: #{tpu_custom_call.1} parent=1 // loop_header_branch
      %26 = sbr.rel (%p24) target = $region8
    $region5: #{tpu_custom_call.1} parent=1 // loop_body
      %s28 = ssub.s32 %s23, 1
      %s29 = ssub.s32 %s23, 2
      %s30 = sadd.s32 %s23, 1
      %s31 = ssub.s32 %s23, %s30
      %p32 = scmp.eq.s32.totalorder %s31, 0
      %s34 = sadd.s32 %s33, 1
      %s35 = scalar_select %p32, %s33, %s34
      %p38 = pneg %p32
      %p39 = scmp.eq.s32.totalorder %s23, 1
      %p40 = por %p38, %p39
      %p41 = scmp.ne.s32.totalorder %s33, %s36
      %p42 = scmp.eq.s32.totalorder %s23, 0
      %p43 = por %p41, %p42
      %p44 = scmp.ne.s32.totalorder %s33, %s36
      %p45 = scmp.eq.s32.totalorder %s28, 1
      %p46 = por %p44, %p45
      %p47 = scmp.ne.s32.totalorder %s36, %s37
      %p48 = scmp.eq.s32.totalorder %s28, 0
      %p49 = por %p47, %p48
      %p50 = scmp.ne.s32.totalorder %s36, %s37
      %p51 = scmp.eq.s32.totalorder %s29, 1
      %p52 = por %p50, %p51
      %p54 = scmp.ne.s32.totalorder %s37, %s53
      %p55 = scmp.eq.s32.totalorder %s29, 0
      %p56 = por %p54, %p55
      %s58 = sadd.s32 %s57, 1
      %p61 = scmp.eq.s32.totalorder %s23, 1
      %p62 = scmp.ne.s32.totalorder %s57, %s59
      %p63 = scmp.eq.s32.totalorder %s23, 0
      %p64 = por %p62, %p63
      %p65 = scmp.ne.s32.totalorder %s57, %s59
      %p66 = scmp.eq.s32.totalorder %s28, 1
      %p67 = por %p65, %p66
      %p68 = scmp.ne.s32.totalorder %s59, %s60
      %p69 = scmp.eq.s32.totalorder %s28, 0
      %p70 = por %p68, %p69
      %p71 = scmp.ne.s32.totalorder %s59, %s60
      %p72 = scmp.eq.s32.totalorder %s29, 1
      %p73 = por %p71, %p72
      %p75 = scmp.ne.s32.totalorder %s60, %s74
      %p76 = scmp.eq.s32.totalorder %s29, 0
      %p77 = por %p75, %p76
      %s79 = sadd.s32 %s78, 1
      %p82 = scmp.eq.s32.totalorder %s23, 1
      %p83 = scmp.ne.s32.totalorder %s78, %s80
      %p84 = scmp.eq.s32.totalorder %s23, 0
      %p85 = por %p83, %p84
      %p86 = scmp.ne.s32.totalorder %s78, %s80
      %p87 = scmp.eq.s32.totalorder %s28, 1
      %p88 = por %p86, %p87
      %p89 = scmp.ne.s32.totalorder %s80, %s81
      %p90 = scmp.eq.s32.totalorder %s28, 0
      %p91 = por %p89, %p90
      %p92 = scmp.ne.s32.totalorder %s80, %s81
      %p93 = scmp.eq.s32.totalorder %s29, 1
      %p94 = por %p92, %p93
      %p96 = scmp.ne.s32.totalorder %s81, %s95
      %p97 = scmp.eq.s32.totalorder %s29, 0
      %p98 = por %p96, %p97
      %s100 = sadd.s32 %s99, 1
      %p103 = scmp.eq.s32.totalorder %s23, 1
      %p104 = scmp.ne.s32.totalorder %s99, %s101
      %p105 = scmp.eq.s32.totalorder %s23, 0
      %p106 = por %p104, %p105
      %p107 = scmp.ne.s32.totalorder %s99, %s101
      %p108 = scmp.eq.s32.totalorder %s28, 1
      %p109 = por %p107, %p108
      %p110 = scmp.ne.s32.totalorder %s101, %s102
      %p111 = scmp.eq.s32.totalorder %s28, 0
      %p112 = por %p110, %p111
      %p113 = scmp.ne.s32.totalorder %s101, %s102
      %p114 = scmp.eq.s32.totalorder %s29, 1
      %p115 = por %p113, %p114
      %p117 = scmp.ne.s32.totalorder %s102, %s116
      %p118 = scmp.eq.s32.totalorder %s29, 0
      %p119 = por %p117, %p118
      %s121 = sadd.s32 %s120, 1
      %p124 = scmp.eq.s32.totalorder %s23, 1
      %p125 = scmp.ne.s32.totalorder %s120, %s122
      %p126 = scmp.eq.s32.totalorder %s23, 0
      %p127 = por %p125, %p126
      %p128 = scmp.ne.s32.totalorder %s120, %s122
      %p129 = scmp.eq.s32.totalorder %s28, 1
      %p130 = por %p128, %p129
      %p131 = scmp.ne.s32.totalorder %s122, %s123
      %p132 = scmp.eq.s32.totalorder %s28, 0
      %p133 = por %p131, %p132
      %p134 = scmp.ne.s32.totalorder %s122, %s123
      %p135 = scmp.eq.s32.totalorder %s29, 1
      %p136 = por %p134, %p135
      %p138 = scmp.ne.s32.totalorder %s123, %s137
      %p139 = scmp.eq.s32.totalorder %s29, 0
      %p140 = por %p138, %p139
      %s142 = sadd.s32 %s141, 1
      %p145 = scmp.eq.s32.totalorder %s23, 1
      %p146 = scmp.ne.s32.totalorder %s141, %s143
      %p147 = scmp.eq.s32.totalorder %s23, 0
      %p148 = por %p146, %p147
      %p149 = scmp.ne.s32.totalorder %s141, %s143
      %p150 = scmp.eq.s32.totalorder %s28, 1
      %p151 = por %p149, %p150
      %p152 = scmp.ne.s32.totalorder %s143, %s144
      %p153 = scmp.eq.s32.totalorder %s28, 0
      %p154 = por %p152, %p153
      %p155 = scmp.ne.s32.totalorder %s143, %s144
      %p156 = scmp.eq.s32.totalorder %s29, 1
      %p157 = por %p155, %p156
      %p159 = scmp.ne.s32.totalorder %s144, %s158
      %p160 = scmp.eq.s32.totalorder %s29, 0
      %p161 = por %p159, %p160
      %s163 = sadd.s32 %s162, 1
      %p166 = scmp.eq.s32.totalorder %s23, 1
      %p167 = scmp.ne.s32.totalorder %s162, %s164
      %p168 = scmp.eq.s32.totalorder %s23, 0
      %p169 = por %p167, %p168
      %p170 = scmp.ne.s32.totalorder %s162, %s164
      %p171 = scmp.eq.s32.totalorder %s28, 1
      %p172 = por %p170, %p171
      %p173 = scmp.ne.s32.totalorder %s164, %s165
      %p174 = scmp.eq.s32.totalorder %s28, 0
      %p175 = por %p173, %p174
      %p176 = scmp.ne.s32.totalorder %s164, %s165
      %p177 = scmp.eq.s32.totalorder %s29, 1
      %p178 = por %p176, %p177
      %p180 = scmp.ne.s32.totalorder %s165, %s179
      %p181 = scmp.eq.s32.totalorder %s29, 0
      %p182 = por %p180, %p181
      %s184 = sadd.s32 %s183, 1
      %p187 = scmp.eq.s32.totalorder %s23, 1
      %p188 = scmp.ne.s32.totalorder %s183, %s185
      %p189 = scmp.eq.s32.totalorder %s23, 0
      %p190 = por %p188, %p189
      %p191 = scmp.ne.s32.totalorder %s183, %s185
      %p192 = scmp.eq.s32.totalorder %s28, 1
      %p193 = por %p191, %p192
      %p194 = scmp.ne.s32.totalorder %s185, %s186
      %p195 = scmp.eq.s32.totalorder %s28, 0
      %p196 = por %p194, %p195
      %p197 = scmp.ne.s32.totalorder %s185, %s186
      %p198 = scmp.eq.s32.totalorder %s29, 1
      %p199 = por %p197, %p198
      %p201 = scmp.ne.s32.totalorder %s186, %s200
      %p202 = scmp.eq.s32.totalorder %s29, 0
      %p203 = por %p201, %p202
      %s205 = sadd.s32 %s204, 1
      %p208 = scmp.eq.s32.totalorder %s23, 1
      %p209 = scmp.ne.s32.totalorder %s204, %s206
      %p210 = scmp.eq.s32.totalorder %s23, 0
      %p211 = por %p209, %p210
      %p212 = scmp.ne.s32.totalorder %s204, %s206
      %p213 = scmp.eq.s32.totalorder %s28, 1
      %p214 = por %p212, %p213
      %p215 = scmp.ne.s32.totalorder %s206, %s207
      %p216 = scmp.eq.s32.totalorder %s28, 0
      %p217 = por %p215, %p216
      %p218 = scmp.ne.s32.totalorder %s206, %s207
      %p219 = scmp.eq.s32.totalorder %s29, 1
      %p220 = por %p218, %p219
      %p222 = scmp.ne.s32.totalorder %s207, %s221
      %p223 = scmp.eq.s32.totalorder %s29, 0
      %p224 = por %p222, %p223
      %s225 = ssub.s32 %s23, %s30
      %p226 = scmp.eq.s32.totalorder %s225, 0
      %s228 = sadd.s32 %s227, 1
      %s229 = scalar_select %p226, %s227, %s228
      %p232 = pneg %p226
      %p233 = scmp.eq.s32.totalorder %s23, 1
      %p234 = por %p232, %p233
      %p235 = scmp.ne.s32.totalorder %s227, %s230
      %p236 = scmp.eq.s32.totalorder %s23, 0
      %p237 = por %p235, %p236
      %p238 = scmp.ne.s32.totalorder %s227, %s230
      %p239 = scmp.eq.s32.totalorder %s28, 1
      %p240 = por %p238, %p239
      %p241 = scmp.ne.s32.totalorder %s230, %s231
      %p242 = scmp.eq.s32.totalorder %s28, 0
      %p243 = por %p241, %p242
      %p244 = scmp.ne.s32.totalorder %s230, %s231
      %p245 = scmp.eq.s32.totalorder %s29, 1
      %p246 = por %p244, %p245
      %p248 = scmp.ne.s32.totalorder %s231, %s247
      %p249 = scmp.eq.s32.totalorder %s29, 0
      %p250 = por %p248, %p249
      %p251 = scmp.le.s32.totalorder 1, %s23
      %p252 = scmp.lt.s32.totalorder %s23, 3
      %p253 = pnand %p251, %p252
      %p254 = pneg %p253
      // Predicated region
      $region9: #{tpu_custom_call.1} parent=5 // pred_check
        _
      $region10: #{tpu_custom_call.1} parent=5 // pred_check_branch
        %256 = sbr.rel (%p253) target = $region12
      $region11: #{tpu_custom_call.1} parent=5 // pred_region
        %s257 = ssub.s32 %s23, 1
        // Predicated region
        $region13: #{tpu_custom_call.1} parent=11 // pred_check
          %p258 = pneg %p70
        $region14: #{tpu_custom_call.1} parent=11 // pred_check_branch
          %260 = sbr.rel (%p258) target = $region16
        $region15: #{tpu_custom_call.1} parent=11 // pred_region
          %s262 = ssub.s32 3072, 3072
          %263 = vsyncadd [#allocation6], %s262
          %s264 = sshll.u32 [#allocation5], 4
          %s265 = int_to_ptr.vmem [resolvable:$true] %s264
          %270 = dma.hbm_to_vmem [thread:$0]  %s1, 3072, %s265, [#allocation6], 192, 192, 12
        $region16: #{tpu_custom_call.1} parent=11 // pred_fallthru
          _
        // Predicated region
        $region17: #{tpu_custom_call.1} parent=11 // pred_check
          %p271 = pneg %p91
        $region18: #{tpu_custom_call.1} parent=11 // pred_check_branch
          %273 = sbr.rel (%p271) target = $region20
        $region19: #{tpu_custom_call.1} parent=11 // pred_region
          _
        $region20: #{tpu_custom_call.1} parent=11 // pred_fallthru
          _
        // Predicated region
        $region21: #{tpu_custom_call.1} parent=11 // pred_check
          %p274 = pneg %p112
        $region22: #{tpu_custom_call.1} parent=11 // pred_check_branch
          %276 = sbr.rel (%p274) target = $region24
        $region23: #{tpu_custom_call.1} parent=11 // pred_region
          %s278 = ssub.s32 1024, 1024
          %279 = vsyncadd [#allocation6], %s278
          %s280 = sshll.u32 [#allocation7], 4
          %s281 = int_to_ptr.vmem [resolvable:$true] %s280
          %286 = dma.hbm_to_vmem [thread:$0]  %s3, 1024, %s281, [#allocation6], 64, 64, 4
        $region24: #{tpu_custom_call.1} parent=11 // pred_fallthru
          _
        // Predicated region
        $region25: #{tpu_custom_call.1} parent=11 // pred_check
          %p287 = pneg %p133
        $region26: #{tpu_custom_call.1} parent=11 // pred_check_branch
          %289 = sbr.rel (%p287) target = $region28
        $region27: #{tpu_custom_call.1} parent=11 // pred_region
          _
        $region28: #{tpu_custom_call.1} parent=11 // pred_fallthru
          _
        // Predicated region
        $region29: #{tpu_custom_call.1} parent=11 // pred_check
          %p290 = pneg %p154
        $region30: #{tpu_custom_call.1} parent=11 // pred_check_branch
          %292 = sbr.rel (%p290) target = $region32
        $region31: #{tpu_custom_call.1} parent=11 // pred_region
          %s294 = ssub.s32 4096, 4096
          %295 = vsyncadd [#allocation9], %s294
          %s296 = sshll.u32 [#allocation8], 4
          %s297 = int_to_ptr.vmem [resolvable:$true] %s296
          %302 = dma.hbm_to_vmem [thread:$0]  %s5, 4096, %s297, [#allocation9], 256, 256, 16
        $region32: #{tpu_custom_call.1} parent=11 // pred_fallthru
          _
        // Predicated region
        $region33: #{tpu_custom_call.1} parent=11 // pred_check
          %p303 = pneg %p175
        $region34: #{tpu_custom_call.1} parent=11 // pred_check_branch
          %305 = sbr.rel (%p303) target = $region36
        $region35: #{tpu_custom_call.1} parent=11 // pred_region
          _
        $region36: #{tpu_custom_call.1} parent=11 // pred_fallthru
          _
        // Predicated region
        $region37: #{tpu_custom_call.1} parent=11 // pred_check
          %p306 = pneg %p196
        $region38: #{tpu_custom_call.1} parent=11 // pred_check_branch
          %308 = sbr.rel (%p306) target = $region40
        $region39: #{tpu_custom_call.1} parent=11 // pred_region
          %s310 = ssub.s32 4096, 4096
          %311 = vsyncadd [#allocation9], %s310
          %s312 = sshll.u32 [#allocation10], 4
          %s313 = int_to_ptr.vmem [resolvable:$true] %s312
          %318 = dma.hbm_to_vmem [thread:$0]  %s7, 4096, %s313, [#allocation9], 64, 64, 4
        $region40: #{tpu_custom_call.1} parent=11 // pred_fallthru
          _
        // Predicated region
        $region41: #{tpu_custom_call.1} parent=11 // pred_check
          %p319 = pneg %p217
        $region42: #{tpu_custom_call.1} parent=11 // pred_check_branch
          %321 = sbr.rel (%p319) target = $region44
        $region43: #{tpu_custom_call.1} parent=11 // pred_region
          _
        $region44: #{tpu_custom_call.1} parent=11 // pred_fallthru
          _
      $region12: #{tpu_custom_call.1} parent=5 // pred_fallthru
        _
      %p322 = scmp.lt.s32.totalorder %s23, 2
      // Predicated region
      $region45: #{tpu_custom_call.1} parent=5 // pred_check
        %p323 = pneg %p322
      $region46: #{tpu_custom_call.1} parent=5 // pred_check_branch
        %325 = sbr.rel (%p323) target = $region48
      $region47: #{tpu_custom_call.1} parent=5 // pred_region
        // Predicated region
        $region49: #{tpu_custom_call.1} parent=47 // pred_check
          %p326 = pneg %p43
        $region50: #{tpu_custom_call.1} parent=47 // pred_check_branch
          %328 = sbr.rel (%p326) target = $region52
        $region51: #{tpu_custom_call.1} parent=47 // pred_region
          %s329 = sand.u32 %s33, 1
          %s330 = scalar_lea.sflag [#allocation3], %s329
          %s331 = sand.u32 %s33, 1
          %s332 = smul.addr %s331, 128
          %s333 = scalar_lea.vmem [#allocation2], %s332
          %s335 = ssub.s32 2048, 2048
          %336 = vsyncadd %s330, %s335
          %s337 = smul.addr %s23, 16
          %s338 = smul.addr %s337, 128
          %s339 = scalar_lea.hbm %s0, %s338
          %s340 = sshll.u32 %s333, 4
          %s341 = int_to_ptr.vmem [resolvable:$true] %s340
          %346 = dma.hbm_to_vmem [thread:$0]  %s339, 2048, %s341, %s330, 128, 128, 8
        $region52: #{tpu_custom_call.1} parent=47 // pred_fallthru
          _
      $region48: #{tpu_custom_call.1} parent=5 // pred_fallthru
        _
      %p347 = scmp.le.s32.totalorder 1, %s23
      %p348 = scmp.lt.s32.totalorder %s23, 3
      %p349 = pnand %p347, %p348
      %p350 = pneg %p349
      // Predicated region
      $region53: #{tpu_custom_call.1} parent=5 // pred_check
        _
      $region54: #{tpu_custom_call.1} parent=5 // pred_check_branch
        %352 = sbr.rel (%p349) target = $region56
      $region55: #{tpu_custom_call.1} parent=5 // pred_region
        %s353 = ssub.s32 %s23, 1
        %s354 = sand.u32 %s36, 1
        %s355 = scalar_lea.sflag [#allocation3], %s354
        %s356 = sand.u32 %s36, 1
        %s357 = smul.addr %s356, 128
        %s358 = scalar_lea.vmem [#allocation2], %s357
        // Predicated region
        $region57: #{tpu_custom_call.1} parent=55 // pred_check
          %p359 = pneg %p49
        $region58: #{tpu_custom_call.1} parent=55 // pred_check_branch
          %361 = sbr.rel (%p359) target = $region60
        $region59: #{tpu_custom_call.1} parent=55 // pred_region
          %362 = dma.done %s355, 2048
        $region60: #{tpu_custom_call.1} parent=55 // pred_fallthru
          _
        // Predicated region
        $region61: #{tpu_custom_call.1} parent=55 // pred_check
          %p363 = pneg %p70
        $region62: #{tpu_custom_call.1} parent=55 // pred_check_branch
          %365 = sbr.rel (%p363) target = $region64
        $region63: #{tpu_custom_call.1} parent=55 // pred_region
          %366 = dma.done [#allocation6], 3072
        $region64: #{tpu_custom_call.1} parent=55 // pred_fallthru
          _
        // Predicated region
        $region65: #{tpu_custom_call.1} parent=55 // pred_check
          %p367 = pneg %p112
        $region66: #{tpu_custom_call.1} parent=55 // pred_check_branch
          %369 = sbr.rel (%p367) target = $region68
        $region67: #{tpu_custom_call.1} parent=55 // pred_region
          %370 = dma.done [#allocation6], 1024
        $region68: #{tpu_custom_call.1} parent=55 // pred_fallthru
          _
        // Predicated region
        $region69: #{tpu_custom_call.1} parent=55 // pred_check
          %p371 = pneg %p154
        $region70: #{tpu_custom_call.1} parent=55 // pred_check_branch
          %373 = sbr.rel (%p371) target = $region72
        $region71: #{tpu_custom_call.1} parent=55 // pred_region
          %374 = dma.done [#allocation9], 4096
        $region72: #{tpu_custom_call.1} parent=55 // pred_fallthru
          _
        // Predicated region
        $region73: #{tpu_custom_call.1} parent=55 // pred_check
          %p375 = pneg %p196
        $region74: #{tpu_custom_call.1} parent=55 // pred_check_branch
          %377 = sbr.rel (%p375) target = $region76
        $region75: #{tpu_custom_call.1} parent=55 // pred_region
          %378 = dma.done [#allocation9], 4096
        $region76: #{tpu_custom_call.1} parent=55 // pred_fallthru
          _
        %s379 = sand.u32 %s36, 1
        %s380 = scalar_lea.sflag [#allocation3], %s379
        %s381 = sand.u32 %s36, 1
        %s382 = smul.addr %s381, 128
        %s383 = scalar_lea.vmem [#allocation2], %s382
        %p384 = pneg %p49
        %p385 = pneg %p46
        %p386 = pneg %p70
        %p387 = pneg %p67
        %p388 = pneg %p91
        %p389 = pneg %p88
        %p390 = pneg %p112
        %p391 = pneg %p109
        %p392 = pneg %p133
        %p393 = pneg %p130
        %p394 = pneg %p154
        %p395 = pneg %p151
        %p396 = pneg %p175
        %p397 = pneg %p172
        %p398 = pneg %p196
        %p399 = pneg %p193
        %p400 = pneg %p217
        %p401 = pneg %p214
        %p402 = pneg %p243
        %p403 = pneg %p240
        %s404 = sand.u32 %s230, 1
        %s405 = scalar_lea.sflag [#allocation4], %s404
        %s406 = sand.u32 %s230, 1
        %s407 = smul.addr %s406, 128
        %s408 = scalar_lea.vmem [#allocation11], %s407
        %v410 = vld [vmem:[#allocation5] sm:$0xff]
        %v411 = vld [vmem:[#allocation5 + $0x8] sm:$0xf]
        %v412 = vld [vmem:[#allocation5 + $0xc] sm:$0xff]
        %v413 = vld [vmem:[#allocation5 + $0x14] sm:$0xf]
        %v414 = vld [vmem:[#allocation5 + $0x18] sm:$0xff]
        %v415 = vld [vmem:[#allocation5 + $0x20] sm:$0xf]
        %v416 = vld [vmem:[#allocation5 + $0x24] sm:$0xff]
        %v417 = vld [vmem:[#allocation5 + $0x2c] sm:$0xf]
        %v418 = vld [vmem:[#allocation5 + $0x30] sm:$0xff]
        %v419 = vld [vmem:[#allocation5 + $0x38] sm:$0xf]
        %v420 = vld [vmem:[#allocation5 + $0x3c] sm:$0xff]
        %v421 = vld [vmem:[#allocation5 + $0x44] sm:$0xf]
        %v422 = vld [vmem:[#allocation5 + $0x48] sm:$0xff]
        %v423 = vld [vmem:[#allocation5 + $0x50] sm:$0xf]
        %v424 = vld [vmem:[#allocation5 + $0x54] sm:$0xff]
        %v425 = vld [vmem:[#allocation5 + $0x5c] sm:$0xf]
        %v426 = vld [vmem:[#allocation5 + $0x60] sm:$0xff]
        %v427 = vld [vmem:[#allocation5 + $0x68] sm:$0xf]
        %v428 = vld [vmem:[#allocation5 + $0x6c] sm:$0xff]
        %v429 = vld [vmem:[#allocation5 + $0x74] sm:$0xf]
        %v430 = vld [vmem:[#allocation5 + $0x78] sm:$0xff]
        %v431 = vld [vmem:[#allocation5 + $0x80] sm:$0xf]
        %v432 = vld [vmem:[#allocation5 + $0x84] sm:$0xff]
        %v433 = vld [vmem:[#allocation5 + $0x8c] sm:$0xf]
        %v434 = vld [vmem:[#allocation5 + $0x90] sm:$0xff]
        %v435 = vld [vmem:[#allocation5 + $0x98] sm:$0xf]
        %v436 = vld [vmem:[#allocation5 + $0x9c] sm:$0xff]
        %v437 = vld [vmem:[#allocation5 + $0xa4] sm:$0xf]
        %v438 = vld [vmem:[#allocation5 + $0xa8] sm:$0xff]
        %v439 = vld [vmem:[#allocation5 + $0xb0] sm:$0xf]
        %v440 = vld [vmem:[#allocation5 + $0xb4] sm:$0xff]
        %v441 = vld [vmem:[#allocation5 + $0xbc] sm:$0xf]
        %v442 = vld [vmem:[%s358] sm:$0xff]
        %v443 = vld [vmem:[%s358 + $0x8] sm:$0xff]
        %v444 = vld [vmem:[%s358 + $0x10] sm:$0xff]
        %v445 = vld [vmem:[%s358 + $0x18] sm:$0xff]
        %v446 = vld [vmem:[%s358 + $0x20] sm:$0xff]
        %v447 = vld [vmem:[%s358 + $0x28] sm:$0xff]
        %v448 = vld [vmem:[%s358 + $0x30] sm:$0xff]
        %v449 = vld [vmem:[%s358 + $0x38] sm:$0xff]
        %v450 = vld [vmem:[%s358 + $0x40] sm:$0xff]
        %v451 = vld [vmem:[%s358 + $0x48] sm:$0xff]
        %v452 = vld [vmem:[%s358 + $0x50] sm:$0xff]
        %v453 = vld [vmem:[%s358 + $0x58] sm:$0xff]
        %v454 = vld [vmem:[%s358 + $0x60] sm:$0xff]
        %v455 = vld [vmem:[%s358 + $0x68] sm:$0xff]
        %v456 = vld [vmem:[%s358 + $0x70] sm:$0xff]
        %v457 = vld [vmem:[%s358 + $0x78] sm:$0xff]
        %v458 = vpack.c.bf16 %v443, %v442
        %v459 = vpack.c.bf16 %v445, %v444
        %v460 = vpack.c.bf16 %v447, %v446
        %v461 = vpack.c.bf16 %v449, %v448
        %v462 = vpack.c.bf16 %v451, %v450
        %v463 = vpack.c.bf16 %v453, %v452
        %v464 = vpack.c.bf16 %v455, %v454
        %v465 = vpack.c.bf16 %v457, %v456
        %v466 = vld [vmem:[%s2] sm:$0x7]
        %v468 = vlaneseq
        %v469 = vshrl.u32 %v468, 7
        %v470 = vsub.s32 0, %v469
        %v471 = vrot.slane %v466, %v470
        %v472 = vlaneseq
        %v473 = vshrl.u32 %v472, 7
        %v474 = vsub.s32 1, %v473
        %v475 = vrot.slane %v466, %v474
        %v476 = vlaneseq
        %v477 = vshrl.u32 %v476, 7
        %v478 = vsub.s32 2, %v477
        %v479 = vrot.slane %v466, %v478
        %v515 = vunpack.c.l.b16 %v410
        %v516 = vunpack.c.h.b16 %v410
        %v517 = vunpack.c.l.b16 %v411
        %v518 = vunpack.c.l.b16 %v412
        %v519 = vunpack.c.h.b16 %v412
        %v520 = vunpack.c.l.b16 %v413
        %v521 = vunpack.c.l.b16 %v414
        %v522 = vunpack.c.h.b16 %v414
        %v523 = vunpack.c.l.b16 %v415
        %v524 = vunpack.c.l.b16 %v416
        %v525 = vunpack.c.h.b16 %v416
        %v526 = vunpack.c.l.b16 %v417
        %v527 = vunpack.c.l.b16 %v418
        %v528 = vunpack.c.h.b16 %v418
        %v529 = vunpack.c.l.b16 %v419
        %v530 = vunpack.c.l.b16 %v420
        %v531 = vunpack.c.h.b16 %v420
        %v532 = vunpack.c.l.b16 %v421
        %v533 = vunpack.c.l.b16 %v422
        %v534 = vunpack.c.h.b16 %v422
        %v535 = vunpack.c.l.b16 %v423
        %v536 = vunpack.c.l.b16 %v424
        %v537 = vunpack.c.h.b16 %v424
        %v538 = vunpack.c.l.b16 %v425
        %v539 = vunpack.c.l.b16 %v426
        %v540 = vunpack.c.h.b16 %v426
        %v541 = vunpack.c.l.b16 %v427
        %v542 = vunpack.c.l.b16 %v428
        %v543 = vunpack.c.h.b16 %v428
        %v544 = vunpack.c.l.b16 %v429
        %v545 = vunpack.c.l.b16 %v430
        %v546 = vunpack.c.h.b16 %v430
        %v547 = vunpack.c.l.b16 %v431
        %v548 = vunpack.c.l.b16 %v432
        %v549 = vunpack.c.h.b16 %v432
        %v550 = vunpack.c.l.b16 %v433
        %v551 = vunpack.c.l.b16 %v434
        %v552 = vunpack.c.h.b16 %v434
        %v553 = vunpack.c.l.b16 %v435
        %v554 = vunpack.c.l.b16 %v436
        %v555 = vunpack.c.h.b16 %v436
        %v556 = vunpack.c.l.b16 %v437
        %v557 = vunpack.c.l.b16 %v438
        %v558 = vunpack.c.h.b16 %v438
        %v559 = vunpack.c.l.b16 %v439
        %v560 = vunpack.c.l.b16 %v440
        %v561 = vunpack.c.h.b16 %v440
        %v562 = vunpack.c.l.b16 %v441
        %v563 = vpack.c.b16 %v518, %v515
        %v564 = vpack.c.b16 %v519, %v516
        %v565 = vpack.c.b16 %v520, %v517
        %v566 = vpack.c.b16 %v524, %v521
        %v567 = vpack.c.b16 %v525, %v522
        %v568 = vpack.c.b16 %v526, %v523
        %v569 = vpack.c.b16 %v530, %v527
        %v570 = vpack.c.b16 %v531, %v528
        %v571 = vpack.c.b16 %v532, %v529
        %v572 = vpack.c.b16 %v536, %v533
        %v573 = vpack.c.b16 %v537, %v534
        %v574 = vpack.c.b16 %v538, %v535
        %v575 = vpack.c.b16 %v542, %v539
        %v576 = vpack.c.b16 %v543, %v540
        %v577 = vpack.c.b16 %v544, %v541
        %v578 = vpack.c.b16 %v548, %v545
        %v579 = vpack.c.b16 %v549, %v546
        %v580 = vpack.c.b16 %v550, %v547
        %v581 = vpack.c.b16 %v554, %v551
        %v582 = vpack.c.b16 %v555, %v552
        %v583 = vpack.c.b16 %v556, %v553
        %v584 = vpack.c.b16 %v560, %v557
        %v585 = vpack.c.b16 %v561, %v558
        %v586 = vpack.c.b16 %v562, %v559
        %611 = vmatprep.subr.bf16.mxu0 %v564
        %612 = vmatpush1.bf16.msra.mxu0 %v563
        %613 = vmatprep.subr.bf16.mxu0 %v567
        %614 = vmatpush1.bf16.msra.mxu0 %v566
        %615 = vmatprep.subr.bf16.mxu0 %v570
        %616 = vmatpush1.bf16.msra.mxu0 %v569
        %617 = vmatprep.subr.bf16.mxu0 %v573
        %618 = vmatpush1.bf16.msra.mxu0 %v572
        %619 = vmatprep.subr.bf16.mxu0 %v576
        %620 = vmatpush1.bf16.msra.mxu0 %v575
        %621 = vmatprep.subr.bf16.mxu0 %v579
        %622 = vmatpush1.bf16.msra.mxu0 %v578
        %623 = vmatprep.subr.bf16.mxu0 %v582
        %624 = vmatpush1.bf16.msra.mxu0 %v581
        %625 = vmatprep.subr.bf16.mxu0 %v585
        %626 = vmatpush1.bf16.msra.mxu0 %v584
        %627 = vmatprep.subr.bf16.mxu0 0
        %628 = vmatpush1.bf16.msra.mxu0 0
        %629 = vmatprep.subr.bf16.mxu0 0
        %630 = vmatpush1.bf16.msra.mxu0 0
        %631 = vmatprep.subr.bf16.mxu0 0
        %632 = vmatpush1.bf16.msra.mxu0 0
        %633 = vmatprep.subr.bf16.mxu0 0
        %634 = vmatpush1.bf16.msra.mxu0 0
        %635 = vmatprep.subr.bf16.mxu0 0
        %636 = vmatpush1.bf16.msra.mxu0 0
        %637 = vmatprep.subr.bf16.mxu0 0
        %638 = vmatpush1.bf16.msra.mxu0 0
        %639 = vmatprep.subr.bf16.mxu0 0
        %640 = vmatpush1.bf16.msra.mxu0 0
        %641 = vmatprep.subr.bf16.mxu0 0
        %642 = vmatpush1.bf16.msra.mxu0 0
        %643 = vmatprep.mubr.bf16.mxu0 0
        %644 = vmatmul.mubr.bf16.gmra.mrb[0].mxu0 %v458
        %v645 = vpop.f32.mrb[0].mxu0
        %v646 = vadd.f32 %v471, %v645
        %v647 = vpop.f32.mrb[0].mxu0
        %v648 = vadd.f32 %v475, %v647
        %v649 = vpop.f32.mrb[0].mxu0
        %v650 = vadd.f32 %v471, %v649
        %v651 = vpop.f32.mrb[0].mxu0
        %v652 = vadd.f32 %v475, %v651
        %653 = vmatprep.mubr.bf16.mxu0 0
        %654 = vmatmul.mubr.bf16.gmra.mrb[0].mxu0 %v459
        %v655 = vpop.f32.mrb[0].mxu0
        %v656 = vadd.f32 %v471, %v655
        %v657 = vpop.f32.mrb[0].mxu0
        %v658 = vadd.f32 %v475, %v657
        %v659 = vpop.f32.mrb[0].mxu0
        %v660 = vadd.f32 %v471, %v659
        %v661 = vpop.f32.mrb[0].mxu0
        %v662 = vadd.f32 %v475, %v661
        %663 = vmatprep.mubr.bf16.mxu0 0
        %664 = vmatmul.mubr.bf16.gmra.mrb[0].mxu0 %v460
        %v665 = vpop.f32.mrb[0].mxu0
        %v666 = vadd.f32 %v471, %v665
        %v667 = vpop.f32.mrb[0].mxu0
        %v668 = vadd.f32 %v475, %v667
        %v669 = vpop.f32.mrb[0].mxu0
        %v670 = vadd.f32 %v471, %v669
        %v671 = vpop.f32.mrb[0].mxu0
        %v672 = vadd.f32 %v475, %v671
        %673 = vmatprep.mubr.bf16.mxu0 0
        %674 = vmatmul.mubr.bf16.gmra.mrb[0].mxu0 %v461
        %v675 = vpop.f32.mrb[0].mxu0
        %v676 = vadd.f32 %v471, %v675
        %v677 = vpop.f32.mrb[0].mxu0
        %v678 = vadd.f32 %v475, %v677
        %v679 = vpop.f32.mrb[0].mxu0
        %v680 = vadd.f32 %v471, %v679
        %v681 = vpop.f32.mrb[0].mxu0
        %v682 = vadd.f32 %v475, %v681
        %683 = vmatprep.mubr.bf16.mxu0 0
        %684 = vmatmul.mubr.bf16.gmra.mrb[0].mxu0 %v462
        %v685 = vpop.f32.mrb[0].mxu0
        %v686 = vadd.f32 %v471, %v685
        %v687 = vpop.f32.mrb[0].mxu0
        %v688 = vadd.f32 %v475, %v687
        %v689 = vpop.f32.mrb[0].mxu0
        %v690 = vadd.f32 %v471, %v689
        %v691 = vpop.f32.mrb[0].mxu0
        %v692 = vadd.f32 %v475, %v691
        %693 = vmatprep.mubr.bf16.mxu0 0
        %694 = vmatmul.mubr.bf16.gmra.mrb[0].mxu0 %v463
        %v695 = vpop.f32.mrb[0].mxu0
        %v696 = vadd.f32 %v471, %v695
        %v697 = vpop.f32.mrb[0].mxu0
        %v698 = vadd.f32 %v475, %v697
        %v699 = vpop.f32.mrb[0].mxu0
        %v700 = vadd.f32 %v471, %v699
        %v701 = vpop.f32.mrb[0].mxu0
        %v702 = vadd.f32 %v475, %v701
        %703 = vmatprep.mubr.bf16.mxu0 0
        %704 = vmatmul.mubr.bf16.gmra.mrb[0].mxu0 %v464
        %v705 = vpop.f32.mrb[0].mxu0
        %v706 = vadd.f32 %v471, %v705
        %v707 = vpop.f32.mrb[0].mxu0
        %v708 = vadd.f32 %v475, %v707
        %v709 = vpop.f32.mrb[0].mxu0
        %v710 = vadd.f32 %v471, %v709
        %v711 = vpop.f32.mrb[0].mxu0
        %v712 = vadd.f32 %v475, %v711
        %713 = vmatprep.mubr.bf16.mxu0 0
        %714 = vmatmul.mubr.bf16.gmra.mrb[0].mxu0 %v465
        %v715 = vpop.f32.mrb[0].mxu0
        %v716 = vadd.f32 %v471, %v715
        %v717 = vpop.f32.mrb[0].mxu0
        %v718 = vadd.f32 %v475, %v717
        %v719 = vpop.f32.mrb[0].mxu0
        %v720 = vadd.f32 %v471, %v719
        %v721 = vpop.f32.mrb[0].mxu0
        %v722 = vadd.f32 %v475, %v721
        %723 = vdwg.mxu0
        %724 = vmatprep.subr.bf16.mxu0 0
        %725 = vmatpush1.bf16.msra.mxu0 %v565
        %726 = vmatprep.subr.bf16.mxu0 0
        %727 = vmatpush1.bf16.msra.mxu0 %v568
        %728 = vmatprep.subr.bf16.mxu0 0
        %729 = vmatpush1.bf16.msra.mxu0 %v571
        %730 = vmatprep.subr.bf16.mxu0 0
        %731 = vmatpush1.bf16.msra.mxu0 %v574
        %732 = vmatprep.subr.bf16.mxu0 0
        %733 = vmatpush1.bf16.msra.mxu0 %v577
        %734 = vmatprep.subr.bf16.mxu0 0
        %735 = vmatpush1.bf16.msra.mxu0 %v580
        %736 = vmatprep.subr.bf16.mxu0 0
        %737 = vmatpush1.bf16.msra.mxu0 %v583
        %738 = vmatprep.subr.bf16.mxu0 0
        %739 = vmatpush1.bf16.msra.mxu0 %v586
        %740 = vmatprep.subr.bf16.mxu0 0
        %741 = vmatpush1.bf16.msra.mxu0 0
        %742 = vmatprep.subr.bf16.mxu0 0
        %743 = vmatpush1.bf16.msra.mxu0 0
        %744 = vmatprep.subr.bf16.mxu0 0
        %745 = vmatpush1.bf16.msra.mxu0 0
        %746 = vmatprep.subr.bf16.mxu0 0
        %747 = vmatpush1.bf16.msra.mxu0 0
        %748 = vmatprep.subr.bf16.mxu0 0
        %749 = vmatpush1.bf16.msra.mxu0 0
        %750 = vmatprep.subr.bf16.mxu0 0
        %751 = vmatpush1.bf16.msra.mxu0 0
        %752 = vmatprep.subr.bf16.mxu0 0
        %753 = vmatpush1.bf16.msra.mxu0 0
        %754 = vmatprep.subr.bf16.mxu0 0
        %755 = vmatpush1.bf16.msra.mxu0 0
        %756 = vmatprep.mubr.bf16.mxu0 0
        %757 = vmatmul.mubr.bf16.gmra.mrb[0].mxu0 %v458
        %v758 = vpop.f32.mrb[0].mxu0
        %v759 = vadd.f32 %v479, %v758
        %v760 = vpop.f32.mrb[0].mxu0
        %v761 = vpop.f32.mrb[0].mxu0
        %v762 = vadd.f32 %v479, %v761
        %v763 = vpop.f32.mrb[0].mxu0
        %764 = vmatprep.mubr.bf16.mxu0 0
        %765 = vmatmul.mubr.bf16.gmra.mrb[0].mxu0 %v459
        %v766 = vpop.f32.mrb[0].mxu0
        %v767 = vadd.f32 %v479, %v766
        %v768 = vpop.f32.mrb[0].mxu0
        %v769 = vpop.f32.mrb[0].mxu0
        %v770 = vadd.f32 %v479, %v769
        %v771 = vpop.f32.mrb[0].mxu0
        %772 = vmatprep.mubr.bf16.mxu0 0
        %773 = vmatmul.mubr.bf16.gmra.mrb[0].mxu0 %v460
        %v774 = vpop.f32.mrb[0].mxu0
        %v775 = vadd.f32 %v479, %v774
        %v776 = vpop.f32.mrb[0].mxu0
        %v777 = vpop.f32.mrb[0].mxu0
        %v778 = vadd.f32 %v479, %v777
        %v779 = vpop.f32.mrb[0].mxu0
        %780 = vmatprep.mubr.bf16.mxu0 0
        %781 = vmatmul.mubr.bf16.gmra.mrb[0].mxu0 %v461
        %v782 = vpop.f32.mrb[0].mxu0
        %v783 = vadd.f32 %v479, %v782
        %v784 = vpop.f32.mrb[0].mxu0
        %v785 = vpop.f32.mrb[0].mxu0
        %v786 = vadd.f32 %v479, %v785
        %v787 = vpop.f32.mrb[0].mxu0
        %788 = vmatprep.mubr.bf16.mxu0 0
        %789 = vmatmul.mubr.bf16.gmra.mrb[0].mxu0 %v462
        %v790 = vpop.f32.mrb[0].mxu0
        %v791 = vadd.f32 %v479, %v790
        %v792 = vpop.f32.mrb[0].mxu0
        %v793 = vpop.f32.mrb[0].mxu0
        %v794 = vadd.f32 %v479, %v793
        %v795 = vpop.f32.mrb[0].mxu0
        %796 = vmatprep.mubr.bf16.mxu0 0
        %797 = vmatmul.mubr.bf16.gmra.mrb[0].mxu0 %v463
        %v798 = vpop.f32.mrb[0].mxu0
        %v799 = vadd.f32 %v479, %v798
        %v800 = vpop.f32.mrb[0].mxu0
        %v801 = vpop.f32.mrb[0].mxu0
        %v802 = vadd.f32 %v479, %v801
        %v803 = vpop.f32.mrb[0].mxu0
        %804 = vmatprep.mubr.bf16.mxu0 0
        %805 = vmatmul.mubr.bf16.gmra.mrb[0].mxu0 %v464
        %v806 = vpop.f32.mrb[0].mxu0
        %v807 = vadd.f32 %v479, %v806
        %v808 = vpop.f32.mrb[0].mxu0
        %v809 = vpop.f32.mrb[0].mxu0
        %v810 = vadd.f32 %v479, %v809
        %v811 = vpop.f32.mrb[0].mxu0
        %812 = vmatprep.mubr.bf16.mxu0 0
        %813 = vmatmul.mubr.bf16.gmra.mrb[0].mxu0 %v465
        %v814 = vpop.f32.mrb[0].mxu0
        %v815 = vadd.f32 %v479, %v814
        %v816 = vpop.f32.mrb[0].mxu0
        %v817 = vpop.f32.mrb[0].mxu0
        %v818 = vadd.f32 %v479, %v817
        %v819 = vpop.f32.mrb[0].mxu0
        %820 = vdwg.mxu0
        %v821 = vld [vmem:[#allocation7] sm:$0xf]
        %v822 = vld [vmem:[#allocation7 + $0x4] sm:$0xf]
        %v823 = vld [vmem:[#allocation7 + $0x8] sm:$0xf]
        %v824 = vld [vmem:[#allocation7 + $0xc] sm:$0xf]
        %v825 = vld [vmem:[#allocation7 + $0x10] sm:$0xf]
        %v826 = vld [vmem:[#allocation7 + $0x14] sm:$0xf]
        %v827 = vld [vmem:[#allocation7 + $0x18] sm:$0xf]
        %v828 = vld [vmem:[#allocation7 + $0x1c] sm:$0xf]
        %v829 = vld [vmem:[#allocation7 + $0x20] sm:$0xf]
        %v830 = vld [vmem:[#allocation7 + $0x24] sm:$0xf]
        %v831 = vld [vmem:[#allocation7 + $0x28] sm:$0xf]
        %v832 = vld [vmem:[#allocation7 + $0x2c] sm:$0xf]
        %v833 = vld [vmem:[#allocation7 + $0x30] sm:$0xf]
        %v834 = vld [vmem:[#allocation7 + $0x34] sm:$0xf]
        %v835 = vld [vmem:[#allocation7 + $0x38] sm:$0xf]
        %v836 = vld [vmem:[#allocation7 + $0x3c] sm:$0xf]
        %v837 = vmul.f32 %v646, 0.17677669
        %v838 = vmul.f32 %v650, 0.17677669
        %v839 = vmul.f32 %v656, 0.17677669
        %v840 = vmul.f32 %v660, 0.17677669
        %v841 = vmul.f32 %v666, 0.17677669
        %v842 = vmul.f32 %v670, 0.17677669
        %v843 = vmul.f32 %v676, 0.17677669
        %v844 = vmul.f32 %v680, 0.17677669
        %v845 = vmul.f32 %v686, 0.17677669
        %v846 = vmul.f32 %v690, 0.17677669
        %v847 = vmul.f32 %v696, 0.17677669
        %v848 = vmul.f32 %v700, 0.17677669
        %v849 = vmul.f32 %v706, 0.17677669
        %v850 = vmul.f32 %v710, 0.17677669
        %v851 = vmul.f32 %v716, 0.17677669
        %v852 = vmul.f32 %v720, 0.17677669
        %v853 = vpack.c.bf16 %v838, %v837
        %v854 = vpack.c.bf16 %v840, %v839
        %v855 = vpack.c.bf16 %v842, %v841
        %v856 = vpack.c.bf16 %v844, %v843
        %v857 = vpack.c.bf16 %v846, %v845
        %v858 = vpack.c.bf16 %v848, %v847
        %v859 = vpack.c.bf16 %v850, %v849
        %v860 = vpack.c.bf16 %v852, %v851
        %v861 = vpack.c.bf16 %v652, %v648
        %v862 = vpack.c.bf16 %v662, %v658
        %v863 = vpack.c.bf16 %v672, %v668
        %v864 = vpack.c.bf16 %v682, %v678
        %v865 = vpack.c.bf16 %v692, %v688
        %v866 = vpack.c.bf16 %v702, %v698
        %v867 = vpack.c.bf16 %v712, %v708
        %v868 = vpack.c.bf16 %v722, %v718
        %v869 = vpack.c.bf16 %v762, %v759
        %v870 = vpack.c.bf16 %v770, %v767
        %v871 = vpack.c.bf16 %v778, %v775
        %v872 = vpack.c.bf16 %v786, %v783
        %v873 = vpack.c.bf16 %v794, %v791
        %v874 = vpack.c.bf16 %v802, %v799
        %v875 = vpack.c.bf16 %v810, %v807
        %v876 = vpack.c.bf16 %v818, %v815
        %vm877 = vcmask 261120
        %v879 = vsel %vm877, %v853, 0
        %v882 = vsel %vm877, %v854, 0
        %v885 = vsel %vm877, %v855, 0
        %v888 = vsel %vm877, %v856, 0
        %v891 = vsel %vm877, %v857, 0
        %v894 = vsel %vm877, %v858, 0
        %v897 = vsel %vm877, %v859, 0
        %v900 = vsel %vm877, %v860, 0
        %v903 = vsel %vm877, %v861, 0
        %v906 = vsel %vm877, %v862, 0
        %v909 = vsel %vm877, %v863, 0
        %v912 = vsel %vm877, %v864, 0
        %v915 = vsel %vm877, %v865, 0
        %v918 = vsel %vm877, %v866, 0
        %v921 = vsel %vm877, %v867, 0
        %v924 = vsel %vm877, %v868, 0
        %926 = vmatprep.subr.bf16.mxu0 0
        %927 = vmatpush1.bf16.xpose.msra.mxu0 %v903
        %928 = vmatprep.subr.bf16.mxu0 0
        %929 = vmatpush1.bf16.xpose.msra.mxu0 %v906
        %930 = vmatprep.subr.bf16.mxu0 0
        %931 = vmatpush1.bf16.xpose.msra.mxu0 %v909
        %932 = vmatprep.subr.bf16.mxu0 0
        %933 = vmatpush1.bf16.xpose.msra.mxu0 %v912
        %934 = vmatprep.subr.bf16.mxu0 0
        %935 = vmatpush1.bf16.xpose.msra.mxu0 %v915
        %936 = vmatprep.subr.bf16.mxu0 0
        %937 = vmatpush1.bf16.xpose.msra.mxu0 %v918
        %938 = vmatprep.subr.bf16.mxu0 0
        %939 = vmatpush1.bf16.xpose.msra.mxu0 %v921
        %940 = vmatprep.subr.bf16.mxu0 0
        %941 = vmatpush1.bf16.xpose.msra.mxu0 %v924
        %942 = vmatprep.subr.bf16.mxu0 0
        %943 = vmatpush1.bf16.xpose.msra.mxu0 0
        %944 = vmatprep.subr.bf16.mxu0 0
        %945 = vmatpush1.bf16.xpose.msra.mxu0 0
        %946 = vmatprep.subr.bf16.mxu0 0
        %947 = vmatpush1.bf16.xpose.msra.mxu0 0
        %948 = vmatprep.subr.bf16.mxu0 0
        %949 = vmatpush1.bf16.xpose.msra.mxu0 0
        %950 = vmatprep.subr.bf16.mxu0 0
        %951 = vmatpush1.bf16.xpose.msra.mxu0 0
        %952 = vmatprep.subr.bf16.mxu0 0
        %953 = vmatpush1.bf16.xpose.msra.mxu0 0
        %954 = vmatprep.subr.bf16.mxu0 0
        %955 = vmatpush1.bf16.xpose.msra.mxu0 0
        %956 = vmatprep.subr.bf16.mxu0 0
        %957 = vmatpush1.bf16.xpose.msra.mxu0 0
        %958 = vmatprep.mubr.bf16.mxu0 0
        %959 = vmatmul.mubr.bf16.gmra.mrb[0].mxu0 %v879
        %v960 = vpop.f32.mrb[0].mxu0
        %v961 = vadd.f32 0.0, %v960
        %v962 = vpop.f32.mrb[0].mxu0
        %v963 = vpop.f32.mrb[0].mxu0
        %v964 = vadd.f32 0.0, %v963
        %v965 = vpop.f32.mrb[0].mxu0
        %966 = vmatprep.mubr.bf16.mxu0 0
        %967 = vmatmul.mubr.bf16.gmra.mrb[0].mxu0 %v882
        %v968 = vpop.f32.mrb[0].mxu0
        %v969 = vadd.f32 0.0, %v968
        %v970 = vpop.f32.mrb[0].mxu0
        %v971 = vpop.f32.mrb[0].mxu0
        %v972 = vadd.f32 0.0, %v971
        %v973 = vpop.f32.mrb[0].mxu0
        %974 = vmatprep.mubr.bf16.mxu0 0
        %975 = vmatmul.mubr.bf16.gmra.mrb[0].mxu0 %v885
        %v976 = vpop.f32.mrb[0].mxu0
        %v977 = vadd.f32 0.0, %v976
        %v978 = vpop.f32.mrb[0].mxu0
        %v979 = vpop.f32.mrb[0].mxu0
        %v980 = vadd.f32 0.0, %v979
        %v981 = vpop.f32.mrb[0].mxu0
        %982 = vmatprep.mubr.bf16.mxu0 0
        %983 = vmatmul.mubr.bf16.gmra.mrb[0].mxu0 %v888
        %v984 = vpop.f32.mrb[0].mxu0
        %v985 = vadd.f32 0.0, %v984
        %v986 = vpop.f32.mrb[0].mxu0
        %v987 = vpop.f32.mrb[0].mxu0
        %v988 = vadd.f32 0.0, %v987
        %v989 = vpop.f32.mrb[0].mxu0
        %990 = vmatprep.mubr.bf16.mxu0 0
        %991 = vmatmul.mubr.bf16.gmra.mrb[0].mxu0 %v891
        %v992 = vpop.f32.mrb[0].mxu0
        %v993 = vadd.f32 0.0, %v992
        %v994 = vpop.f32.mrb[0].mxu0
        %v995 = vpop.f32.mrb[0].mxu0
        %v996 = vadd.f32 0.0, %v995
        %v997 = vpop.f32.mrb[0].mxu0
        %998 = vmatprep.mubr.bf16.mxu0 0
        %999 = vmatmul.mubr.bf16.gmra.mrb[0].mxu0 %v894
        %v1000 = vpop.f32.mrb[0].mxu0
        %v1001 = vadd.f32 0.0, %v1000
        %v1002 = vpop.f32.mrb[0].mxu0
        %v1003 = vpop.f32.mrb[0].mxu0
        %v1004 = vadd.f32 0.0, %v1003
        %v1005 = vpop.f32.mrb[0].mxu0
        %1006 = vmatprep.mubr.bf16.mxu0 0
        %1007 = vmatmul.mubr.bf16.gmra.mrb[0].mxu0 %v897
        %v1008 = vpop.f32.mrb[0].mxu0
        %v1009 = vadd.f32 0.0, %v1008
        %v1010 = vpop.f32.mrb[0].mxu0
        %v1011 = vpop.f32.mrb[0].mxu0
        %v1012 = vadd.f32 0.0, %v1011
        %v1013 = vpop.f32.mrb[0].mxu0
        %1014 = vmatprep.mubr.bf16.mxu0 0
        %1015 = vmatmul.mubr.bf16.gmra.mrb[0].mxu0 %v900
        %v1016 = vpop.f32.mrb[0].mxu0
        %v1017 = vadd.f32 0.0, %v1016
        %v1018 = vpop.f32.mrb[0].mxu0
        %v1019 = vpop.f32.mrb[0].mxu0
        %v1020 = vadd.f32 0.0, %v1019
        %v1021 = vpop.f32.mrb[0].mxu0
        %1022 = vdwg.mxu0
        %1023 = vmax.xlane.f32.xlu0 %v961
        %v1024 = vpop.xlane.xlu0 %1023
        %1025 = vmax.xlane.f32.xlu0 %v964
        %v1026 = vpop.xlane.xlu0 %1025
        %1027 = vmax.xlane.f32.xlu0 %v969
        %v1028 = vpop.xlane.xlu0 %1027
        %1029 = vmax.xlane.f32.xlu0 %v972
        %v1030 = vpop.xlane.xlu0 %1029
        %1031 = vmax.xlane.f32.xlu0 %v977
        %v1032 = vpop.xlane.xlu0 %1031
        %1033 = vmax.xlane.f32.xlu0 %v980
        %v1034 = vpop.xlane.xlu0 %1033
        %1035 = vmax.xlane.f32.xlu0 %v985
        %v1036 = vpop.xlane.xlu0 %1035
        %1037 = vmax.xlane.f32.xlu0 %v988
        %v1038 = vpop.xlane.xlu0 %1037
        %1039 = vmax.xlane.f32.xlu0 %v993
        %v1040 = vpop.xlane.xlu0 %1039
        %1041 = vmax.xlane.f32.xlu0 %v996
        %v1042 = vpop.xlane.xlu0 %1041
        %1043 = vmax.xlane.f32.xlu0 %v1001
        %v1044 = vpop.xlane.xlu0 %1043
        %1045 = vmax.xlane.f32.xlu0 %v1004
        %v1046 = vpop.xlane.xlu0 %1045
        %1047 = vmax.xlane.f32.xlu0 %v1009
        %v1048 = vpop.xlane.xlu0 %1047
        %1049 = vmax.xlane.f32.xlu0 %v1012
        %v1050 = vpop.xlane.xlu0 %1049
        %1051 = vmax.xlane.f32.xlu0 %v1017
        %v1052 = vpop.xlane.xlu0 %1051
        %1053 = vmax.xlane.f32.xlu0 %v1020
        %v1054 = vpop.xlane.xlu0 %1053
        %v1055 = vsub.f32 %v961, %v1024
        %v1056 = vsub.f32 %v964, %v1026
        %v1057 = vsub.f32 %v969, %v1028
        %v1058 = vsub.f32 %v972, %v1030
        %v1059 = vsub.f32 %v977, %v1032
        %v1060 = vsub.f32 %v980, %v1034
        %v1061 = vsub.f32 %v985, %v1036
        %v1062 = vsub.f32 %v988, %v1038
        %v1063 = vsub.f32 %v993, %v1040
        %v1064 = vsub.f32 %v996, %v1042
        %v1065 = vsub.f32 %v1001, %v1044
        %v1066 = vsub.f32 %v1004, %v1046
        %v1067 = vsub.f32 %v1009, %v1048
        %v1068 = vsub.f32 %v1012, %v1050
        %v1069 = vsub.f32 %v1017, %v1052
        %v1070 = vsub.f32 %v1020, %v1054
        %v1071 = vmul.f32 %v1055, 1.442695
        %v1072 = vpow.pop %v1071
        %v1073 = vmul.f32 %v1056, 1.442695
        %v1074 = vpow.pop %v1073
        %v1075 = vmul.f32 %v1057, 1.442695
        %v1076 = vpow.pop %v1075
        %v1077 = vmul.f32 %v1058, 1.442695
        %v1078 = vpow.pop %v1077
        %v1079 = vmul.f32 %v1059, 1.442695
        %v1080 = vpow.pop %v1079
        %v1081 = vmul.f32 %v1060, 1.442695
        %v1082 = vpow.pop %v1081
        %v1083 = vmul.f32 %v1061, 1.442695
        %v1084 = vpow.pop %v1083
        %v1085 = vmul.f32 %v1062, 1.442695
        %v1086 = vpow.pop %v1085
        %v1087 = vmul.f32 %v1063, 1.442695
        %v1088 = vpow.pop %v1087
        %v1089 = vmul.f32 %v1064, 1.442695
        %v1090 = vpow.pop %v1089
        %v1091 = vmul.f32 %v1065, 1.442695
        %v1092 = vpow.pop %v1091
        %v1093 = vmul.f32 %v1066, 1.442695
        %v1094 = vpow.pop %v1093
        %v1095 = vmul.f32 %v1067, 1.442695
        %v1096 = vpow.pop %v1095
        %v1097 = vmul.f32 %v1068, 1.442695
        %v1098 = vpow.pop %v1097
        %v1099 = vmul.f32 %v1069, 1.442695
        %v1100 = vpow.pop %v1099
        %v1101 = vmul.f32 %v1070, 1.442695
        %v1102 = vpow.pop %v1101
        %1103 = vadd.xlane.f32.xlu0 %v1072
        %v1104 = vpop.xlane.xlu0 %1103
        %1105 = vadd.xlane.f32.xlu0 %v1074
        %v1106 = vpop.xlane.xlu0 %1105
        %1107 = vadd.xlane.f32.xlu0 %v1076
        %v1108 = vpop.xlane.xlu0 %1107
        %1109 = vadd.xlane.f32.xlu0 %v1078
        %v1110 = vpop.xlane.xlu0 %1109
        %1111 = vadd.xlane.f32.xlu0 %v1080
        %v1112 = vpop.xlane.xlu0 %1111
        %1113 = vadd.xlane.f32.xlu0 %v1082
        %v1114 = vpop.xlane.xlu0 %1113
        %1115 = vadd.xlane.f32.xlu0 %v1084
        %v1116 = vpop.xlane.xlu0 %1115
        %1117 = vadd.xlane.f32.xlu0 %v1086
        %v1118 = vpop.xlane.xlu0 %1117
        %1119 = vadd.xlane.f32.xlu0 %v1088
        %v1120 = vpop.xlane.xlu0 %1119
        %1121 = vadd.xlane.f32.xlu0 %v1090
        %v1122 = vpop.xlane.xlu0 %1121
        %1123 = vadd.xlane.f32.xlu0 %v1092
        %v1124 = vpop.xlane.xlu0 %1123
        %1125 = vadd.xlane.f32.xlu0 %v1094
        %v1126 = vpop.xlane.xlu0 %1125
        %1127 = vadd.xlane.f32.xlu0 %v1096
        %v1128 = vpop.xlane.xlu0 %1127
        %1129 = vadd.xlane.f32.xlu0 %v1098
        %v1130 = vpop.xlane.xlu0 %1129
        %1131 = vadd.xlane.f32.xlu0 %v1100
        %v1132 = vpop.xlane.xlu0 %1131
        %1133 = vadd.xlane.f32.xlu0 %v1102
        %v1134 = vpop.xlane.xlu0 %1133
        %v1135 = vpack.c.bf16 %v1074, %v1072
        %v1136 = vpack.c.bf16 %v1078, %v1076
        %v1137 = vpack.c.bf16 %v1082, %v1080
        %v1138 = vpack.c.bf16 %v1086, %v1084
        %v1139 = vpack.c.bf16 %v1090, %v1088
        %v1140 = vpack.c.bf16 %v1094, %v1092
        %v1141 = vpack.c.bf16 %v1098, %v1096
        %v1142 = vpack.c.bf16 %v1102, %v1100
        %1143 = vmatprep.subr.bf16.mxu0 0
        %1144 = vmatpush1.bf16.msra.mxu0 %v869
        %1145 = vmatprep.subr.bf16.mxu0 0
        %1146 = vmatpush1.bf16.msra.mxu0 %v870
        %1147 = vmatprep.subr.bf16.mxu0 0
        %1148 = vmatpush1.bf16.msra.mxu0 %v871
        %1149 = vmatprep.subr.bf16.mxu0 0
        %1150 = vmatpush1.bf16.msra.mxu0 %v872
        %1151 = vmatprep.subr.bf16.mxu0 0
        %1152 = vmatpush1.bf16.msra.mxu0 %v873
        %1153 = vmatprep.subr.bf16.mxu0 0
        %1154 = vmatpush1.bf16.msra.mxu0 %v874
        %1155 = vmatprep.subr.bf16.mxu0 0
        %1156 = vmatpush1.bf16.msra.mxu0 %v875
        %1157 = vmatprep.subr.bf16.mxu0 0
        %1158 = vmatpush1.bf16.msra.mxu0 %v876
        %1159 = vmatprep.subr.bf16.mxu0 0
        %1160 = vmatpush1.bf16.msra.mxu0 0
        %1161 = vmatprep.subr.bf16.mxu0 0
        %1162 = vmatpush1.bf16.msra.mxu0 0
        %1163 = vmatprep.subr.bf16.mxu0 0
        %1164 = vmatpush1.bf16.msra.mxu0 0
        %1165 = vmatprep.subr.bf16.mxu0 0
        %1166 = vmatpush1.bf16.msra.mxu0 0
        %1167 = vmatprep.subr.bf16.mxu0 0
        %1168 = vmatpush1.bf16.msra.mxu0 0
        %1169 = vmatprep.subr.bf16.mxu0 0
        %1170 = vmatpush1.bf16.msra.mxu0 0
        %1171 = vmatprep.subr.bf16.mxu0 0
        %1172 = vmatpush1.bf16.msra.mxu0 0
        %1173 = vmatprep.subr.bf16.mxu0 0
        %1174 = vmatpush1.bf16.msra.mxu0 0
        %1175 = vmatprep.mubr.bf16.mxu0 0
        %1176 = vmatmul.mubr.bf16.gmra.mrb[0].mxu0 %v1135
        %v1177 = vpop.f32.mrb[0].mxu0
        %v1178 = vadd.f32 0.0, %v1177
        %v1179 = vpop.f32.mrb[0].mxu0
        %v1180 = vpop.f32.mrb[0].mxu0
        %v1181 = vadd.f32 0.0, %v1180
        %v1182 = vpop.f32.mrb[0].mxu0
        %1183 = vmatprep.mubr.bf16.mxu0 0
        %1184 = vmatmul.mubr.bf16.gmra.mrb[0].mxu0 %v1136
        %v1185 = vpop.f32.mrb[0].mxu0
        %v1186 = vadd.f32 0.0, %v1185
        %v1187 = vpop.f32.mrb[0].mxu0
        %v1188 = vpop.f32.mrb[0].mxu0
        %v1189 = vadd.f32 0.0, %v1188
        %v1190 = vpop.f32.mrb[0].mxu0
        %1191 = vmatprep.mubr.bf16.mxu0 0
        %1192 = vmatmul.mubr.bf16.gmra.mrb[0].mxu0 %v1137
        %v1193 = vpop.f32.mrb[0].mxu0
        %v1194 = vadd.f32 0.0, %v1193
        %v1195 = vpop.f32.mrb[0].mxu0
        %v1196 = vpop.f32.mrb[0].mxu0
        %v1197 = vadd.f32 0.0, %v1196
        %v1198 = vpop.f32.mrb[0].mxu0
        %1199 = vmatprep.mubr.bf16.mxu0 0
        %1200 = vmatmul.mubr.bf16.gmra.mrb[0].mxu0 %v1138
        %v1201 = vpop.f32.mrb[0].mxu0
        %v1202 = vadd.f32 0.0, %v1201
        %v1203 = vpop.f32.mrb[0].mxu0
        %v1204 = vpop.f32.mrb[0].mxu0
        %v1205 = vadd.f32 0.0, %v1204
        %v1206 = vpop.f32.mrb[0].mxu0
        %1207 = vmatprep.mubr.bf16.mxu0 0
        %1208 = vmatmul.mubr.bf16.gmra.mrb[0].mxu0 %v1139
        %v1209 = vpop.f32.mrb[0].mxu0
        %v1210 = vadd.f32 0.0, %v1209
        %v1211 = vpop.f32.mrb[0].mxu0
        %v1212 = vpop.f32.mrb[0].mxu0
        %v1213 = vadd.f32 0.0, %v1212
        %v1214 = vpop.f32.mrb[0].mxu0
        %1215 = vmatprep.mubr.bf16.mxu0 0
        %1216 = vmatmul.mubr.bf16.gmra.mrb[0].mxu0 %v1140
        %v1217 = vpop.f32.mrb[0].mxu0
        %v1218 = vadd.f32 0.0, %v1217
        %v1219 = vpop.f32.mrb[0].mxu0
        %v1220 = vpop.f32.mrb[0].mxu0
        %v1221 = vadd.f32 0.0, %v1220
        %v1222 = vpop.f32.mrb[0].mxu0
        %1223 = vmatprep.mubr.bf16.mxu0 0
        %1224 = vmatmul.mubr.bf16.gmra.mrb[0].mxu0 %v1141
        %v1225 = vpop.f32.mrb[0].mxu0
        %v1226 = vadd.f32 0.0, %v1225
        %v1227 = vpop.f32.mrb[0].mxu0
        %v1228 = vpop.f32.mrb[0].mxu0
        %v1229 = vadd.f32 0.0, %v1228
        %v1230 = vpop.f32.mrb[0].mxu0
        %1231 = vmatprep.mubr.bf16.mxu0 0
        %1232 = vmatmul.mubr.bf16.gmra.mrb[0].mxu0 %v1142
        %v1233 = vpop.f32.mrb[0].mxu0
        %v1234 = vadd.f32 0.0, %v1233
        %v1235 = vpop.f32.mrb[0].mxu0
        %v1236 = vpop.f32.mrb[0].mxu0
        %v1237 = vadd.f32 0.0, %v1236
        %v1238 = vpop.f32.mrb[0].mxu0
        %1239 = vdwg.mxu0
        %v1240 = vrcp.pop %v1104
        %v1241 = vrcp.pop %v1106
        %v1242 = vrcp.pop %v1108
        %v1243 = vrcp.pop %v1110
        %v1244 = vrcp.pop %v1112
        %v1245 = vrcp.pop %v1114
        %v1246 = vrcp.pop %v1116
        %v1247 = vrcp.pop %v1118
        %v1248 = vrcp.pop %v1120
        %v1249 = vrcp.pop %v1122
        %v1250 = vrcp.pop %v1124
        %v1251 = vrcp.pop %v1126
        %v1252 = vrcp.pop %v1128
        %v1253 = vrcp.pop %v1130
        %v1254 = vrcp.pop %v1132
        %v1255 = vrcp.pop %v1134
        %v1256 = vmul.f32 %v1178, %v1240
        %v1257 = vmul.f32 %v1181, %v1241
        %v1258 = vmul.f32 %v1186, %v1242
        %v1259 = vmul.f32 %v1189, %v1243
        %v1260 = vmul.f32 %v1194, %v1244
        %v1261 = vmul.f32 %v1197, %v1245
        %v1262 = vmul.f32 %v1202, %v1246
        %v1263 = vmul.f32 %v1205, %v1247
        %v1264 = vmul.f32 %v1210, %v1248
        %v1265 = vmul.f32 %v1213, %v1249
        %v1266 = vmul.f32 %v1218, %v1250
        %v1267 = vmul.f32 %v1221, %v1251
        %v1268 = vmul.f32 %v1226, %v1252
        %v1269 = vmul.f32 %v1229, %v1253
        %v1270 = vmul.f32 %v1234, %v1254
        %v1271 = vmul.f32 %v1237, %v1255
        %v1272 = vpack.c.bf16 %v1257, %v1256
        %v1273 = vpack.c.bf16 %v1259, %v1258
        %v1274 = vpack.c.bf16 %v1261, %v1260
        %v1275 = vpack.c.bf16 %v1263, %v1262
        %v1276 = vpack.c.bf16 %v1265, %v1264
        %v1277 = vpack.c.bf16 %v1267, %v1266
        %v1278 = vpack.c.bf16 %v1269, %v1268
        %v1279 = vpack.c.bf16 %v1271, %v1270
        %1288 = vrot.lane.b32.xlu0 %v853, 96
        %v1289 = vpop.permute.xlu0 %1288
        %1290 = vrot.lane.b32.xlu0 %v854, 96
        %v1291 = vpop.permute.xlu0 %1290
        %1292 = vrot.lane.b32.xlu0 %v855, 96
        %v1293 = vpop.permute.xlu0 %1292
        %1294 = vrot.lane.b32.xlu0 %v856, 96
        %v1295 = vpop.permute.xlu0 %1294
        %1296 = vrot.lane.b32.xlu0 %v857, 96
        %v1297 = vpop.permute.xlu0 %1296
        %1298 = vrot.lane.b32.xlu0 %v858, 96
        %v1299 = vpop.permute.xlu0 %1298
        %1300 = vrot.lane.b32.xlu0 %v859, 96
        %v1301 = vpop.permute.xlu0 %1300
        %1302 = vrot.lane.b32.xlu0 %v860, 96
        %v1303 = vpop.permute.xlu0 %1302
        %1312 = vrot.lane.b32.xlu0 %v861, 96
        %v1313 = vpop.permute.xlu0 %1312
        %1314 = vrot.lane.b32.xlu0 %v862, 96
        %v1315 = vpop.permute.xlu0 %1314
        %1316 = vrot.lane.b32.xlu0 %v863, 96
        %v1317 = vpop.permute.xlu0 %1316
        %1318 = vrot.lane.b32.xlu0 %v864, 96
        %v1319 = vpop.permute.xlu0 %1318
        %1320 = vrot.lane.b32.xlu0 %v865, 96
        %v1321 = vpop.permute.xlu0 %1320
        %1322 = vrot.lane.b32.xlu0 %v866, 96
        %v1323 = vpop.permute.xlu0 %1322
        %1324 = vrot.lane.b32.xlu0 %v867, 96
        %v1325 = vpop.permute.xlu0 %1324
        %1326 = vrot.lane.b32.xlu0 %v868, 96
        %v1327 = vpop.permute.xlu0 %1326
        %v1329 = vsel %vm877, %v1289, 0
        %v1332 = vsel %vm877, %v1291, 0
        %v1335 = vsel %vm877, %v1293, 0
        %v1338 = vsel %vm877, %v1295, 0
        %v1341 = vsel %vm877, %v1297, 0
        %v1344 = vsel %vm877, %v1299, 0
        %v1347 = vsel %vm877, %v1301, 0
        %v1350 = vsel %vm877, %v1303, 0
        %v1353 = vsel %vm877, %v1313, 0
        %v1356 = vsel %vm877, %v1315, 0
        %v1359 = vsel %vm877, %v1317, 0
        %v1362 = vsel %vm877, %v1319, 0
        %v1365 = vsel %vm877, %v1321, 0
        %v1368 = vsel %vm877, %v1323, 0
        %v1371 = vsel %vm877, %v1325, 0
        %v1374 = vsel %vm877, %v1327, 0
        %1376 = vmatprep.subr.bf16.mxu0 0
        %1377 = vmatpush1.bf16.xpose.msra.mxu0 %v1353
        %1378 = vmatprep.subr.bf16.mxu0 0
        %1379 = vmatpush1.bf16.xpose.msra.mxu0 %v1356
        %1380 = vmatprep.subr.bf16.mxu0 0
        %1381 = vmatpush1.bf16.xpose.msra.mxu0 %v1359
        %1382 = vmatprep.subr.bf16.mxu0 0
        %1383 = vmatpush1.bf16.xpose.msra.mxu0 %v1362
        %1384 = vmatprep.subr.bf16.mxu0 0
        %1385 = vmatpush1.bf16.xpose.msra.mxu0 %v1365
        %1386 = vmatprep.subr.bf16.mxu0 0
        %1387 = vmatpush1.bf16.xpose.msra.mxu0 %v1368
        %1388 = vmatprep.subr.bf16.mxu0 0
        %1389 = vmatpush1.bf16.xpose.msra.mxu0 %v1371
        %1390 = vmatprep.subr.bf16.mxu0 0
        %1391 = vmatpush1.bf16.xpose.msra.mxu0 %v1374
        %1392 = vmatprep.subr.bf16.mxu0 0
        %1393 = vmatpush1.bf16.xpose.msra.mxu0 0
        %1394 = vmatprep.subr.bf16.mxu0 0
        %1395 = vmatpush1.bf16.xpose.msra.mxu0 0
        %1396 = vmatprep.subr.bf16.mxu0 0
        %1397 = vmatpush1.bf16.xpose.msra.mxu0 0
        %1398 = vmatprep.subr.bf16.mxu0 0
        %1399 = vmatpush1.bf16.xpose.msra.mxu0 0
        %1400 = vmatprep.subr.bf16.mxu0 0
        %1401 = vmatpush1.bf16.xpose.msra.mxu0 0
        %1402 = vmatprep.subr.bf16.mxu0 0
        %1403 = vmatpush1.bf16.xpose.msra.mxu0 0
        %1404 = vmatprep.subr.bf16.mxu0 0
        %1405 = vmatpush1.bf16.xpose.msra.mxu0 0
        %1406 = vmatprep.subr.bf16.mxu0 0
        %1407 = vmatpush1.bf16.xpose.msra.mxu0 0
        %1408 = vmatprep.mubr.bf16.mxu0 0
        %1409 = vmatmul.mubr.bf16.gmra.mrb[0].mxu0 %v1329
        %v1410 = vpop.f32.mrb[0].mxu0
        %v1411 = vadd.f32 0.0, %v1410
        %v1412 = vpop.f32.mrb[0].mxu0
        %v1413 = vpop.f32.mrb[0].mxu0
        %v1414 = vadd.f32 0.0, %v1413
        %v1415 = vpop.f32.mrb[0].mxu0
        %1416 = vmatprep.mubr.bf16.mxu0 0
        %1417 = vmatmul.mubr.bf16.gmra.mrb[0].mxu0 %v1332
        %v1418 = vpop.f32.mrb[0].mxu0
        %v1419 = vadd.f32 0.0, %v1418
        %v1420 = vpop.f32.mrb[0].mxu0
        %v1421 = vpop.f32.mrb[0].mxu0
        %v1422 = vadd.f32 0.0, %v1421
        %v1423 = vpop.f32.mrb[0].mxu0
        %1424 = vmatprep.mubr.bf16.mxu0 0
        %1425 = vmatmul.mubr.bf16.gmra.mrb[0].mxu0 %v1335
        %v1426 = vpop.f32.mrb[0].mxu0
        %v1427 = vadd.f32 0.0, %v1426
        %v1428 = vpop.f32.mrb[0].mxu0
        %v1429 = vpop.f32.mrb[0].mxu0
        %v1430 = vadd.f32 0.0, %v1429
        %v1431 = vpop.f32.mrb[0].mxu0
        %1432 = vmatprep.mubr.bf16.mxu0 0
        %1433 = vmatmul.mubr.bf16.gmra.mrb[0].mxu0 %v1338
        %v1434 = vpop.f32.mrb[0].mxu0
        %v1435 = vadd.f32 0.0, %v1434
        %v1436 = vpop.f32.mrb[0].mxu0
        %v1437 = vpop.f32.mrb[0].mxu0
        %v1438 = vadd.f32 0.0, %v1437
        %v1439 = vpop.f32.mrb[0].mxu0
        %1440 = vmatprep.mubr.bf16.mxu0 0
        %1441 = vmatmul.mubr.bf16.gmra.mrb[0].mxu0 %v1341
        %v1442 = vpop.f32.mrb[0].mxu0
        %v1443 = vadd.f32 0.0, %v1442
        %v1444 = vpop.f32.mrb[0].mxu0
        %v1445 = vpop.f32.mrb[0].mxu0
        %v1446 = vadd.f32 0.0, %v1445
        %v1447 = vpop.f32.mrb[0].mxu0
        %1448 = vmatprep.mubr.bf16.mxu0 0
        %1449 = vmatmul.mubr.bf16.gmra.mrb[0].mxu0 %v1344
        %v1450 = vpop.f32.mrb[0].mxu0
        %v1451 = vadd.f32 0.0, %v1450
        %v1452 = vpop.f32.mrb[0].mxu0
        %v1453 = vpop.f32.mrb[0].mxu0
        %v1454 = vadd.f32 0.0, %v1453
        %v1455 = vpop.f32.mrb[0].mxu0
        %1456 = vmatprep.mubr.bf16.mxu0 0
        %1457 = vmatmul.mubr.bf16.gmra.mrb[0].mxu0 %v1347
        %v1458 = vpop.f32.mrb[0].mxu0
        %v1459 = vadd.f32 0.0, %v1458
        %v1460 = vpop.f32.mrb[0].mxu0
        %v1461 = vpop.f32.mrb[0].mxu0
        %v1462 = vadd.f32 0.0, %v1461
        %v1463 = vpop.f32.mrb[0].mxu0
        %1464 = vmatprep.mubr.bf16.mxu0 0
        %1465 = vmatmul.mubr.bf16.gmra.mrb[0].mxu0 %v1350
        %v1466 = vpop.f32.mrb[0].mxu0
        %v1467 = vadd.f32 0.0, %v1466
        %v1468 = vpop.f32.mrb[0].mxu0
        %v1469 = vpop.f32.mrb[0].mxu0
        %v1470 = vadd.f32 0.0, %v1469
        %v1471 = vpop.f32.mrb[0].mxu0
        %1472 = vdwg.mxu0
        %1473 = vmax.xlane.f32.xlu0 %v1411
        %v1474 = vpop.xlane.xlu0 %1473
        %1475 = vmax.xlane.f32.xlu0 %v1414
        %v1476 = vpop.xlane.xlu0 %1475
        %1477 = vmax.xlane.f32.xlu0 %v1419
        %v1478 = vpop.xlane.xlu0 %1477
        %1479 = vmax.xlane.f32.xlu0 %v1422
        %v1480 = vpop.xlane.xlu0 %1479
        %1481 = vmax.xlane.f32.xlu0 %v1427
        %v1482 = vpop.xlane.xlu0 %1481
        %1483 = vmax.xlane.f32.xlu0 %v1430
        %v1484 = vpop.xlane.xlu0 %1483
        %1485 = vmax.xlane.f32.xlu0 %v1435
        %v1486 = vpop.xlane.xlu0 %1485
        %1487 = vmax.xlane.f32.xlu0 %v1438
        %v1488 = vpop.xlane.xlu0 %1487
        %1489 = vmax.xlane.f32.xlu0 %v1443
        %v1490 = vpop.xlane.xlu0 %1489
        %1491 = vmax.xlane.f32.xlu0 %v1446
        %v1492 = vpop.xlane.xlu0 %1491
        %1493 = vmax.xlane.f32.xlu0 %v1451
        %v1494 = vpop.xlane.xlu0 %1493
        %1495 = vmax.xlane.f32.xlu0 %v1454
        %v1496 = vpop.xlane.xlu0 %1495
        %1497 = vmax.xlane.f32.xlu0 %v1459
        %v1498 = vpop.xlane.xlu0 %1497
        %1499 = vmax.xlane.f32.xlu0 %v1462
        %v1500 = vpop.xlane.xlu0 %1499
        %1501 = vmax.xlane.f32.xlu0 %v1467
        %v1502 = vpop.xlane.xlu0 %1501
        %1503 = vmax.xlane.f32.xlu0 %v1470
        %v1504 = vpop.xlane.xlu0 %1503
        %v1505 = vsub.f32 %v1411, %v1474
        %v1506 = vsub.f32 %v1414, %v1476
        %v1507 = vsub.f32 %v1419, %v1478
        %v1508 = vsub.f32 %v1422, %v1480
        %v1509 = vsub.f32 %v1427, %v1482
        %v1510 = vsub.f32 %v1430, %v1484
        %v1511 = vsub.f32 %v1435, %v1486
        %v1512 = vsub.f32 %v1438, %v1488
        %v1513 = vsub.f32 %v1443, %v1490
        %v1514 = vsub.f32 %v1446, %v1492
        %v1515 = vsub.f32 %v1451, %v1494
        %v1516 = vsub.f32 %v1454, %v1496
        %v1517 = vsub.f32 %v1459, %v1498
        %v1518 = vsub.f32 %v1462, %v1500
        %v1519 = vsub.f32 %v1467, %v1502
        %v1520 = vsub.f32 %v1470, %v1504
        %v1521 = vmul.f32 %v1505, 1.442695
        %v1522 = vpow.pop %v1521
        %v1523 = vmul.f32 %v1506, 1.442695
        %v1524 = vpow.pop %v1523
        %v1525 = vmul.f32 %v1507, 1.442695
        %v1526 = vpow.pop %v1525
        %v1527 = vmul.f32 %v1508, 1.442695
        %v1528 = vpow.pop %v1527
        %v1529 = vmul.f32 %v1509, 1.442695
        %v1530 = vpow.pop %v1529
        %v1531 = vmul.f32 %v1510, 1.442695
        %v1532 = vpow.pop %v1531
        %v1533 = vmul.f32 %v1511, 1.442695
        %v1534 = vpow.pop %v1533
        %v1535 = vmul.f32 %v1512, 1.442695
        %v1536 = vpow.pop %v1535
        %v1537 = vmul.f32 %v1513, 1.442695
        %v1538 = vpow.pop %v1537
        %v1539 = vmul.f32 %v1514, 1.442695
        %v1540 = vpow.pop %v1539
        %v1541 = vmul.f32 %v1515, 1.442695
        %v1542 = vpow.pop %v1541
        %v1543 = vmul.f32 %v1516, 1.442695
        %v1544 = vpow.pop %v1543
        %v1545 = vmul.f32 %v1517, 1.442695
        %v1546 = vpow.pop %v1545
        %v1547 = vmul.f32 %v1518, 1.442695
        %v1548 = vpow.pop %v1547
        %v1549 = vmul.f32 %v1519, 1.442695
        %v1550 = vpow.pop %v1549
        %v1551 = vmul.f32 %v1520, 1.442695
        %v1552 = vpow.pop %v1551
        %1553 = vadd.xlane.f32.xlu0 %v1522
        %v1554 = vpop.xlane.xlu0 %1553
        %1555 = vadd.xlane.f32.xlu0 %v1524
        %v1556 = vpop.xlane.xlu0 %1555
        %1557 = vadd.xlane.f32.xlu0 %v1526
        %v1558 = vpop.xlane.xlu0 %1557
        %1559 = vadd.xlane.f32.xlu0 %v1528
        %v1560 = vpop.xlane.xlu0 %1559
        %1561 = vadd.xlane.f32.xlu0 %v1530
        %v1562 = vpop.xlane.xlu0 %1561
        %1563 = vadd.xlane.f32.xlu0 %v1532
        %v1564 = vpop.xlane.xlu0 %1563
        %1565 = vadd.xlane.f32.xlu0 %v1534
        %v1566 = vpop.xlane.xlu0 %1565
        %1567 = vadd.xlane.f32.xlu0 %v1536
        %v1568 = vpop.xlane.xlu0 %1567
        %1569 = vadd.xlane.f32.xlu0 %v1538
        %v1570 = vpop.xlane.xlu0 %1569
        %1571 = vadd.xlane.f32.xlu0 %v1540
        %v1572 = vpop.xlane.xlu0 %1571
        %1573 = vadd.xlane.f32.xlu0 %v1542
        %v1574 = vpop.xlane.xlu0 %1573
        %1575 = vadd.xlane.f32.xlu0 %v1544
        %v1576 = vpop.xlane.xlu0 %1575
        %1577 = vadd.xlane.f32.xlu0 %v1546
        %v1578 = vpop.xlane.xlu0 %1577
        %1579 = vadd.xlane.f32.xlu0 %v1548
        %v1580 = vpop.xlane.xlu0 %1579
        %1581 = vadd.xlane.f32.xlu0 %v1550
        %v1582 = vpop.xlane.xlu0 %1581
        %1583 = vadd.xlane.f32.xlu0 %v1552
        %v1584 = vpop.xlane.xlu0 %1583
        %v1585 = vpack.c.bf16 %v1524, %v1522
        %v1586 = vpack.c.bf16 %v1528, %v1526
        %v1587 = vpack.c.bf16 %v1532, %v1530
        %v1588 = vpack.c.bf16 %v1536, %v1534
        %v1589 = vpack.c.bf16 %v1540, %v1538
        %v1590 = vpack.c.bf16 %v1544, %v1542
        %v1591 = vpack.c.bf16 %v1548, %v1546
        %v1592 = vpack.c.bf16 %v1552, %v1550
        %1601 = vrot.lane.b32.xlu0 %v869, 96
        %v1602 = vpop.permute.xlu0 %1601
        %1603 = vrot.lane.b32.xlu0 %v870, 96
        %v1604 = vpop.permute.xlu0 %1603
        %1605 = vrot.lane.b32.xlu0 %v871, 96
        %v1606 = vpop.permute.xlu0 %1605
        %1607 = vrot.lane.b32.xlu0 %v872, 96
        %v1608 = vpop.permute.xlu0 %1607
        %1609 = vrot.lane.b32.xlu0 %v873, 96
        %v1610 = vpop.permute.xlu0 %1609
        %1611 = vrot.lane.b32.xlu0 %v874, 96
        %v1612 = vpop.permute.xlu0 %1611
        %1613 = vrot.lane.b32.xlu0 %v875, 96
        %v1614 = vpop.permute.xlu0 %1613
        %1615 = vrot.lane.b32.xlu0 %v876, 96
        %v1616 = vpop.permute.xlu0 %1615
        %1625 = vmatprep.subr.bf16.mxu0 0
        %1626 = vmatpush1.bf16.msra.mxu0 %v1602
        %1627 = vmatprep.subr.bf16.mxu0 0
        %1628 = vmatpush1.bf16.msra.mxu0 %v1604
        %1629 = vmatprep.subr.bf16.mxu0 0
        %1630 = vmatpush1.bf16.msra.mxu0 %v1606
        %1631 = vmatprep.subr.bf16.mxu0 0
        %1632 = vmatpush1.bf16.msra.mxu0 %v1608
        %1633 = vmatprep.subr.bf16.mxu0 0
        %1634 = vmatpush1.bf16.msra.mxu0 %v1610
        %1635 = vmatprep.subr.bf16.mxu0 0
        %1636 = vmatpush1.bf16.msra.mxu0 %v1612
        %1637 = vmatprep.subr.bf16.mxu0 0
        %1638 = vmatpush1.bf16.msra.mxu0 %v1614
        %1639 = vmatprep.subr.bf16.mxu0 0
        %1640 = vmatpush1.bf16.msra.mxu0 %v1616
        %1641 = vmatprep.subr.bf16.mxu0 0
        %1642 = vmatpush1.bf16.msra.mxu0 0
        %1643 = vmatprep.subr.bf16.mxu0 0
        %1644 = vmatpush1.bf16.msra.mxu0 0
        %1645 = vmatprep.subr.bf16.mxu0 0
        %1646 = vmatpush1.bf16.msra.mxu0 0
        %1647 = vmatprep.subr.bf16.mxu0 0
        %1648 = vmatpush1.bf16.msra.mxu0 0
        %1649 = vmatprep.subr.bf16.mxu0 0
        %1650 = vmatpush1.bf16.msra.mxu0 0
        %1651 = vmatprep.subr.bf16.mxu0 0
        %1652 = vmatpush1.bf16.msra.mxu0 0
        %1653 = vmatprep.subr.bf16.mxu0 0
        %1654 = vmatpush1.bf16.msra.mxu0 0
        %1655 = vmatprep.subr.bf16.mxu0 0
        %1656 = vmatpush1.bf16.msra.mxu0 0
        %1657 = vmatprep.mubr.bf16.mxu0 0
        %1658 = vmatmul.mubr.bf16.gmra.mrb[0].mxu0 %v1585
        %v1659 = vpop.f32.mrb[0].mxu0
        %v1660 = vadd.f32 0.0, %v1659
        %v1661 = vpop.f32.mrb[0].mxu0
        %v1662 = vpop.f32.mrb[0].mxu0
        %v1663 = vadd.f32 0.0, %v1662
        %v1664 = vpop.f32.mrb[0].mxu0
        %1665 = vmatprep.mubr.bf16.mxu0 0
        %1666 = vmatmul.mubr.bf16.gmra.mrb[0].mxu0 %v1586
        %v1667 = vpop.f32.mrb[0].mxu0
        %v1668 = vadd.f32 0.0, %v1667
        %v1669 = vpop.f32.mrb[0].mxu0
        %v1670 = vpop.f32.mrb[0].mxu0
        %v1671 = vadd.f32 0.0, %v1670
        %v1672 = vpop.f32.mrb[0].mxu0
        %1673 = vmatprep.mubr.bf16.mxu0 0
        %1674 = vmatmul.mubr.bf16.gmra.mrb[0].mxu0 %v1587
        %v1675 = vpop.f32.mrb[0].mxu0
        %v1676 = vadd.f32 0.0, %v1675
        %v1677 = vpop.f32.mrb[0].mxu0
        %v1678 = vpop.f32.mrb[0].mxu0
        %v1679 = vadd.f32 0.0, %v1678
        %v1680 = vpop.f32.mrb[0].mxu0
        %1681 = vmatprep.mubr.bf16.mxu0 0
        %1682 = vmatmul.mubr.bf16.gmra.mrb[0].mxu0 %v1588
        %v1683 = vpop.f32.mrb[0].mxu0
        %v1684 = vadd.f32 0.0, %v1683
        %v1685 = vpop.f32.mrb[0].mxu0
        %v1686 = vpop.f32.mrb[0].mxu0
        %v1687 = vadd.f32 0.0, %v1686
        %v1688 = vpop.f32.mrb[0].mxu0
        %1689 = vmatprep.mubr.bf16.mxu0 0
        %1690 = vmatmul.mubr.bf16.gmra.mrb[0].mxu0 %v1589
        %v1691 = vpop.f32.mrb[0].mxu0
        %v1692 = vadd.f32 0.0, %v1691
        %v1693 = vpop.f32.mrb[0].mxu0
        %v1694 = vpop.f32.mrb[0].mxu0
        %v1695 = vadd.f32 0.0, %v1694
        %v1696 = vpop.f32.mrb[0].mxu0
        %1697 = vmatprep.mubr.bf16.mxu0 0
        %1698 = vmatmul.mubr.bf16.gmra.mrb[0].mxu0 %v1590
        %v1699 = vpop.f32.mrb[0].mxu0
        %v1700 = vadd.f32 0.0, %v1699
        %v1701 = vpop.f32.mrb[0].mxu0
        %v1702 = vpop.f32.mrb[0].mxu0
        %v1703 = vadd.f32 0.0, %v1702
        %v1704 = vpop.f32.mrb[0].mxu0
        %1705 = vmatprep.mubr.bf16.mxu0 0
        %1706 = vmatmul.mubr.bf16.gmra.mrb[0].mxu0 %v1591
        %v1707 = vpop.f32.mrb[0].mxu0
        %v1708 = vadd.f32 0.0, %v1707
        %v1709 = vpop.f32.mrb[0].mxu0
        %v1710 = vpop.f32.mrb[0].mxu0
        %v1711 = vadd.f32 0.0, %v1710
        %v1712 = vpop.f32.mrb[0].mxu0
        %1713 = vmatprep.mubr.bf16.mxu0 0
        %1714 = vmatmul.mubr.bf16.gmra.mrb[0].mxu0 %v1592
        %v1715 = vpop.f32.mrb[0].mxu0
        %v1716 = vadd.f32 0.0, %v1715
        %v1717 = vpop.f32.mrb[0].mxu0
        %v1718 = vpop.f32.mrb[0].mxu0
        %v1719 = vadd.f32 0.0, %v1718
        %v1720 = vpop.f32.mrb[0].mxu0
        %1721 = vdwg.mxu0
        %v1722 = vrcp.pop %v1554
        %v1723 = vrcp.pop %v1556
        %v1724 = vrcp.pop %v1558
        %v1725 = vrcp.pop %v1560
        %v1726 = vrcp.pop %v1562
        %v1727 = vrcp.pop %v1564
        %v1728 = vrcp.pop %v1566
        %v1729 = vrcp.pop %v1568
        %v1730 = vrcp.pop %v1570
        %v1731 = vrcp.pop %v1572
        %v1732 = vrcp.pop %v1574
        %v1733 = vrcp.pop %v1576
        %v1734 = vrcp.pop %v1578
        %v1735 = vrcp.pop %v1580
        %v1736 = vrcp.pop %v1582
        %v1737 = vrcp.pop %v1584
        %v1738 = vmul.f32 %v1660, %v1722
        %v1739 = vmul.f32 %v1663, %v1723
        %v1740 = vmul.f32 %v1668, %v1724
        %v1741 = vmul.f32 %v1671, %v1725
        %v1742 = vmul.f32 %v1676, %v1726
        %v1743 = vmul.f32 %v1679, %v1727
        %v1744 = vmul.f32 %v1684, %v1728
        %v1745 = vmul.f32 %v1687, %v1729
        %v1746 = vmul.f32 %v1692, %v1730
        %v1747 = vmul.f32 %v1695, %v1731
        %v1748 = vmul.f32 %v1700, %v1732
        %v1749 = vmul.f32 %v1703, %v1733
        %v1750 = vmul.f32 %v1708, %v1734
        %v1751 = vmul.f32 %v1711, %v1735
        %v1752 = vmul.f32 %v1716, %v1736
        %v1753 = vmul.f32 %v1719, %v1737
        %v1754 = vpack.c.bf16 %v1739, %v1738
        %v1755 = vpack.c.bf16 %v1741, %v1740
        %v1756 = vpack.c.bf16 %v1743, %v1742
        %v1757 = vpack.c.bf16 %v1745, %v1744
        %v1758 = vpack.c.bf16 %v1747, %v1746
        %v1759 = vpack.c.bf16 %v1749, %v1748
        %v1760 = vpack.c.bf16 %v1751, %v1750
        %v1761 = vpack.c.bf16 %v1753, %v1752
        %v1766 = vunpack.c.l.b16 %v825
        %v1767 = vunpack.c.l.b16 %v826
        %v1768 = vunpack.c.l.b16 %v827
        %v1769 = vunpack.c.l.b16 %v828
        %v1770 = vpack.c.b16 %v1767, %v1766
        %v1771 = vpack.c.b16 %v1769, %v1768
        %v1775 = vsel %vm877, %v1754, 0
        %v1778 = vsel %vm877, %v1755, 0
        %v1781 = vsel %vm877, %v1756, 0
        %v1784 = vsel %vm877, %v1757, 0
        %v1787 = vsel %vm877, %v1758, 0
        %v1790 = vsel %vm877, %v1759, 0
        %v1793 = vsel %vm877, %v1760, 0
        %v1796 = vsel %vm877, %v1761, 0
        %1798 = vmatprep.subr.bf16.mxu0 0
        %1799 = vmatpush1.bf16.msra.mxu0 %v1770
        %1800 = vmatprep.subr.bf16.mxu0 0
        %1801 = vmatpush1.bf16.msra.mxu0 %v1771
        %1802 = vmatprep.subr.bf16.mxu0 0
        %1803 = vmatpush1.bf16.msra.mxu0 0
        %1804 = vmatprep.subr.bf16.mxu0 0
        %1805 = vmatpush1.bf16.msra.mxu0 0
        %1806 = vmatprep.subr.bf16.mxu0 0
        %1807 = vmatpush1.bf16.msra.mxu0 0
        %1808 = vmatprep.subr.bf16.mxu0 0
        %1809 = vmatpush1.bf16.msra.mxu0 0
        %1810 = vmatprep.subr.bf16.mxu0 0
        %1811 = vmatpush1.bf16.msra.mxu0 0
        %1812 = vmatprep.subr.bf16.mxu0 0
        %1813 = vmatpush1.bf16.msra.mxu0 0
        %1814 = vmatprep.subr.bf16.mxu0 0
        %1815 = vmatpush1.bf16.msra.mxu0 0
        %1816 = vmatprep.subr.bf16.mxu0 0
        %1817 = vmatpush1.bf16.msra.mxu0 0
        %1818 = vmatprep.subr.bf16.mxu0 0
        %1819 = vmatpush1.bf16.msra.mxu0 0
        %1820 = vmatprep.subr.bf16.mxu0 0
        %1821 = vmatpush1.bf16.msra.mxu0 0
        %1822 = vmatprep.subr.bf16.mxu0 0
        %1823 = vmatpush1.bf16.msra.mxu0 0
        %1824 = vmatprep.subr.bf16.mxu0 0
        %1825 = vmatpush1.bf16.msra.mxu0 0
        %1826 = vmatprep.subr.bf16.mxu0 0
        %1827 = vmatpush1.bf16.msra.mxu0 0
        %1828 = vmatprep.subr.bf16.mxu0 0
        %1829 = vmatpush1.bf16.msra.mxu0 0
        %1830 = vmatprep.mubr.bf16.mxu0 0
        %1831 = vmatmul.mubr.bf16.gmra.mrb[0].mxu0 %v1775
        %v1832 = vpop.f32.mrb[0].mxu0
        %v1833 = vadd.f32 0.0, %v1832
        %v1834 = vpop.f32.mrb[0].mxu0
        %v1835 = vpop.f32.mrb[0].mxu0
        %v1836 = vadd.f32 0.0, %v1835
        %v1837 = vpop.f32.mrb[0].mxu0
        %1838 = vmatprep.mubr.bf16.mxu0 0
        %1839 = vmatmul.mubr.bf16.gmra.mrb[0].mxu0 %v1778
        %v1840 = vpop.f32.mrb[0].mxu0
        %v1841 = vadd.f32 0.0, %v1840
        %v1842 = vpop.f32.mrb[0].mxu0
        %v1843 = vpop.f32.mrb[0].mxu0
        %v1844 = vadd.f32 0.0, %v1843
        %v1845 = vpop.f32.mrb[0].mxu0
        %1846 = vmatprep.mubr.bf16.mxu0 0
        %1847 = vmatmul.mubr.bf16.gmra.mrb[0].mxu0 %v1781
        %v1848 = vpop.f32.mrb[0].mxu0
        %v1849 = vadd.f32 0.0, %v1848
        %v1850 = vpop.f32.mrb[0].mxu0
        %v1851 = vpop.f32.mrb[0].mxu0
        %v1852 = vadd.f32 0.0, %v1851
        %v1853 = vpop.f32.mrb[0].mxu0
        %1854 = vmatprep.mubr.bf16.mxu0 0
        %1855 = vmatmul.mubr.bf16.gmra.mrb[0].mxu0 %v1784
        %v1856 = vpop.f32.mrb[0].mxu0
        %v1857 = vadd.f32 0.0, %v1856
        %v1858 = vpop.f32.mrb[0].mxu0
        %v1859 = vpop.f32.mrb[0].mxu0
        %v1860 = vadd.f32 0.0, %v1859
        %v1861 = vpop.f32.mrb[0].mxu0
        %1862 = vmatprep.mubr.bf16.mxu0 0
        %1863 = vmatmul.mubr.bf16.gmra.mrb[0].mxu0 %v1787
        %v1864 = vpop.f32.mrb[0].mxu0
        %v1865 = vadd.f32 0.0, %v1864
        %v1866 = vpop.f32.mrb[0].mxu0
        %v1867 = vpop.f32.mrb[0].mxu0
        %v1868 = vadd.f32 0.0, %v1867
        %v1869 = vpop.f32.mrb[0].mxu0
        %1870 = vmatprep.mubr.bf16.mxu0 0
        %1871 = vmatmul.mubr.bf16.gmra.mrb[0].mxu0 %v1790
        %v1872 = vpop.f32.mrb[0].mxu0
        %v1873 = vadd.f32 0.0, %v1872
        %v1874 = vpop.f32.mrb[0].mxu0
        %v1875 = vpop.f32.mrb[0].mxu0
        %v1876 = vadd.f32 0.0, %v1875
        %v1877 = vpop.f32.mrb[0].mxu0
        %1878 = vmatprep.mubr.bf16.mxu0 0
        %1879 = vmatmul.mubr.bf16.gmra.mrb[0].mxu0 %v1793
        %v1880 = vpop.f32.mrb[0].mxu0
        %v1881 = vadd.f32 0.0, %v1880
        %v1882 = vpop.f32.mrb[0].mxu0
        %v1883 = vpop.f32.mrb[0].mxu0
        %v1884 = vadd.f32 0.0, %v1883
        %v1885 = vpop.f32.mrb[0].mxu0
        %1886 = vmatprep.mubr.bf16.mxu0 0
        %1887 = vmatmul.mubr.bf16.gmra.mrb[0].mxu0 %v1796
        %v1888 = vpop.f32.mrb[0].mxu0
        %v1889 = vadd.f32 0.0, %v1888
        %v1890 = vpop.f32.mrb[0].mxu0
        %v1891 = vpop.f32.mrb[0].mxu0
        %v1892 = vadd.f32 0.0, %v1891
        %v1893 = vpop.f32.mrb[0].mxu0
        %1894 = vdwg.mxu0
        %v1899 = vunpack.c.l.b16 %v821
        %v1900 = vunpack.c.l.b16 %v822
        %v1901 = vunpack.c.l.b16 %v823
        %v1902 = vunpack.c.l.b16 %v824
        %v1903 = vpack.c.b16 %v1900, %v1899
        %v1904 = vpack.c.b16 %v1902, %v1901
        %v1908 = vsel %vm877, %v1272, 0
        %v1911 = vsel %vm877, %v1273, 0
        %v1914 = vsel %vm877, %v1274, 0
        %v1917 = vsel %vm877, %v1275, 0
        %v1920 = vsel %vm877, %v1276, 0
        %v1923 = vsel %vm877, %v1277, 0
        %v1926 = vsel %vm877, %v1278, 0
        %v1929 = vsel %vm877, %v1279, 0
        %1931 = vmatprep.subr.bf16.mxu0 0
        %1932 = vmatpush1.bf16.msra.mxu0 %v1903
        %1933 = vmatprep.subr.bf16.mxu0 0
        %1934 = vmatpush1.bf16.msra.mxu0 %v1904
        %1935 = vmatprep.subr.bf16.mxu0 0
        %1936 = vmatpush1.bf16.msra.mxu0 0
        %1937 = vmatprep.subr.bf16.mxu0 0
        %1938 = vmatpush1.bf16.msra.mxu0 0
        %1939 = vmatprep.subr.bf16.mxu0 0
        %1940 = vmatpush1.bf16.msra.mxu0 0
        %1941 = vmatprep.subr.bf16.mxu0 0
        %1942 = vmatpush1.bf16.msra.mxu0 0
        %1943 = vmatprep.subr.bf16.mxu0 0
        %1944 = vmatpush1.bf16.msra.mxu0 0
        %1945 = vmatprep.subr.bf16.mxu0 0
        %1946 = vmatpush1.bf16.msra.mxu0 0
        %1947 = vmatprep.subr.bf16.mxu0 0
        %1948 = vmatpush1.bf16.msra.mxu0 0
        %1949 = vmatprep.subr.bf16.mxu0 0
        %1950 = vmatpush1.bf16.msra.mxu0 0
        %1951 = vmatprep.subr.bf16.mxu0 0
        %1952 = vmatpush1.bf16.msra.mxu0 0
        %1953 = vmatprep.subr.bf16.mxu0 0
        %1954 = vmatpush1.bf16.msra.mxu0 0
        %1955 = vmatprep.subr.bf16.mxu0 0
        %1956 = vmatpush1.bf16.msra.mxu0 0
        %1957 = vmatprep.subr.bf16.mxu0 0
        %1958 = vmatpush1.bf16.msra.mxu0 0
        %1959 = vmatprep.subr.bf16.mxu0 0
        %1960 = vmatpush1.bf16.msra.mxu0 0
        %1961 = vmatprep.subr.bf16.mxu0 0
        %1962 = vmatpush1.bf16.msra.mxu0 0
        %1963 = vmatprep.mubr.bf16.mxu0 0
        %1964 = vmatmul.mubr.bf16.gmra.mrb[0].mxu0 %v1908
        %v1965 = vpop.f32.mrb[0].mxu0
        %v1966 = vadd.f32 %v1833, %v1965
        %v1967 = vpop.f32.mrb[0].mxu0
        %v1968 = vpop.f32.mrb[0].mxu0
        %v1969 = vadd.f32 %v1836, %v1968
        %v1970 = vpop.f32.mrb[0].mxu0
        %1971 = vmatprep.mubr.bf16.mxu0 0
        %1972 = vmatmul.mubr.bf16.gmra.mrb[0].mxu0 %v1911
        %v1973 = vpop.f32.mrb[0].mxu0
        %v1974 = vadd.f32 %v1841, %v1973
        %v1975 = vpop.f32.mrb[0].mxu0
        %v1976 = vpop.f32.mrb[0].mxu0
        %v1977 = vadd.f32 %v1844, %v1976
        %v1978 = vpop.f32.mrb[0].mxu0
        %1979 = vmatprep.mubr.bf16.mxu0 0
        %1980 = vmatmul.mubr.bf16.gmra.mrb[0].mxu0 %v1914
        %v1981 = vpop.f32.mrb[0].mxu0
        %v1982 = vadd.f32 %v1849, %v1981
        %v1983 = vpop.f32.mrb[0].mxu0
        %v1984 = vpop.f32.mrb[0].mxu0
        %v1985 = vadd.f32 %v1852, %v1984
        %v1986 = vpop.f32.mrb[0].mxu0
        %1987 = vmatprep.mubr.bf16.mxu0 0
        %1988 = vmatmul.mubr.bf16.gmra.mrb[0].mxu0 %v1917
        %v1989 = vpop.f32.mrb[0].mxu0
        %v1990 = vadd.f32 %v1857, %v1989
        %v1991 = vpop.f32.mrb[0].mxu0
        %v1992 = vpop.f32.mrb[0].mxu0
        %v1993 = vadd.f32 %v1860, %v1992
        %v1994 = vpop.f32.mrb[0].mxu0
        %1995 = vmatprep.mubr.bf16.mxu0 0
        %1996 = vmatmul.mubr.bf16.gmra.mrb[0].mxu0 %v1920
        %v1997 = vpop.f32.mrb[0].mxu0
        %v1998 = vadd.f32 %v1865, %v1997
        %v1999 = vpop.f32.mrb[0].mxu0
        %v2000 = vpop.f32.mrb[0].mxu0
        %v2001 = vadd.f32 %v1868, %v2000
        %v2002 = vpop.f32.mrb[0].mxu0
        %2003 = vmatprep.mubr.bf16.mxu0 0
        %2004 = vmatmul.mubr.bf16.gmra.mrb[0].mxu0 %v1923
        %v2005 = vpop.f32.mrb[0].mxu0
        %v2006 = vadd.f32 %v1873, %v2005
        %v2007 = vpop.f32.mrb[0].mxu0
        %v2008 = vpop.f32.mrb[0].mxu0
        %v2009 = vadd.f32 %v1876, %v2008
        %v2010 = vpop.f32.mrb[0].mxu0
        %2011 = vmatprep.mubr.bf16.mxu0 0
        %2012 = vmatmul.mubr.bf16.gmra.mrb[0].mxu0 %v1926
        %v2013 = vpop.f32.mrb[0].mxu0
        %v2014 = vadd.f32 %v1881, %v2013
        %v2015 = vpop.f32.mrb[0].mxu0
        %v2016 = vpop.f32.mrb[0].mxu0
        %v2017 = vadd.f32 %v1884, %v2016
        %v2018 = vpop.f32.mrb[0].mxu0
        %2019 = vmatprep.mubr.bf16.mxu0 0
        %2020 = vmatmul.mubr.bf16.gmra.mrb[0].mxu0 %v1929
        %v2021 = vpop.f32.mrb[0].mxu0
        %v2022 = vadd.f32 %v1889, %v2021
        %v2023 = vpop.f32.mrb[0].mxu0
        %v2024 = vpop.f32.mrb[0].mxu0
        %v2025 = vadd.f32 %v1892, %v2024
        %v2026 = vpop.f32.mrb[0].mxu0
        %2027 = vdwg.mxu0
        %2028 = vrot.lane.b32.xlu0 %v853, 64
        %v2029 = vpop.permute.xlu0 %2028
        %2030 = vrot.lane.b32.xlu0 %v854, 64
        %v2031 = vpop.permute.xlu0 %2030
        %2032 = vrot.lane.b32.xlu0 %v855, 64
        %v2033 = vpop.permute.xlu0 %2032
        %2034 = vrot.lane.b32.xlu0 %v856, 64
        %v2035 = vpop.permute.xlu0 %2034
        %2036 = vrot.lane.b32.xlu0 %v857, 64
        %v2037 = vpop.permute.xlu0 %2036
        %2038 = vrot.lane.b32.xlu0 %v858, 64
        %v2039 = vpop.permute.xlu0 %2038
        %2040 = vrot.lane.b32.xlu0 %v859, 64
        %v2041 = vpop.permute.xlu0 %2040
        %2042 = vrot.lane.b32.xlu0 %v860, 64
        %v2043 = vpop.permute.xlu0 %2042
        %2044 = vrot.lane.b32.xlu0 %v861, 64
        %v2045 = vpop.permute.xlu0 %2044
        %2046 = vrot.lane.b32.xlu0 %v862, 64
        %v2047 = vpop.permute.xlu0 %2046
        %2048 = vrot.lane.b32.xlu0 %v863, 64
        %v2049 = vpop.permute.xlu0 %2048
        %2050 = vrot.lane.b32.xlu0 %v864, 64
        %v2051 = vpop.permute.xlu0 %2050
        %2052 = vrot.lane.b32.xlu0 %v865, 64
        %v2053 = vpop.permute.xlu0 %2052
        %2054 = vrot.lane.b32.xlu0 %v866, 64
        %v2055 = vpop.permute.xlu0 %2054
        %2056 = vrot.lane.b32.xlu0 %v867, 64
        %v2057 = vpop.permute.xlu0 %2056
        %2058 = vrot.lane.b32.xlu0 %v868, 64
        %v2059 = vpop.permute.xlu0 %2058
        %v2061 = vsel %vm877, %v2029, 0
        %v2064 = vsel %vm877, %v2031, 0
        %v2067 = vsel %vm877, %v2033, 0
        %v2070 = vsel %vm877, %v2035, 0
        %v2073 = vsel %vm877, %v2037, 0
        %v2076 = vsel %vm877, %v2039, 0
        %v2079 = vsel %vm877, %v2041, 0
        %v2082 = vsel %vm877, %v2043, 0
        %v2085 = vsel %vm877, %v2045, 0
        %v2088 = vsel %vm877, %v2047, 0
        %v2091 = vsel %vm877, %v2049, 0
        %v2094 = vsel %vm877, %v2051, 0
        %v2097 = vsel %vm877, %v2053, 0
        %v2100 = vsel %vm877, %v2055, 0
        %v2103 = vsel %vm877, %v2057, 0
        %v2106 = vsel %vm877, %v2059, 0
        %2108 = vmatprep.subr.bf16.mxu0 0
        %2109 = vmatpush1.bf16.xpose.msra.mxu0 %v2085
        %2110 = vmatprep.subr.bf16.mxu0 0
        %2111 = vmatpush1.bf16.xpose.msra.mxu0 %v2088
        %2112 = vmatprep.subr.bf16.mxu0 0
        %2113 = vmatpush1.bf16.xpose.msra.mxu0 %v2091
        %2114 = vmatprep.subr.bf16.mxu0 0
        %2115 = vmatpush1.bf16.xpose.msra.mxu0 %v2094
        %2116 = vmatprep.subr.bf16.mxu0 0
        %2117 = vmatpush1.bf16.xpose.msra.mxu0 %v2097
        %2118 = vmatprep.subr.bf16.mxu0 0
        %2119 = vmatpush1.bf16.xpose.msra.mxu0 %v2100
        %2120 = vmatprep.subr.bf16.mxu0 0
        %2121 = vmatpush1.bf16.xpose.msra.mxu0 %v2103
        %2122 = vmatprep.subr.bf16.mxu0 0
        %2123 = vmatpush1.bf16.xpose.msra.mxu0 %v2106
        %2124 = vmatprep.subr.bf16.mxu0 0
        %2125 = vmatpush1.bf16.xpose.msra.mxu0 0
        %2126 = vmatprep.subr.bf16.mxu0 0
        %2127 = vmatpush1.bf16.xpose.msra.mxu0 0
        %2128 = vmatprep.subr.bf16.mxu0 0
        %2129 = vmatpush1.bf16.xpose.msra.mxu0 0
        %2130 = vmatprep.subr.bf16.mxu0 0
        %2131 = vmatpush1.bf16.xpose.msra.mxu0 0
        %2132 = vmatprep.subr.bf16.mxu0 0
        %2133 = vmatpush1.bf16.xpose.msra.mxu0 0
        %2134 = vmatprep.subr.bf16.mxu0 0
        %2135 = vmatpush1.bf16.xpose.msra.mxu0 0
        %2136 = vmatprep.subr.bf16.mxu0 0
        %2137 = vmatpush1.bf16.xpose.msra.mxu0 0
        %2138 = vmatprep.subr.bf16.mxu0 0
        %2139 = vmatpush1.bf16.xpose.msra.mxu0 0
        %2140 = vmatprep.mubr.bf16.mxu0 0
        %2141 = vmatmul.mubr.bf16.gmra.mrb[0].mxu0 %v2061
        %v2142 = vpop.f32.mrb[0].mxu0
        %v2143 = vadd.f32 0.0, %v2142
        %v2144 = vpop.f32.mrb[0].mxu0
        %v2145 = vpop.f32.mrb[0].mxu0
        %v2146 = vadd.f32 0.0, %v2145
        %v2147 = vpop.f32.mrb[0].mxu0
        %2148 = vmatprep.mubr.bf16.mxu0 0
        %2149 = vmatmul.mubr.bf16.gmra.mrb[0].mxu0 %v2064
        %v2150 = vpop.f32.mrb[0].mxu0
        %v2151 = vadd.f32 0.0, %v2150
        %v2152 = vpop.f32.mrb[0].mxu0
        %v2153 = vpop.f32.mrb[0].mxu0
        %v2154 = vadd.f32 0.0, %v2153
        %v2155 = vpop.f32.mrb[0].mxu0
        %2156 = vmatprep.mubr.bf16.mxu0 0
        %2157 = vmatmul.mubr.bf16.gmra.mrb[0].mxu0 %v2067
        %v2158 = vpop.f32.mrb[0].mxu0
        %v2159 = vadd.f32 0.0, %v2158
        %v2160 = vpop.f32.mrb[0].mxu0
        %v2161 = vpop.f32.mrb[0].mxu0
        %v2162 = vadd.f32 0.0, %v2161
        %v2163 = vpop.f32.mrb[0].mxu0
        %2164 = vmatprep.mubr.bf16.mxu0 0
        %2165 = vmatmul.mubr.bf16.gmra.mrb[0].mxu0 %v2070
        %v2166 = vpop.f32.mrb[0].mxu0
        %v2167 = vadd.f32 0.0, %v2166
        %v2168 = vpop.f32.mrb[0].mxu0
        %v2169 = vpop.f32.mrb[0].mxu0
        %v2170 = vadd.f32 0.0, %v2169
        %v2171 = vpop.f32.mrb[0].mxu0
        %2172 = vmatprep.mubr.bf16.mxu0 0
        %2173 = vmatmul.mubr.bf16.gmra.mrb[0].mxu0 %v2073
        %v2174 = vpop.f32.mrb[0].mxu0
        %v2175 = vadd.f32 0.0, %v2174
        %v2176 = vpop.f32.mrb[0].mxu0
        %v2177 = vpop.f32.mrb[0].mxu0
        %v2178 = vadd.f32 0.0, %v2177
        %v2179 = vpop.f32.mrb[0].mxu0
        %2180 = vmatprep.mubr.bf16.mxu0 0
        %2181 = vmatmul.mubr.bf16.gmra.mrb[0].mxu0 %v2076
        %v2182 = vpop.f32.mrb[0].mxu0
        %v2183 = vadd.f32 0.0, %v2182
        %v2184 = vpop.f32.mrb[0].mxu0
        %v2185 = vpop.f32.mrb[0].mxu0
        %v2186 = vadd.f32 0.0, %v2185
        %v2187 = vpop.f32.mrb[0].mxu0
        %2188 = vmatprep.mubr.bf16.mxu0 0
        %2189 = vmatmul.mubr.bf16.gmra.mrb[0].mxu0 %v2079
        %v2190 = vpop.f32.mrb[0].mxu0
        %v2191 = vadd.f32 0.0, %v2190
        %v2192 = vpop.f32.mrb[0].mxu0
        %v2193 = vpop.f32.mrb[0].mxu0
        %v2194 = vadd.f32 0.0, %v2193
        %v2195 = vpop.f32.mrb[0].mxu0
        %2196 = vmatprep.mubr.bf16.mxu0 0
        %2197 = vmatmul.mubr.bf16.gmra.mrb[0].mxu0 %v2082
        %v2198 = vpop.f32.mrb[0].mxu0
        %v2199 = vadd.f32 0.0, %v2198
        %v2200 = vpop.f32.mrb[0].mxu0
        %v2201 = vpop.f32.mrb[0].mxu0
        %v2202 = vadd.f32 0.0, %v2201
        %v2203 = vpop.f32.mrb[0].mxu0
        %2204 = vdwg.mxu0
        %2205 = vmax.xlane.f32.xlu0 %v2143
        %v2206 = vpop.xlane.xlu0 %2205
        %2207 = vmax.xlane.f32.xlu0 %v2146
        %v2208 = vpop.xlane.xlu0 %2207
        %2209 = vmax.xlane.f32.xlu0 %v2151
        %v2210 = vpop.xlane.xlu0 %2209
        %2211 = vmax.xlane.f32.xlu0 %v2154
        %v2212 = vpop.xlane.xlu0 %2211
        %2213 = vmax.xlane.f32.xlu0 %v2159
        %v2214 = vpop.xlane.xlu0 %2213
        %2215 = vmax.xlane.f32.xlu0 %v2162
        %v2216 = vpop.xlane.xlu0 %2215
        %2217 = vmax.xlane.f32.xlu0 %v2167
        %v2218 = vpop.xlane.xlu0 %2217
        %2219 = vmax.xlane.f32.xlu0 %v2170
        %v2220 = vpop.xlane.xlu0 %2219
        %2221 = vmax.xlane.f32.xlu0 %v2175
        %v2222 = vpop.xlane.xlu0 %2221
        %2223 = vmax.xlane.f32.xlu0 %v2178
        %v2224 = vpop.xlane.xlu0 %2223
        %2225 = vmax.xlane.f32.xlu0 %v2183
        %v2226 = vpop.xlane.xlu0 %2225
        %2227 = vmax.xlane.f32.xlu0 %v2186
        %v2228 = vpop.xlane.xlu0 %2227
        %2229 = vmax.xlane.f32.xlu0 %v2191
        %v2230 = vpop.xlane.xlu0 %2229
        %2231 = vmax.xlane.f32.xlu0 %v2194
        %v2232 = vpop.xlane.xlu0 %2231
        %2233 = vmax.xlane.f32.xlu0 %v2199
        %v2234 = vpop.xlane.xlu0 %2233
        %2235 = vmax.xlane.f32.xlu0 %v2202
        %v2236 = vpop.xlane.xlu0 %2235
        %v2237 = vsub.f32 %v2143, %v2206
        %v2238 = vsub.f32 %v2146, %v2208
        %v2239 = vsub.f32 %v2151, %v2210
        %v2240 = vsub.f32 %v2154, %v2212
        %v2241 = vsub.f32 %v2159, %v2214
        %v2242 = vsub.f32 %v2162, %v2216
        %v2243 = vsub.f32 %v2167, %v2218
        %v2244 = vsub.f32 %v2170, %v2220
        %v2245 = vsub.f32 %v2175, %v2222
        %v2246 = vsub.f32 %v2178, %v2224
        %v2247 = vsub.f32 %v2183, %v2226
        %v2248 = vsub.f32 %v2186, %v2228
        %v2249 = vsub.f32 %v2191, %v2230
        %v2250 = vsub.f32 %v2194, %v2232
        %v2251 = vsub.f32 %v2199, %v2234
        %v2252 = vsub.f32 %v2202, %v2236
        %v2253 = vmul.f32 %v2237, 1.442695
        %v2254 = vpow.pop %v2253
        %v2255 = vmul.f32 %v2238, 1.442695
        %v2256 = vpow.pop %v2255
        %v2257 = vmul.f32 %v2239, 1.442695
        %v2258 = vpow.pop %v2257
        %v2259 = vmul.f32 %v2240, 1.442695
        %v2260 = vpow.pop %v2259
        %v2261 = vmul.f32 %v2241, 1.442695
        %v2262 = vpow.pop %v2261
        %v2263 = vmul.f32 %v2242, 1.442695
        %v2264 = vpow.pop %v2263
        %v2265 = vmul.f32 %v2243, 1.442695
        %v2266 = vpow.pop %v2265
        %v2267 = vmul.f32 %v2244, 1.442695
        %v2268 = vpow.pop %v2267
        %v2269 = vmul.f32 %v2245, 1.442695
        %v2270 = vpow.pop %v2269
        %v2271 = vmul.f32 %v2246, 1.442695
        %v2272 = vpow.pop %v2271
        %v2273 = vmul.f32 %v2247, 1.442695
        %v2274 = vpow.pop %v2273
        %v2275 = vmul.f32 %v2248, 1.442695
        %v2276 = vpow.pop %v2275
        %v2277 = vmul.f32 %v2249, 1.442695
        %v2278 = vpow.pop %v2277
        %v2279 = vmul.f32 %v2250, 1.442695
        %v2280 = vpow.pop %v2279
        %v2281 = vmul.f32 %v2251, 1.442695
        %v2282 = vpow.pop %v2281
        %v2283 = vmul.f32 %v2252, 1.442695
        %v2284 = vpow.pop %v2283
        %2285 = vadd.xlane.f32.xlu0 %v2254
        %v2286 = vpop.xlane.xlu0 %2285
        %2287 = vadd.xlane.f32.xlu0 %v2256
        %v2288 = vpop.xlane.xlu0 %2287
        %2289 = vadd.xlane.f32.xlu0 %v2258
        %v2290 = vpop.xlane.xlu0 %2289
        %2291 = vadd.xlane.f32.xlu0 %v2260
        %v2292 = vpop.xlane.xlu0 %2291
        %2293 = vadd.xlane.f32.xlu0 %v2262
        %v2294 = vpop.xlane.xlu0 %2293
        %2295 = vadd.xlane.f32.xlu0 %v2264
        %v2296 = vpop.xlane.xlu0 %2295
        %2297 = vadd.xlane.f32.xlu0 %v2266
        %v2298 = vpop.xlane.xlu0 %2297
        %2299 = vadd.xlane.f32.xlu0 %v2268
        %v2300 = vpop.xlane.xlu0 %2299
        %2301 = vadd.xlane.f32.xlu0 %v2270
        %v2302 = vpop.xlane.xlu0 %2301
        %2303 = vadd.xlane.f32.xlu0 %v2272
        %v2304 = vpop.xlane.xlu0 %2303
        %2305 = vadd.xlane.f32.xlu0 %v2274
        %v2306 = vpop.xlane.xlu0 %2305
        %2307 = vadd.xlane.f32.xlu0 %v2276
        %v2308 = vpop.xlane.xlu0 %2307
        %2309 = vadd.xlane.f32.xlu0 %v2278
        %v2310 = vpop.xlane.xlu0 %2309
        %2311 = vadd.xlane.f32.xlu0 %v2280
        %v2312 = vpop.xlane.xlu0 %2311
        %2313 = vadd.xlane.f32.xlu0 %v2282
        %v2314 = vpop.xlane.xlu0 %2313
        %2315 = vadd.xlane.f32.xlu0 %v2284
        %v2316 = vpop.xlane.xlu0 %2315
        %v2317 = vpack.c.bf16 %v2256, %v2254
        %v2318 = vpack.c.bf16 %v2260, %v2258
        %v2319 = vpack.c.bf16 %v2264, %v2262
        %v2320 = vpack.c.bf16 %v2268, %v2266
        %v2321 = vpack.c.bf16 %v2272, %v2270
        %v2322 = vpack.c.bf16 %v2276, %v2274
        %v2323 = vpack.c.bf16 %v2280, %v2278
        %v2324 = vpack.c.bf16 %v2284, %v2282
        %2325 = vrot.lane.b32.xlu0 %v869, 64
        %v2326 = vpop.permute.xlu0 %2325
        %2327 = vrot.lane.b32.xlu0 %v870, 64
        %v2328 = vpop.permute.xlu0 %2327
        %2329 = vrot.lane.b32.xlu0 %v871, 64
        %v2330 = vpop.permute.xlu0 %2329
        %2331 = vrot.lane.b32.xlu0 %v872, 64
        %v2332 = vpop.permute.xlu0 %2331
        %2333 = vrot.lane.b32.xlu0 %v873, 64
        %v2334 = vpop.permute.xlu0 %2333
        %2335 = vrot.lane.b32.xlu0 %v874, 64
        %v2336 = vpop.permute.xlu0 %2335
        %2337 = vrot.lane.b32.xlu0 %v875, 64
        %v2338 = vpop.permute.xlu0 %2337
        %2339 = vrot.lane.b32.xlu0 %v876, 64
        %v2340 = vpop.permute.xlu0 %2339
        %2349 = vmatprep.subr.bf16.mxu0 0
        %2350 = vmatpush1.bf16.msra.mxu0 %v2326
        %2351 = vmatprep.subr.bf16.mxu0 0
        %2352 = vmatpush1.bf16.msra.mxu0 %v2328
        %2353 = vmatprep.subr.bf16.mxu0 0
        %2354 = vmatpush1.bf16.msra.mxu0 %v2330
        %2355 = vmatprep.subr.bf16.mxu0 0
        %2356 = vmatpush1.bf16.msra.mxu0 %v2332
        %2357 = vmatprep.subr.bf16.mxu0 0
        %2358 = vmatpush1.bf16.msra.mxu0 %v2334
        %2359 = vmatprep.subr.bf16.mxu0 0
        %2360 = vmatpush1.bf16.msra.mxu0 %v2336
        %2361 = vmatprep.subr.bf16.mxu0 0
        %2362 = vmatpush1.bf16.msra.mxu0 %v2338
        %2363 = vmatprep.subr.bf16.mxu0 0
        %2364 = vmatpush1.bf16.msra.mxu0 %v2340
        %2365 = vmatprep.subr.bf16.mxu0 0
        %2366 = vmatpush1.bf16.msra.mxu0 0
        %2367 = vmatprep.subr.bf16.mxu0 0
        %2368 = vmatpush1.bf16.msra.mxu0 0
        %2369 = vmatprep.subr.bf16.mxu0 0
        %2370 = vmatpush1.bf16.msra.mxu0 0
        %2371 = vmatprep.subr.bf16.mxu0 0
        %2372 = vmatpush1.bf16.msra.mxu0 0
        %2373 = vmatprep.subr.bf16.mxu0 0
        %2374 = vmatpush1.bf16.msra.mxu0 0
        %2375 = vmatprep.subr.bf16.mxu0 0
        %2376 = vmatpush1.bf16.msra.mxu0 0
        %2377 = vmatprep.subr.bf16.mxu0 0
        %2378 = vmatpush1.bf16.msra.mxu0 0
        %2379 = vmatprep.subr.bf16.mxu0 0
        %2380 = vmatpush1.bf16.msra.mxu0 0
        %2381 = vmatprep.mubr.bf16.mxu0 0
        %2382 = vmatmul.mubr.bf16.gmra.mrb[0].mxu0 %v2317
        %v2383 = vpop.f32.mrb[0].mxu0
        %v2384 = vadd.f32 0.0, %v2383
        %v2385 = vpop.f32.mrb[0].mxu0
        %v2386 = vpop.f32.mrb[0].mxu0
        %v2387 = vadd.f32 0.0, %v2386
        %v2388 = vpop.f32.mrb[0].mxu0
        %2389 = vmatprep.mubr.bf16.mxu0 0
        %2390 = vmatmul.mubr.bf16.gmra.mrb[0].mxu0 %v2318
        %v2391 = vpop.f32.mrb[0].mxu0
        %v2392 = vadd.f32 0.0, %v2391
        %v2393 = vpop.f32.mrb[0].mxu0
        %v2394 = vpop.f32.mrb[0].mxu0
        %v2395 = vadd.f32 0.0, %v2394
        %v2396 = vpop.f32.mrb[0].mxu0
        %2397 = vmatprep.mubr.bf16.mxu0 0
        %2398 = vmatmul.mubr.bf16.gmra.mrb[0].mxu0 %v2319
        %v2399 = vpop.f32.mrb[0].mxu0
        %v2400 = vadd.f32 0.0, %v2399
        %v2401 = vpop.f32.mrb[0].mxu0
        %v2402 = vpop.f32.mrb[0].mxu0
        %v2403 = vadd.f32 0.0, %v2402
        %v2404 = vpop.f32.mrb[0].mxu0
        %2405 = vmatprep.mubr.bf16.mxu0 0
        %2406 = vmatmul.mubr.bf16.gmra.mrb[0].mxu0 %v2320
        %v2407 = vpop.f32.mrb[0].mxu0
        %v2408 = vadd.f32 0.0, %v2407
        %v2409 = vpop.f32.mrb[0].mxu0
        %v2410 = vpop.f32.mrb[0].mxu0
        %v2411 = vadd.f32 0.0, %v2410
        %v2412 = vpop.f32.mrb[0].mxu0
        %2413 = vmatprep.mubr.bf16.mxu0 0
        %2414 = vmatmul.mubr.bf16.gmra.mrb[0].mxu0 %v2321
        %v2415 = vpop.f32.mrb[0].mxu0
        %v2416 = vadd.f32 0.0, %v2415
        %v2417 = vpop.f32.mrb[0].mxu0
        %v2418 = vpop.f32.mrb[0].mxu0
        %v2419 = vadd.f32 0.0, %v2418
        %v2420 = vpop.f32.mrb[0].mxu0
        %2421 = vmatprep.mubr.bf16.mxu0 0
        %2422 = vmatmul.mubr.bf16.gmra.mrb[0].mxu0 %v2322
        %v2423 = vpop.f32.mrb[0].mxu0
        %v2424 = vadd.f32 0.0, %v2423
        %v2425 = vpop.f32.mrb[0].mxu0
        %v2426 = vpop.f32.mrb[0].mxu0
        %v2427 = vadd.f32 0.0, %v2426
        %v2428 = vpop.f32.mrb[0].mxu0
        %2429 = vmatprep.mubr.bf16.mxu0 0
        %2430 = vmatmul.mubr.bf16.gmra.mrb[0].mxu0 %v2323
        %v2431 = vpop.f32.mrb[0].mxu0
        %v2432 = vadd.f32 0.0, %v2431
        %v2433 = vpop.f32.mrb[0].mxu0
        %v2434 = vpop.f32.mrb[0].mxu0
        %v2435 = vadd.f32 0.0, %v2434
        %v2436 = vpop.f32.mrb[0].mxu0
        %2437 = vmatprep.mubr.bf16.mxu0 0
        %2438 = vmatmul.mubr.bf16.gmra.mrb[0].mxu0 %v2324
        %v2439 = vpop.f32.mrb[0].mxu0
        %v2440 = vadd.f32 0.0, %v2439
        %v2441 = vpop.f32.mrb[0].mxu0
        %v2442 = vpop.f32.mrb[0].mxu0
        %v2443 = vadd.f32 0.0, %v2442
        %v2444 = vpop.f32.mrb[0].mxu0
        %2445 = vdwg.mxu0
        %v2446 = vrcp.pop %v2286
        %v2447 = vrcp.pop %v2288
        %v2448 = vrcp.pop %v2290
        %v2449 = vrcp.pop %v2292
        %v2450 = vrcp.pop %v2294
        %v2451 = vrcp.pop %v2296
        %v2452 = vrcp.pop %v2298
        %v2453 = vrcp.pop %v2300
        %v2454 = vrcp.pop %v2302
        %v2455 = vrcp.pop %v2304
        %v2456 = vrcp.pop %v2306
        %v2457 = vrcp.pop %v2308
        %v2458 = vrcp.pop %v2310
        %v2459 = vrcp.pop %v2312
        %v2460 = vrcp.pop %v2314
        %v2461 = vrcp.pop %v2316
        %v2462 = vmul.f32 %v2384, %v2446
        %v2463 = vmul.f32 %v2387, %v2447
        %v2464 = vmul.f32 %v2392, %v2448
        %v2465 = vmul.f32 %v2395, %v2449
        %v2466 = vmul.f32 %v2400, %v2450
        %v2467 = vmul.f32 %v2403, %v2451
        %v2468 = vmul.f32 %v2408, %v2452
        %v2469 = vmul.f32 %v2411, %v2453
        %v2470 = vmul.f32 %v2416, %v2454
        %v2471 = vmul.f32 %v2419, %v2455
        %v2472 = vmul.f32 %v2424, %v2456
        %v2473 = vmul.f32 %v2427, %v2457
        %v2474 = vmul.f32 %v2432, %v2458
        %v2475 = vmul.f32 %v2435, %v2459
        %v2476 = vmul.f32 %v2440, %v2460
        %v2477 = vmul.f32 %v2443, %v2461
        %v2478 = vpack.c.bf16 %v2463, %v2462
        %v2479 = vpack.c.bf16 %v2465, %v2464
        %v2480 = vpack.c.bf16 %v2467, %v2466
        %v2481 = vpack.c.bf16 %v2469, %v2468
        %v2482 = vpack.c.bf16 %v2471, %v2470
        %v2483 = vpack.c.bf16 %v2473, %v2472
        %v2484 = vpack.c.bf16 %v2475, %v2474
        %v2485 = vpack.c.bf16 %v2477, %v2476
        %v2490 = vunpack.c.l.b16 %v829
        %v2491 = vunpack.c.l.b16 %v830
        %v2492 = vunpack.c.l.b16 %v831
        %v2493 = vunpack.c.l.b16 %v832
        %v2494 = vpack.c.b16 %v2491, %v2490
        %v2495 = vpack.c.b16 %v2493, %v2492
        %v2499 = vsel %vm877, %v2478, 0
        %v2502 = vsel %vm877, %v2479, 0
        %v2505 = vsel %vm877, %v2480, 0
        %v2508 = vsel %vm877, %v2481, 0
        %v2511 = vsel %vm877, %v2482, 0
        %v2514 = vsel %vm877, %v2483, 0
        %v2517 = vsel %vm877, %v2484, 0
        %v2520 = vsel %vm877, %v2485, 0
        %2522 = vmatprep.subr.bf16.mxu0 0
        %2523 = vmatpush1.bf16.msra.mxu0 %v2494
        %2524 = vmatprep.subr.bf16.mxu0 0
        %2525 = vmatpush1.bf16.msra.mxu0 %v2495
        %2526 = vmatprep.subr.bf16.mxu0 0
        %2527 = vmatpush1.bf16.msra.mxu0 0
        %2528 = vmatprep.subr.bf16.mxu0 0
        %2529 = vmatpush1.bf16.msra.mxu0 0
        %2530 = vmatprep.subr.bf16.mxu0 0
        %2531 = vmatpush1.bf16.msra.mxu0 0
        %2532 = vmatprep.subr.bf16.mxu0 0
        %2533 = vmatpush1.bf16.msra.mxu0 0
        %2534 = vmatprep.subr.bf16.mxu0 0
        %2535 = vmatpush1.bf16.msra.mxu0 0
        %2536 = vmatprep.subr.bf16.mxu0 0
        %2537 = vmatpush1.bf16.msra.mxu0 0
        %2538 = vmatprep.subr.bf16.mxu0 0
        %2539 = vmatpush1.bf16.msra.mxu0 0
        %2540 = vmatprep.subr.bf16.mxu0 0
        %2541 = vmatpush1.bf16.msra.mxu0 0
        %2542 = vmatprep.subr.bf16.mxu0 0
        %2543 = vmatpush1.bf16.msra.mxu0 0
        %2544 = vmatprep.subr.bf16.mxu0 0
        %2545 = vmatpush1.bf16.msra.mxu0 0
        %2546 = vmatprep.subr.bf16.mxu0 0
        %2547 = vmatpush1.bf16.msra.mxu0 0
        %2548 = vmatprep.subr.bf16.mxu0 0
        %2549 = vmatpush1.bf16.msra.mxu0 0
        %2550 = vmatprep.subr.bf16.mxu0 0
        %2551 = vmatpush1.bf16.msra.mxu0 0
        %2552 = vmatprep.subr.bf16.mxu0 0
        %2553 = vmatpush1.bf16.msra.mxu0 0
        %2554 = vmatprep.mubr.bf16.mxu0 0
        %2555 = vmatmul.mubr.bf16.gmra.mrb[0].mxu0 %v2499
        %v2556 = vpop.f32.mrb[0].mxu0
        %v2557 = vadd.f32 0.0, %v2556
        %v2558 = vpop.f32.mrb[0].mxu0
        %v2559 = vpop.f32.mrb[0].mxu0
        %v2560 = vadd.f32 0.0, %v2559
        %v2561 = vpop.f32.mrb[0].mxu0
        %2562 = vmatprep.mubr.bf16.mxu0 0
        %2563 = vmatmul.mubr.bf16.gmra.mrb[0].mxu0 %v2502
        %v2564 = vpop.f32.mrb[0].mxu0
        %v2565 = vadd.f32 0.0, %v2564
        %v2566 = vpop.f32.mrb[0].mxu0
        %v2567 = vpop.f32.mrb[0].mxu0
        %v2568 = vadd.f32 0.0, %v2567
        %v2569 = vpop.f32.mrb[0].mxu0
        %2570 = vmatprep.mubr.bf16.mxu0 0
        %2571 = vmatmul.mubr.bf16.gmra.mrb[0].mxu0 %v2505
        %v2572 = vpop.f32.mrb[0].mxu0
        %v2573 = vadd.f32 0.0, %v2572
        %v2574 = vpop.f32.mrb[0].mxu0
        %v2575 = vpop.f32.mrb[0].mxu0
        %v2576 = vadd.f32 0.0, %v2575
        %v2577 = vpop.f32.mrb[0].mxu0
        %2578 = vmatprep.mubr.bf16.mxu0 0
        %2579 = vmatmul.mubr.bf16.gmra.mrb[0].mxu0 %v2508
        %v2580 = vpop.f32.mrb[0].mxu0
        %v2581 = vadd.f32 0.0, %v2580
        %v2582 = vpop.f32.mrb[0].mxu0
        %v2583 = vpop.f32.mrb[0].mxu0
        %v2584 = vadd.f32 0.0, %v2583
        %v2585 = vpop.f32.mrb[0].mxu0
        %2586 = vmatprep.mubr.bf16.mxu0 0
        %2587 = vmatmul.mubr.bf16.gmra.mrb[0].mxu0 %v2511
        %v2588 = vpop.f32.mrb[0].mxu0
        %v2589 = vadd.f32 0.0, %v2588
        %v2590 = vpop.f32.mrb[0].mxu0
        %v2591 = vpop.f32.mrb[0].mxu0
        %v2592 = vadd.f32 0.0, %v2591
        %v2593 = vpop.f32.mrb[0].mxu0
        %2594 = vmatprep.mubr.bf16.mxu0 0
        %2595 = vmatmul.mubr.bf16.gmra.mrb[0].mxu0 %v2514
        %v2596 = vpop.f32.mrb[0].mxu0
        %v2597 = vadd.f32 0.0, %v2596
        %v2598 = vpop.f32.mrb[0].mxu0
        %v2599 = vpop.f32.mrb[0].mxu0
        %v2600 = vadd.f32 0.0, %v2599
        %v2601 = vpop.f32.mrb[0].mxu0
        %2602 = vmatprep.mubr.bf16.mxu0 0
        %2603 = vmatmul.mubr.bf16.gmra.mrb[0].mxu0 %v2517
        %v2604 = vpop.f32.mrb[0].mxu0
        %v2605 = vadd.f32 0.0, %v2604
        %v2606 = vpop.f32.mrb[0].mxu0
        %v2607 = vpop.f32.mrb[0].mxu0
        %v2608 = vadd.f32 0.0, %v2607
        %v2609 = vpop.f32.mrb[0].mxu0
        %2610 = vmatprep.mubr.bf16.mxu0 0
        %2611 = vmatmul.mubr.bf16.gmra.mrb[0].mxu0 %v2520
        %v2612 = vpop.f32.mrb[0].mxu0
        %v2613 = vadd.f32 0.0, %v2612
        %v2614 = vpop.f32.mrb[0].mxu0
        %v2615 = vpop.f32.mrb[0].mxu0
        %v2616 = vadd.f32 0.0, %v2615
        %v2617 = vpop.f32.mrb[0].mxu0
        %2618 = vdwg.mxu0
        %v2619 = vadd.f32 %v1966, %v2557
        %v2620 = vadd.f32 %v1969, %v2560
        %v2621 = vadd.f32 %v1974, %v2565
        %v2622 = vadd.f32 %v1977, %v2568
        %v2623 = vadd.f32 %v1982, %v2573
        %v2624 = vadd.f32 %v1985, %v2576
        %v2625 = vadd.f32 %v1990, %v2581
        %v2626 = vadd.f32 %v1993, %v2584
        %v2627 = vadd.f32 %v1998, %v2589
        %v2628 = vadd.f32 %v2001, %v2592
        %v2629 = vadd.f32 %v2006, %v2597
        %v2630 = vadd.f32 %v2009, %v2600
        %v2631 = vadd.f32 %v2014, %v2605
        %v2632 = vadd.f32 %v2017, %v2608
        %v2633 = vadd.f32 %v2022, %v2613
        %v2634 = vadd.f32 %v2025, %v2616
        %2635 = vrot.lane.b32.xlu0 %v853, 32
        %v2636 = vpop.permute.xlu0 %2635
        %2637 = vrot.lane.b32.xlu0 %v854, 32
        %v2638 = vpop.permute.xlu0 %2637
        %2639 = vrot.lane.b32.xlu0 %v855, 32
        %v2640 = vpop.permute.xlu0 %2639
        %2641 = vrot.lane.b32.xlu0 %v856, 32
        %v2642 = vpop.permute.xlu0 %2641
        %2643 = vrot.lane.b32.xlu0 %v857, 32
        %v2644 = vpop.permute.xlu0 %2643
        %2645 = vrot.lane.b32.xlu0 %v858, 32
        %v2646 = vpop.permute.xlu0 %2645
        %2647 = vrot.lane.b32.xlu0 %v859, 32
        %v2648 = vpop.permute.xlu0 %2647
        %2649 = vrot.lane.b32.xlu0 %v860, 32
        %v2650 = vpop.permute.xlu0 %2649
        %2651 = vrot.lane.b32.xlu0 %v861, 32
        %v2652 = vpop.permute.xlu0 %2651
        %2653 = vrot.lane.b32.xlu0 %v862, 32
        %v2654 = vpop.permute.xlu0 %2653
        %2655 = vrot.lane.b32.xlu0 %v863, 32
        %v2656 = vpop.permute.xlu0 %2655
        %2657 = vrot.lane.b32.xlu0 %v864, 32
        %v2658 = vpop.permute.xlu0 %2657
        %2659 = vrot.lane.b32.xlu0 %v865, 32
        %v2660 = vpop.permute.xlu0 %2659
        %2661 = vrot.lane.b32.xlu0 %v866, 32
        %v2662 = vpop.permute.xlu0 %2661
        %2663 = vrot.lane.b32.xlu0 %v867, 32
        %v2664 = vpop.permute.xlu0 %2663
        %2665 = vrot.lane.b32.xlu0 %v868, 32
        %v2666 = vpop.permute.xlu0 %2665
        %v2668 = vsel %vm877, %v2636, 0
        %v2671 = vsel %vm877, %v2638, 0
        %v2674 = vsel %vm877, %v2640, 0
        %v2677 = vsel %vm877, %v2642, 0
        %v2680 = vsel %vm877, %v2644, 0
        %v2683 = vsel %vm877, %v2646, 0
        %v2686 = vsel %vm877, %v2648, 0
        %v2689 = vsel %vm877, %v2650, 0
        %v2692 = vsel %vm877, %v2652, 0
        %v2695 = vsel %vm877, %v2654, 0
        %v2698 = vsel %vm877, %v2656, 0
        %v2701 = vsel %vm877, %v2658, 0
        %v2704 = vsel %vm877, %v2660, 0
        %v2707 = vsel %vm877, %v2662, 0
        %v2710 = vsel %vm877, %v2664, 0
        %v2713 = vsel %vm877, %v2666, 0
        %2715 = vmatprep.subr.bf16.mxu0 0
        %2716 = vmatpush1.bf16.xpose.msra.mxu0 %v2692
        %2717 = vmatprep.subr.bf16.mxu0 0
        %2718 = vmatpush1.bf16.xpose.msra.mxu0 %v2695
        %2719 = vmatprep.subr.bf16.mxu0 0
        %2720 = vmatpush1.bf16.xpose.msra.mxu0 %v2698
        %2721 = vmatprep.subr.bf16.mxu0 0
        %2722 = vmatpush1.bf16.xpose.msra.mxu0 %v2701
        %2723 = vmatprep.subr.bf16.mxu0 0
        %2724 = vmatpush1.bf16.xpose.msra.mxu0 %v2704
        %2725 = vmatprep.subr.bf16.mxu0 0
        %2726 = vmatpush1.bf16.xpose.msra.mxu0 %v2707
        %2727 = vmatprep.subr.bf16.mxu0 0
        %2728 = vmatpush1.bf16.xpose.msra.mxu0 %v2710
        %2729 = vmatprep.subr.bf16.mxu0 0
        %2730 = vmatpush1.bf16.xpose.msra.mxu0 %v2713
        %2731 = vmatprep.subr.bf16.mxu0 0
        %2732 = vmatpush1.bf16.xpose.msra.mxu0 0
        %2733 = vmatprep.subr.bf16.mxu0 0
        %2734 = vmatpush1.bf16.xpose.msra.mxu0 0
        %2735 = vmatprep.subr.bf16.mxu0 0
        %2736 = vmatpush1.bf16.xpose.msra.mxu0 0
        %2737 = vmatprep.subr.bf16.mxu0 0
        %2738 = vmatpush1.bf16.xpose.msra.mxu0 0
        %2739 = vmatprep.subr.bf16.mxu0 0
        %2740 = vmatpush1.bf16.xpose.msra.mxu0 0
        %2741 = vmatprep.subr.bf16.mxu0 0
        %2742 = vmatpush1.bf16.xpose.msra.mxu0 0
        %2743 = vmatprep.subr.bf16.mxu0 0
        %2744 = vmatpush1.bf16.xpose.msra.mxu0 0
        %2745 = vmatprep.subr.bf16.mxu0 0
        %2746 = vmatpush1.bf16.xpose.msra.mxu0 0
        %2747 = vmatprep.mubr.bf16.mxu0 0
        %2748 = vmatmul.mubr.bf16.gmra.mrb[0].mxu0 %v2668
        %v2749 = vpop.f32.mrb[0].mxu0
        %v2750 = vadd.f32 0.0, %v2749
        %v2751 = vpop.f32.mrb[0].mxu0
        %v2752 = vpop.f32.mrb[0].mxu0
        %v2753 = vadd.f32 0.0, %v2752
        %v2754 = vpop.f32.mrb[0].mxu0
        %2755 = vmatprep.mubr.bf16.mxu0 0
        %2756 = vmatmul.mubr.bf16.gmra.mrb[0].mxu0 %v2671
        %v2757 = vpop.f32.mrb[0].mxu0
        %v2758 = vadd.f32 0.0, %v2757
        %v2759 = vpop.f32.mrb[0].mxu0
        %v2760 = vpop.f32.mrb[0].mxu0
        %v2761 = vadd.f32 0.0, %v2760
        %v2762 = vpop.f32.mrb[0].mxu0
        %2763 = vmatprep.mubr.bf16.mxu0 0
        %2764 = vmatmul.mubr.bf16.gmra.mrb[0].mxu0 %v2674
        %v2765 = vpop.f32.mrb[0].mxu0
        %v2766 = vadd.f32 0.0, %v2765
        %v2767 = vpop.f32.mrb[0].mxu0
        %v2768 = vpop.f32.mrb[0].mxu0
        %v2769 = vadd.f32 0.0, %v2768
        %v2770 = vpop.f32.mrb[0].mxu0
        %2771 = vmatprep.mubr.bf16.mxu0 0
        %2772 = vmatmul.mubr.bf16.gmra.mrb[0].mxu0 %v2677
        %v2773 = vpop.f32.mrb[0].mxu0
        %v2774 = vadd.f32 0.0, %v2773
        %v2775 = vpop.f32.mrb[0].mxu0
        %v2776 = vpop.f32.mrb[0].mxu0
        %v2777 = vadd.f32 0.0, %v2776
        %v2778 = vpop.f32.mrb[0].mxu0
        %2779 = vmatprep.mubr.bf16.mxu0 0
        %2780 = vmatmul.mubr.bf16.gmra.mrb[0].mxu0 %v2680
        %v2781 = vpop.f32.mrb[0].mxu0
        %v2782 = vadd.f32 0.0, %v2781
        %v2783 = vpop.f32.mrb[0].mxu0
        %v2784 = vpop.f32.mrb[0].mxu0
        %v2785 = vadd.f32 0.0, %v2784
        %v2786 = vpop.f32.mrb[0].mxu0
        %2787 = vmatprep.mubr.bf16.mxu0 0
        %2788 = vmatmul.mubr.bf16.gmra.mrb[0].mxu0 %v2683
        %v2789 = vpop.f32.mrb[0].mxu0
        %v2790 = vadd.f32 0.0, %v2789
        %v2791 = vpop.f32.mrb[0].mxu0
        %v2792 = vpop.f32.mrb[0].mxu0
        %v2793 = vadd.f32 0.0, %v2792
        %v2794 = vpop.f32.mrb[0].mxu0
        %2795 = vmatprep.mubr.bf16.mxu0 0
        %2796 = vmatmul.mubr.bf16.gmra.mrb[0].mxu0 %v2686
        %v2797 = vpop.f32.mrb[0].mxu0
        %v2798 = vadd.f32 0.0, %v2797
        %v2799 = vpop.f32.mrb[0].mxu0
        %v2800 = vpop.f32.mrb[0].mxu0
        %v2801 = vadd.f32 0.0, %v2800
        %v2802 = vpop.f32.mrb[0].mxu0
        %2803 = vmatprep.mubr.bf16.mxu0 0
        %2804 = vmatmul.mubr.bf16.gmra.mrb[0].mxu0 %v2689
        %v2805 = vpop.f32.mrb[0].mxu0
        %v2806 = vadd.f32 0.0, %v2805
        %v2807 = vpop.f32.mrb[0].mxu0
        %v2808 = vpop.f32.mrb[0].mxu0
        %v2809 = vadd.f32 0.0, %v2808
        %v2810 = vpop.f32.mrb[0].mxu0
        %2811 = vdwg.mxu0
        %2812 = vmax.xlane.f32.xlu0 %v2750
        %v2813 = vpop.xlane.xlu0 %2812
        %2814 = vmax.xlane.f32.xlu0 %v2753
        %v2815 = vpop.xlane.xlu0 %2814
        %2816 = vmax.xlane.f32.xlu0 %v2758
        %v2817 = vpop.xlane.xlu0 %2816
        %2818 = vmax.xlane.f32.xlu0 %v2761
        %v2819 = vpop.xlane.xlu0 %2818
        %2820 = vmax.xlane.f32.xlu0 %v2766
        %v2821 = vpop.xlane.xlu0 %2820
        %2822 = vmax.xlane.f32.xlu0 %v2769
        %v2823 = vpop.xlane.xlu0 %2822
        %2824 = vmax.xlane.f32.xlu0 %v2774
        %v2825 = vpop.xlane.xlu0 %2824
        %2826 = vmax.xlane.f32.xlu0 %v2777
        %v2827 = vpop.xlane.xlu0 %2826
        %2828 = vmax.xlane.f32.xlu0 %v2782
        %v2829 = vpop.xlane.xlu0 %2828
        %2830 = vmax.xlane.f32.xlu0 %v2785
        %v2831 = vpop.xlane.xlu0 %2830
        %2832 = vmax.xlane.f32.xlu0 %v2790
        %v2833 = vpop.xlane.xlu0 %2832
        %2834 = vmax.xlane.f32.xlu0 %v2793
        %v2835 = vpop.xlane.xlu0 %2834
        %2836 = vmax.xlane.f32.xlu0 %v2798
        %v2837 = vpop.xlane.xlu0 %2836
        %2838 = vmax.xlane.f32.xlu0 %v2801
        %v2839 = vpop.xlane.xlu0 %2838
        %2840 = vmax.xlane.f32.xlu0 %v2806
        %v2841 = vpop.xlane.xlu0 %2840
        %2842 = vmax.xlane.f32.xlu0 %v2809
        %v2843 = vpop.xlane.xlu0 %2842
        %v2844 = vsub.f32 %v2750, %v2813
        %v2845 = vsub.f32 %v2753, %v2815
        %v2846 = vsub.f32 %v2758, %v2817
        %v2847 = vsub.f32 %v2761, %v2819
        %v2848 = vsub.f32 %v2766, %v2821
        %v2849 = vsub.f32 %v2769, %v2823
        %v2850 = vsub.f32 %v2774, %v2825
        %v2851 = vsub.f32 %v2777, %v2827
        %v2852 = vsub.f32 %v2782, %v2829
        %v2853 = vsub.f32 %v2785, %v2831
        %v2854 = vsub.f32 %v2790, %v2833
        %v2855 = vsub.f32 %v2793, %v2835
        %v2856 = vsub.f32 %v2798, %v2837
        %v2857 = vsub.f32 %v2801, %v2839
        %v2858 = vsub.f32 %v2806, %v2841
        %v2859 = vsub.f32 %v2809, %v2843
        %v2860 = vmul.f32 %v2844, 1.442695
        %v2861 = vpow.pop %v2860
        %v2862 = vmul.f32 %v2845, 1.442695
        %v2863 = vpow.pop %v2862
        %v2864 = vmul.f32 %v2846, 1.442695
        %v2865 = vpow.pop %v2864
        %v2866 = vmul.f32 %v2847, 1.442695
        %v2867 = vpow.pop %v2866
        %v2868 = vmul.f32 %v2848, 1.442695
        %v2869 = vpow.pop %v2868
        %v2870 = vmul.f32 %v2849, 1.442695
        %v2871 = vpow.pop %v2870
        %v2872 = vmul.f32 %v2850, 1.442695
        %v2873 = vpow.pop %v2872
        %v2874 = vmul.f32 %v2851, 1.442695
        %v2875 = vpow.pop %v2874
        %v2876 = vmul.f32 %v2852, 1.442695
        %v2877 = vpow.pop %v2876
        %v2878 = vmul.f32 %v2853, 1.442695
        %v2879 = vpow.pop %v2878
        %v2880 = vmul.f32 %v2854, 1.442695
        %v2881 = vpow.pop %v2880
        %v2882 = vmul.f32 %v2855, 1.442695
        %v2883 = vpow.pop %v2882
        %v2884 = vmul.f32 %v2856, 1.442695
        %v2885 = vpow.pop %v2884
        %v2886 = vmul.f32 %v2857, 1.442695
        %v2887 = vpow.pop %v2886
        %v2888 = vmul.f32 %v2858, 1.442695
        %v2889 = vpow.pop %v2888
        %v2890 = vmul.f32 %v2859, 1.442695
        %v2891 = vpow.pop %v2890
        %2892 = vadd.xlane.f32.xlu0 %v2861
        %v2893 = vpop.xlane.xlu0 %2892
        %2894 = vadd.xlane.f32.xlu0 %v2863
        %v2895 = vpop.xlane.xlu0 %2894
        %2896 = vadd.xlane.f32.xlu0 %v2865
        %v2897 = vpop.xlane.xlu0 %2896
        %2898 = vadd.xlane.f32.xlu0 %v2867
        %v2899 = vpop.xlane.xlu0 %2898
        %2900 = vadd.xlane.f32.xlu0 %v2869
        %v2901 = vpop.xlane.xlu0 %2900
        %2902 = vadd.xlane.f32.xlu0 %v2871
        %v2903 = vpop.xlane.xlu0 %2902
        %2904 = vadd.xlane.f32.xlu0 %v2873
        %v2905 = vpop.xlane.xlu0 %2904
        %2906 = vadd.xlane.f32.xlu0 %v2875
        %v2907 = vpop.xlane.xlu0 %2906
        %2908 = vadd.xlane.f32.xlu0 %v2877
        %v2909 = vpop.xlane.xlu0 %2908
        %2910 = vadd.xlane.f32.xlu0 %v2879
        %v2911 = vpop.xlane.xlu0 %2910
        %2912 = vadd.xlane.f32.xlu0 %v2881
        %v2913 = vpop.xlane.xlu0 %2912
        %2914 = vadd.xlane.f32.xlu0 %v2883
        %v2915 = vpop.xlane.xlu0 %2914
        %2916 = vadd.xlane.f32.xlu0 %v2885
        %v2917 = vpop.xlane.xlu0 %2916
        %2918 = vadd.xlane.f32.xlu0 %v2887
        %v2919 = vpop.xlane.xlu0 %2918
        %2920 = vadd.xlane.f32.xlu0 %v2889
        %v2921 = vpop.xlane.xlu0 %2920
        %2922 = vadd.xlane.f32.xlu0 %v2891
        %v2923 = vpop.xlane.xlu0 %2922
        %v2924 = vpack.c.bf16 %v2863, %v2861
        %v2925 = vpack.c.bf16 %v2867, %v2865
        %v2926 = vpack.c.bf16 %v2871, %v2869
        %v2927 = vpack.c.bf16 %v2875, %v2873
        %v2928 = vpack.c.bf16 %v2879, %v2877
        %v2929 = vpack.c.bf16 %v2883, %v2881
        %v2930 = vpack.c.bf16 %v2887, %v2885
        %v2931 = vpack.c.bf16 %v2891, %v2889
        %2932 = vrot.lane.b32.xlu0 %v869, 32
        %v2933 = vpop.permute.xlu0 %2932
        %2934 = vrot.lane.b32.xlu0 %v870, 32
        %v2935 = vpop.permute.xlu0 %2934
        %2936 = vrot.lane.b32.xlu0 %v871, 32
        %v2937 = vpop.permute.xlu0 %2936
        %2938 = vrot.lane.b32.xlu0 %v872, 32
        %v2939 = vpop.permute.xlu0 %2938
        %2940 = vrot.lane.b32.xlu0 %v873, 32
        %v2941 = vpop.permute.xlu0 %2940
        %2942 = vrot.lane.b32.xlu0 %v874, 32
        %v2943 = vpop.permute.xlu0 %2942
        %2944 = vrot.lane.b32.xlu0 %v875, 32
        %v2945 = vpop.permute.xlu0 %2944
        %2946 = vrot.lane.b32.xlu0 %v876, 32
        %v2947 = vpop.permute.xlu0 %2946
        %2956 = vmatprep.subr.bf16.mxu0 0
        %2957 = vmatpush1.bf16.msra.mxu0 %v2933
        %2958 = vmatprep.subr.bf16.mxu0 0
        %2959 = vmatpush1.bf16.msra.mxu0 %v2935
        %2960 = vmatprep.subr.bf16.mxu0 0
        %2961 = vmatpush1.bf16.msra.mxu0 %v2937
        %2962 = vmatprep.subr.bf16.mxu0 0
        %2963 = vmatpush1.bf16.msra.mxu0 %v2939
        %2964 = vmatprep.subr.bf16.mxu0 0
        %2965 = vmatpush1.bf16.msra.mxu0 %v2941
        %2966 = vmatprep.subr.bf16.mxu0 0
        %2967 = vmatpush1.bf16.msra.mxu0 %v2943
        %2968 = vmatprep.subr.bf16.mxu0 0
        %2969 = vmatpush1.bf16.msra.mxu0 %v2945
        %2970 = vmatprep.subr.bf16.mxu0 0
        %2971 = vmatpush1.bf16.msra.mxu0 %v2947
        %2972 = vmatprep.subr.bf16.mxu0 0
        %2973 = vmatpush1.bf16.msra.mxu0 0
        %2974 = vmatprep.subr.bf16.mxu0 0
        %2975 = vmatpush1.bf16.msra.mxu0 0
        %2976 = vmatprep.subr.bf16.mxu0 0
        %2977 = vmatpush1.bf16.msra.mxu0 0
        %2978 = vmatprep.subr.bf16.mxu0 0
        %2979 = vmatpush1.bf16.msra.mxu0 0
        %2980 = vmatprep.subr.bf16.mxu0 0
        %2981 = vmatpush1.bf16.msra.mxu0 0
        %2982 = vmatprep.subr.bf16.mxu0 0
        %2983 = vmatpush1.bf16.msra.mxu0 0
        %2984 = vmatprep.subr.bf16.mxu0 0
        %2985 = vmatpush1.bf16.msra.mxu0 0
        %2986 = vmatprep.subr.bf16.mxu0 0
        %2987 = vmatpush1.bf16.msra.mxu0 0
        %2988 = vmatprep.mubr.bf16.mxu0 0
        %2989 = vmatmul.mubr.bf16.gmra.mrb[0].mxu0 %v2924
        %v2990 = vpop.f32.mrb[0].mxu0
        %v2991 = vadd.f32 0.0, %v2990
        %v2992 = vpop.f32.mrb[0].mxu0
        %v2993 = vpop.f32.mrb[0].mxu0
        %v2994 = vadd.f32 0.0, %v2993
        %v2995 = vpop.f32.mrb[0].mxu0
        %2996 = vmatprep.mubr.bf16.mxu0 0
        %2997 = vmatmul.mubr.bf16.gmra.mrb[0].mxu0 %v2925
        %v2998 = vpop.f32.mrb[0].mxu0
        %v2999 = vadd.f32 0.0, %v2998
        %v3000 = vpop.f32.mrb[0].mxu0
        %v3001 = vpop.f32.mrb[0].mxu0
        %v3002 = vadd.f32 0.0, %v3001
        %v3003 = vpop.f32.mrb[0].mxu0
        %3004 = vmatprep.mubr.bf16.mxu0 0
        %3005 = vmatmul.mubr.bf16.gmra.mrb[0].mxu0 %v2926
        %v3006 = vpop.f32.mrb[0].mxu0
        %v3007 = vadd.f32 0.0, %v3006
        %v3008 = vpop.f32.mrb[0].mxu0
        %v3009 = vpop.f32.mrb[0].mxu0
        %v3010 = vadd.f32 0.0, %v3009
        %v3011 = vpop.f32.mrb[0].mxu0
        %3012 = vmatprep.mubr.bf16.mxu0 0
        %3013 = vmatmul.mubr.bf16.gmra.mrb[0].mxu0 %v2927
        %v3014 = vpop.f32.mrb[0].mxu0
        %v3015 = vadd.f32 0.0, %v3014
        %v3016 = vpop.f32.mrb[0].mxu0
        %v3017 = vpop.f32.mrb[0].mxu0
        %v3018 = vadd.f32 0.0, %v3017
        %v3019 = vpop.f32.mrb[0].mxu0
        %3020 = vmatprep.mubr.bf16.mxu0 0
        %3021 = vmatmul.mubr.bf16.gmra.mrb[0].mxu0 %v2928
        %v3022 = vpop.f32.mrb[0].mxu0
        %v3023 = vadd.f32 0.0, %v3022
        %v3024 = vpop.f32.mrb[0].mxu0
        %v3025 = vpop.f32.mrb[0].mxu0
        %v3026 = vadd.f32 0.0, %v3025
        %v3027 = vpop.f32.mrb[0].mxu0
        %3028 = vmatprep.mubr.bf16.mxu0 0
        %3029 = vmatmul.mubr.bf16.gmra.mrb[0].mxu0 %v2929
        %v3030 = vpop.f32.mrb[0].mxu0
        %v3031 = vadd.f32 0.0, %v3030
        %v3032 = vpop.f32.mrb[0].mxu0
        %v3033 = vpop.f32.mrb[0].mxu0
        %v3034 = vadd.f32 0.0, %v3033
        %v3035 = vpop.f32.mrb[0].mxu0
        %3036 = vmatprep.mubr.bf16.mxu0 0
        %3037 = vmatmul.mubr.bf16.gmra.mrb[0].mxu0 %v2930
        %v3038 = vpop.f32.mrb[0].mxu0
        %v3039 = vadd.f32 0.0, %v3038
        %v3040 = vpop.f32.mrb[0].mxu0
        %v3041 = vpop.f32.mrb[0].mxu0
        %v3042 = vadd.f32 0.0, %v3041
        %v3043 = vpop.f32.mrb[0].mxu0
        %3044 = vmatprep.mubr.bf16.mxu0 0
        %3045 = vmatmul.mubr.bf16.gmra.mrb[0].mxu0 %v2931
        %v3046 = vpop.f32.mrb[0].mxu0
        %v3047 = vadd.f32 0.0, %v3046
        %v3048 = vpop.f32.mrb[0].mxu0
        %v3049 = vpop.f32.mrb[0].mxu0
        %v3050 = vadd.f32 0.0, %v3049
        %v3051 = vpop.f32.mrb[0].mxu0
        %3052 = vdwg.mxu0
        %v3053 = vrcp.pop %v2893
        %v3054 = vrcp.pop %v2895
        %v3055 = vrcp.pop %v2897
        %v3056 = vrcp.pop %v2899
        %v3057 = vrcp.pop %v2901
        %v3058 = vrcp.pop %v2903
        %v3059 = vrcp.pop %v2905
        %v3060 = vrcp.pop %v2907
        %v3061 = vrcp.pop %v2909
        %v3062 = vrcp.pop %v2911
        %v3063 = vrcp.pop %v2913
        %v3064 = vrcp.pop %v2915
        %v3065 = vrcp.pop %v2917
        %v3066 = vrcp.pop %v2919
        %v3067 = vrcp.pop %v2921
        %v3068 = vrcp.pop %v2923
        %v3069 = vmul.f32 %v2991, %v3053
        %v3070 = vmul.f32 %v2994, %v3054
        %v3071 = vmul.f32 %v2999, %v3055
        %v3072 = vmul.f32 %v3002, %v3056
        %v3073 = vmul.f32 %v3007, %v3057
        %v3074 = vmul.f32 %v3010, %v3058
        %v3075 = vmul.f32 %v3015, %v3059
        %v3076 = vmul.f32 %v3018, %v3060
        %v3077 = vmul.f32 %v3023, %v3061
        %v3078 = vmul.f32 %v3026, %v3062
        %v3079 = vmul.f32 %v3031, %v3063
        %v3080 = vmul.f32 %v3034, %v3064
        %v3081 = vmul.f32 %v3039, %v3065
        %v3082 = vmul.f32 %v3042, %v3066
        %v3083 = vmul.f32 %v3047, %v3067
        %v3084 = vmul.f32 %v3050, %v3068
        %v3085 = vpack.c.bf16 %v3070, %v3069
        %v3086 = vpack.c.bf16 %v3072, %v3071
        %v3087 = vpack.c.bf16 %v3074, %v3073
        %v3088 = vpack.c.bf16 %v3076, %v3075
        %v3089 = vpack.c.bf16 %v3078, %v3077
        %v3090 = vpack.c.bf16 %v3080, %v3079
        %v3091 = vpack.c.bf16 %v3082, %v3081
        %v3092 = vpack.c.bf16 %v3084, %v3083
        %v3097 = vunpack.c.l.b16 %v833
        %v3098 = vunpack.c.l.b16 %v834
        %v3099 = vunpack.c.l.b16 %v835
        %v3100 = vunpack.c.l.b16 %v836
        %v3101 = vpack.c.b16 %v3098, %v3097
        %v3102 = vpack.c.b16 %v3100, %v3099
        %v3106 = vsel %vm877, %v3085, 0
        %v3109 = vsel %vm877, %v3086, 0
        %v3112 = vsel %vm877, %v3087, 0
        %v3115 = vsel %vm877, %v3088, 0
        %v3118 = vsel %vm877, %v3089, 0
        %v3121 = vsel %vm877, %v3090, 0
        %v3124 = vsel %vm877, %v3091, 0
        %v3127 = vsel %vm877, %v3092, 0
        %3129 = vmatprep.subr.bf16.mxu0 0
        %3130 = vmatpush1.bf16.msra.mxu0 %v3101
        %3131 = vmatprep.subr.bf16.mxu0 0
        %3132 = vmatpush1.bf16.msra.mxu0 %v3102
        %3133 = vmatprep.subr.bf16.mxu0 0
        %3134 = vmatpush1.bf16.msra.mxu0 0
        %3135 = vmatprep.subr.bf16.mxu0 0
        %3136 = vmatpush1.bf16.msra.mxu0 0
        %3137 = vmatprep.subr.bf16.mxu0 0
        %3138 = vmatpush1.bf16.msra.mxu0 0
        %3139 = vmatprep.subr.bf16.mxu0 0
        %3140 = vmatpush1.bf16.msra.mxu0 0
        %3141 = vmatprep.subr.bf16.mxu0 0
        %3142 = vmatpush1.bf16.msra.mxu0 0
        %3143 = vmatprep.subr.bf16.mxu0 0
        %3144 = vmatpush1.bf16.msra.mxu0 0
        %3145 = vmatprep.subr.bf16.mxu0 0
        %3146 = vmatpush1.bf16.msra.mxu0 0
        %3147 = vmatprep.subr.bf16.mxu0 0
        %3148 = vmatpush1.bf16.msra.mxu0 0
        %3149 = vmatprep.subr.bf16.mxu0 0
        %3150 = vmatpush1.bf16.msra.mxu0 0
        %3151 = vmatprep.subr.bf16.mxu0 0
        %3152 = vmatpush1.bf16.msra.mxu0 0
        %3153 = vmatprep.subr.bf16.mxu0 0
        %3154 = vmatpush1.bf16.msra.mxu0 0
        %3155 = vmatprep.subr.bf16.mxu0 0
        %3156 = vmatpush1.bf16.msra.mxu0 0
        %3157 = vmatprep.subr.bf16.mxu0 0
        %3158 = vmatpush1.bf16.msra.mxu0 0
        %3159 = vmatprep.subr.bf16.mxu0 0
        %3160 = vmatpush1.bf16.msra.mxu0 0
        %3161 = vmatprep.mubr.bf16.mxu0 0
        %3162 = vmatmul.mubr.bf16.gmra.mrb[0].mxu0 %v3106
        %v3163 = vpop.f32.mrb[0].mxu0
        %v3164 = vadd.f32 0.0, %v3163
        %v3165 = vpop.f32.mrb[0].mxu0
        %v3166 = vpop.f32.mrb[0].mxu0
        %v3167 = vadd.f32 0.0, %v3166
        %v3168 = vpop.f32.mrb[0].mxu0
        %3169 = vmatprep.mubr.bf16.mxu0 0
        %3170 = vmatmul.mubr.bf16.gmra.mrb[0].mxu0 %v3109
        %v3171 = vpop.f32.mrb[0].mxu0
        %v3172 = vadd.f32 0.0, %v3171
        %v3173 = vpop.f32.mrb[0].mxu0
        %v3174 = vpop.f32.mrb[0].mxu0
        %v3175 = vadd.f32 0.0, %v3174
        %v3176 = vpop.f32.mrb[0].mxu0
        %3177 = vmatprep.mubr.bf16.mxu0 0
        %3178 = vmatmul.mubr.bf16.gmra.mrb[0].mxu0 %v3112
        %v3179 = vpop.f32.mrb[0].mxu0
        %v3180 = vadd.f32 0.0, %v3179
        %v3181 = vpop.f32.mrb[0].mxu0
        %v3182 = vpop.f32.mrb[0].mxu0
        %v3183 = vadd.f32 0.0, %v3182
        %v3184 = vpop.f32.mrb[0].mxu0
        %3185 = vmatprep.mubr.bf16.mxu0 0
        %3186 = vmatmul.mubr.bf16.gmra.mrb[0].mxu0 %v3115
        %v3187 = vpop.f32.mrb[0].mxu0
        %v3188 = vadd.f32 0.0, %v3187
        %v3189 = vpop.f32.mrb[0].mxu0
        %v3190 = vpop.f32.mrb[0].mxu0
        %v3191 = vadd.f32 0.0, %v3190
        %v3192 = vpop.f32.mrb[0].mxu0
        %3193 = vmatprep.mubr.bf16.mxu0 0
        %3194 = vmatmul.mubr.bf16.gmra.mrb[0].mxu0 %v3118
        %v3195 = vpop.f32.mrb[0].mxu0
        %v3196 = vadd.f32 0.0, %v3195
        %v3197 = vpop.f32.mrb[0].mxu0
        %v3198 = vpop.f32.mrb[0].mxu0
        %v3199 = vadd.f32 0.0, %v3198
        %v3200 = vpop.f32.mrb[0].mxu0
        %3201 = vmatprep.mubr.bf16.mxu0 0
        %3202 = vmatmul.mubr.bf16.gmra.mrb[0].mxu0 %v3121
        %v3203 = vpop.f32.mrb[0].mxu0
        %v3204 = vadd.f32 0.0, %v3203
        %v3205 = vpop.f32.mrb[0].mxu0
        %v3206 = vpop.f32.mrb[0].mxu0
        %v3207 = vadd.f32 0.0, %v3206
        %v3208 = vpop.f32.mrb[0].mxu0
        %3209 = vmatprep.mubr.bf16.mxu0 0
        %3210 = vmatmul.mubr.bf16.gmra.mrb[0].mxu0 %v3124
        %v3211 = vpop.f32.mrb[0].mxu0
        %v3212 = vadd.f32 0.0, %v3211
        %v3213 = vpop.f32.mrb[0].mxu0
        %v3214 = vpop.f32.mrb[0].mxu0
        %v3215 = vadd.f32 0.0, %v3214
        %v3216 = vpop.f32.mrb[0].mxu0
        %3217 = vmatprep.mubr.bf16.mxu0 0
        %3218 = vmatmul.mubr.bf16.gmra.mrb[0].mxu0 %v3127
        %v3219 = vpop.f32.mrb[0].mxu0
        %v3220 = vadd.f32 0.0, %v3219
        %v3221 = vpop.f32.mrb[0].mxu0
        %v3222 = vpop.f32.mrb[0].mxu0
        %v3223 = vadd.f32 0.0, %v3222
        %v3224 = vpop.f32.mrb[0].mxu0
        %3225 = vdwg.mxu0
        %v3226 = vadd.f32 %v2619, %v3164
        %v3227 = vadd.f32 %v2620, %v3167
        %v3228 = vadd.f32 %v2621, %v3172
        %v3229 = vadd.f32 %v2622, %v3175
        %v3230 = vadd.f32 %v2623, %v3180
        %v3231 = vadd.f32 %v2624, %v3183
        %v3232 = vadd.f32 %v2625, %v3188
        %v3233 = vadd.f32 %v2626, %v3191
        %v3234 = vadd.f32 %v2627, %v3196
        %v3235 = vadd.f32 %v2628, %v3199
        %v3236 = vadd.f32 %v2629, %v3204
        %v3237 = vadd.f32 %v2630, %v3207
        %v3238 = vadd.f32 %v2631, %v3212
        %v3239 = vadd.f32 %v2632, %v3215
        %v3240 = vadd.f32 %v2633, %v3220
        %v3241 = vadd.f32 %v2634, %v3223
        %v3242 = vadd.f32 %v442, %v3226
        %v3243 = vadd.f32 %v443, %v3227
        %v3244 = vadd.f32 %v444, %v3228
        %v3245 = vadd.f32 %v445, %v3229
        %v3246 = vadd.f32 %v446, %v3230
        %v3247 = vadd.f32 %v447, %v3231
        %v3248 = vadd.f32 %v448, %v3232
        %v3249 = vadd.f32 %v449, %v3233
        %v3250 = vadd.f32 %v450, %v3234
        %v3251 = vadd.f32 %v451, %v3235
        %v3252 = vadd.f32 %v452, %v3236
        %v3253 = vadd.f32 %v453, %v3237
        %v3254 = vadd.f32 %v454, %v3238
        %v3255 = vadd.f32 %v455, %v3239
        %v3256 = vadd.f32 %v456, %v3240
        %v3257 = vadd.f32 %v457, %v3241
        %v3258 = vld [vmem:[%s4] sm:$0x1]
        %v3260 = vlaneseq
        %v3261 = vshrl.u32 %v3260, 7
        %v3262 = vsub.s32 0, %v3261
        %v3263 = vrot.slane %v3258, %v3262
        %v3265 = vadd.f32 %v3242, %v3263
        %v3266 = vadd.f32 %v3243, %v3263
        %v3267 = vadd.f32 %v3244, %v3263
        %v3268 = vadd.f32 %v3245, %v3263
        %v3269 = vadd.f32 %v3246, %v3263
        %v3270 = vadd.f32 %v3247, %v3263
        %v3271 = vadd.f32 %v3248, %v3263
        %v3272 = vadd.f32 %v3249, %v3263
        %v3273 = vadd.f32 %v3250, %v3263
        %v3274 = vadd.f32 %v3251, %v3263
        %v3275 = vadd.f32 %v3252, %v3263
        %v3276 = vadd.f32 %v3253, %v3263
        %v3277 = vadd.f32 %v3254, %v3263
        %v3278 = vadd.f32 %v3255, %v3263
        %v3279 = vadd.f32 %v3256, %v3263
        %v3280 = vadd.f32 %v3257, %v3263
        %v3281 = vld [vmem:[#allocation8] sm:$0xff]
        %v3282 = vld [vmem:[#allocation8 + $0x8] sm:$0xff]
        %v3283 = vld [vmem:[#allocation8 + $0x10] sm:$0xff]
        %v3284 = vld [vmem:[#allocation8 + $0x18] sm:$0xff]
        %v3285 = vld [vmem:[#allocation8 + $0x20] sm:$0xff]
        %v3286 = vld [vmem:[#allocation8 + $0x28] sm:$0xff]
        %v3287 = vld [vmem:[#allocation8 + $0x30] sm:$0xff]
        %v3288 = vld [vmem:[#allocation8 + $0x38] sm:$0xff]
        %v3289 = vld [vmem:[#allocation8 + $0x40] sm:$0xff]
        %v3290 = vld [vmem:[#allocation8 + $0x48] sm:$0xff]
        %v3291 = vld [vmem:[#allocation8 + $0x50] sm:$0xff]
        %v3292 = vld [vmem:[#allocation8 + $0x58] sm:$0xff]
        %v3293 = vld [vmem:[#allocation8 + $0x60] sm:$0xff]
        %v3294 = vld [vmem:[#allocation8 + $0x68] sm:$0xff]
        %v3295 = vld [vmem:[#allocation8 + $0x70] sm:$0xff]
        %v3296 = vld [vmem:[#allocation8 + $0x78] sm:$0xff]
        %v3297 = vld [vmem:[#allocation8 + $0x80] sm:$0xff]
        %v3298 = vld [vmem:[#allocation8 + $0x88] sm:$0xff]
        %v3299 = vld [vmem:[#allocation8 + $0x90] sm:$0xff]
        %v3300 = vld [vmem:[#allocation8 + $0x98] sm:$0xff]
        %v3301 = vld [vmem:[#allocation8 + $0xa0] sm:$0xff]
        %v3302 = vld [vmem:[#allocation8 + $0xa8] sm:$0xff]
        %v3303 = vld [vmem:[#allocation8 + $0xb0] sm:$0xff]
        %v3304 = vld [vmem:[#allocation8 + $0xb8] sm:$0xff]
        %v3305 = vld [vmem:[#allocation8 + $0xc0] sm:$0xff]
        %v3306 = vld [vmem:[#allocation8 + $0xc8] sm:$0xff]
        %v3307 = vld [vmem:[#allocation8 + $0xd0] sm:$0xff]
        %v3308 = vld [vmem:[#allocation8 + $0xd8] sm:$0xff]
        %v3309 = vld [vmem:[#allocation8 + $0xe0] sm:$0xff]
        %v3310 = vld [vmem:[#allocation8 + $0xe8] sm:$0xff]
        %v3311 = vld [vmem:[#allocation8 + $0xf0] sm:$0xff]
        %v3312 = vld [vmem:[#allocation8 + $0xf8] sm:$0xff]
        %v3313 = vld [vmem:[%s6] sm:$0xf]
        %v3314 = vld [vmem:[#allocation10] sm:$0xf]
        %v3315 = vld [vmem:[#allocation10 + $0x4] sm:$0xf]
        %v3316 = vld [vmem:[#allocation10 + $0x8] sm:$0xf]
        %v3317 = vld [vmem:[#allocation10 + $0xc] sm:$0xf]
        %v3318 = vld [vmem:[#allocation10 + $0x10] sm:$0xf]
        %v3319 = vld [vmem:[#allocation10 + $0x14] sm:$0xf]
        %v3320 = vld [vmem:[#allocation10 + $0x18] sm:$0xf]
        %v3321 = vld [vmem:[#allocation10 + $0x1c] sm:$0xf]
        %v3322 = vld [vmem:[#allocation10 + $0x20] sm:$0xf]
        %v3323 = vld [vmem:[#allocation10 + $0x24] sm:$0xf]
        %v3324 = vld [vmem:[#allocation10 + $0x28] sm:$0xf]
        %v3325 = vld [vmem:[#allocation10 + $0x2c] sm:$0xf]
        %v3326 = vld [vmem:[#allocation10 + $0x30] sm:$0xf]
        %v3327 = vld [vmem:[#allocation10 + $0x34] sm:$0xf]
        %v3328 = vld [vmem:[#allocation10 + $0x38] sm:$0xf]
        %v3329 = vld [vmem:[#allocation10 + $0x3c] sm:$0xf]
        %v3330 = vld [vmem:[#allocation10 + $0x40] sm:$0xf]
        %v3331 = vld [vmem:[#allocation10 + $0x44] sm:$0xf]
        %v3332 = vld [vmem:[#allocation10 + $0x48] sm:$0xf]
        %v3333 = vld [vmem:[#allocation10 + $0x4c] sm:$0xf]
        %v3334 = vld [vmem:[#allocation10 + $0x50] sm:$0xf]
        %v3335 = vld [vmem:[#allocation10 + $0x54] sm:$0xf]
        %v3336 = vld [vmem:[#allocation10 + $0x58] sm:$0xf]
        %v3337 = vld [vmem:[#allocation10 + $0x5c] sm:$0xf]
        %v3338 = vld [vmem:[#allocation10 + $0x60] sm:$0xf]
        %v3339 = vld [vmem:[#allocation10 + $0x64] sm:$0xf]
        %v3340 = vld [vmem:[#allocation10 + $0x68] sm:$0xf]
        %v3341 = vld [vmem:[#allocation10 + $0x6c] sm:$0xf]
        %v3342 = vld [vmem:[#allocation10 + $0x70] sm:$0xf]
        %v3343 = vld [vmem:[#allocation10 + $0x74] sm:$0xf]
        %v3344 = vld [vmem:[#allocation10 + $0x78] sm:$0xf]
        %v3345 = vld [vmem:[#allocation10 + $0x7c] sm:$0xf]
        %v3346 = vld [vmem:[#allocation10 + $0x80] sm:$0xf]
        %v3347 = vld [vmem:[#allocation10 + $0x84] sm:$0xf]
        %v3348 = vld [vmem:[#allocation10 + $0x88] sm:$0xf]
        %v3349 = vld [vmem:[#allocation10 + $0x8c] sm:$0xf]
        %v3350 = vld [vmem:[#allocation10 + $0x90] sm:$0xf]
        %v3351 = vld [vmem:[#allocation10 + $0x94] sm:$0xf]
        %v3352 = vld [vmem:[#allocation10 + $0x98] sm:$0xf]
        %v3353 = vld [vmem:[#allocation10 + $0x9c] sm:$0xf]
        %v3354 = vld [vmem:[#allocation10 + $0xa0] sm:$0xf]
        %v3355 = vld [vmem:[#allocation10 + $0xa4] sm:$0xf]
        %v3356 = vld [vmem:[#allocation10 + $0xa8] sm:$0xf]
        %v3357 = vld [vmem:[#allocation10 + $0xac] sm:$0xf]
        %v3358 = vld [vmem:[#allocation10 + $0xb0] sm:$0xf]
        %v3359 = vld [vmem:[#allocation10 + $0xb4] sm:$0xf]
        %v3360 = vld [vmem:[#allocation10 + $0xb8] sm:$0xf]
        %v3361 = vld [vmem:[#allocation10 + $0xbc] sm:$0xf]
        %v3362 = vld [vmem:[#allocation10 + $0xc0] sm:$0xf]
        %v3363 = vld [vmem:[#allocation10 + $0xc4] sm:$0xf]
        %v3364 = vld [vmem:[#allocation10 + $0xc8] sm:$0xf]
        %v3365 = vld [vmem:[#allocation10 + $0xcc] sm:$0xf]
        %v3366 = vld [vmem:[#allocation10 + $0xd0] sm:$0xf]
        %v3367 = vld [vmem:[#allocation10 + $0xd4] sm:$0xf]
        %v3368 = vld [vmem:[#allocation10 + $0xd8] sm:$0xf]
        %v3369 = vld [vmem:[#allocation10 + $0xdc] sm:$0xf]
        %v3370 = vld [vmem:[#allocation10 + $0xe0] sm:$0xf]
        %v3371 = vld [vmem:[#allocation10 + $0xe4] sm:$0xf]
        %v3372 = vld [vmem:[#allocation10 + $0xe8] sm:$0xf]
        %v3373 = vld [vmem:[#allocation10 + $0xec] sm:$0xf]
        %v3374 = vld [vmem:[#allocation10 + $0xf0] sm:$0xf]
        %v3375 = vld [vmem:[#allocation10 + $0xf4] sm:$0xf]
        %v3376 = vld [vmem:[#allocation10 + $0xf8] sm:$0xf]
        %v3377 = vld [vmem:[#allocation10 + $0xfc] sm:$0xf]
        %v3378 = vld [vmem:[%s8] sm:$0x1]
        %v3379 = vpack.c.bf16 %v3266, %v3265
        %v3380 = vpack.c.bf16 %v3268, %v3267
        %v3381 = vpack.c.bf16 %v3270, %v3269
        %v3382 = vpack.c.bf16 %v3272, %v3271
        %v3383 = vpack.c.bf16 %v3274, %v3273
        %v3384 = vpack.c.bf16 %v3276, %v3275
        %v3385 = vpack.c.bf16 %v3278, %v3277
        %v3386 = vpack.c.bf16 %v3280, %v3279
        %v3388 = vlaneseq
        %v3389 = vshrl.u32 %v3388, 7
        %v3390 = vsub.s32 0, %v3389
        %v3391 = vrot.slane %v3313, %v3390
        %v3392 = vlaneseq
        %v3393 = vshrl.u32 %v3392, 7
        %v3394 = vsub.s32 1, %v3393
        %v3395 = vrot.slane %v3313, %v3394
        %v3396 = vlaneseq
        %v3397 = vshrl.u32 %v3396, 7
        %v3398 = vsub.s32 2, %v3397
        %v3399 = vrot.slane %v3313, %v3398
        %v3400 = vlaneseq
        %v3401 = vshrl.u32 %v3400, 7
        %v3402 = vsub.s32 3, %v3401
        %v3403 = vrot.slane %v3313, %v3402
        %v3440 = vunpack.c.l.b16 %v3281
        %v3441 = vunpack.c.h.b16 %v3281
        %v3442 = vunpack.c.l.b16 %v3282
        %v3443 = vunpack.c.h.b16 %v3282
        %v3444 = vunpack.c.l.b16 %v3283
        %v3445 = vunpack.c.h.b16 %v3283
        %v3446 = vunpack.c.l.b16 %v3284
        %v3447 = vunpack.c.h.b16 %v3284
        %v3448 = vunpack.c.l.b16 %v3285
        %v3449 = vunpack.c.h.b16 %v3285
        %v3450 = vunpack.c.l.b16 %v3286
        %v3451 = vunpack.c.h.b16 %v3286
        %v3452 = vunpack.c.l.b16 %v3287
        %v3453 = vunpack.c.h.b16 %v3287
        %v3454 = vunpack.c.l.b16 %v3288
        %v3455 = vunpack.c.h.b16 %v3288
        %v3456 = vunpack.c.l.b16 %v3289
        %v3457 = vunpack.c.h.b16 %v3289
        %v3458 = vunpack.c.l.b16 %v3290
        %v3459 = vunpack.c.h.b16 %v3290
        %v3460 = vunpack.c.l.b16 %v3291
        %v3461 = vunpack.c.h.b16 %v3291
        %v3462 = vunpack.c.l.b16 %v3292
        %v3463 = vunpack.c.h.b16 %v3292
        %v3464 = vunpack.c.l.b16 %v3293
        %v3465 = vunpack.c.h.b16 %v3293
        %v3466 = vunpack.c.l.b16 %v3294
        %v3467 = vunpack.c.h.b16 %v3294
        %v3468 = vunpack.c.l.b16 %v3295
        %v3469 = vunpack.c.h.b16 %v3295
        %v3470 = vunpack.c.l.b16 %v3296
        %v3471 = vunpack.c.h.b16 %v3296
        %v3472 = vunpack.c.l.b16 %v3297
        %v3473 = vunpack.c.h.b16 %v3297
        %v3474 = vunpack.c.l.b16 %v3298
        %v3475 = vunpack.c.h.b16 %v3298
        %v3476 = vunpack.c.l.b16 %v3299
        %v3477 = vunpack.c.h.b16 %v3299
        %v3478 = vunpack.c.l.b16 %v3300
        %v3479 = vunpack.c.h.b16 %v3300
        %v3480 = vunpack.c.l.b16 %v3301
        %v3481 = vunpack.c.h.b16 %v3301
        %v3482 = vunpack.c.l.b16 %v3302
        %v3483 = vunpack.c.h.b16 %v3302
        %v3484 = vunpack.c.l.b16 %v3303
        %v3485 = vunpack.c.h.b16 %v3303
        %v3486 = vunpack.c.l.b16 %v3304
        %v3487 = vunpack.c.h.b16 %v3304
        %v3488 = vunpack.c.l.b16 %v3305
        %v3489 = vunpack.c.h.b16 %v3305
        %v3490 = vunpack.c.l.b16 %v3306
        %v3491 = vunpack.c.h.b16 %v3306
        %v3492 = vunpack.c.l.b16 %v3307
        %v3493 = vunpack.c.h.b16 %v3307
        %v3494 = vunpack.c.l.b16 %v3308
        %v3495 = vunpack.c.h.b16 %v3308
        %v3496 = vunpack.c.l.b16 %v3309
        %v3497 = vunpack.c.h.b16 %v3309
        %v3498 = vunpack.c.l.b16 %v3310
        %v3499 = vunpack.c.h.b16 %v3310
        %v3500 = vunpack.c.l.b16 %v3311
        %v3501 = vunpack.c.h.b16 %v3311
        %v3502 = vunpack.c.l.b16 %v3312
        %v3503 = vunpack.c.h.b16 %v3312
        %v3504 = vpack.c.b16 %v3444, %v3440
        %v3505 = vpack.c.b16 %v3445, %v3441
        %v3506 = vpack.c.b16 %v3446, %v3442
        %v3507 = vpack.c.b16 %v3447, %v3443
        %v3508 = vpack.c.b16 %v3452, %v3448
        %v3509 = vpack.c.b16 %v3453, %v3449
        %v3510 = vpack.c.b16 %v3454, %v3450
        %v3511 = vpack.c.b16 %v3455, %v3451
        %v3512 = vpack.c.b16 %v3460, %v3456
        %v3513 = vpack.c.b16 %v3461, %v3457
        %v3514 = vpack.c.b16 %v3462, %v3458
        %v3515 = vpack.c.b16 %v3463, %v3459
        %v3516 = vpack.c.b16 %v3468, %v3464
        %v3517 = vpack.c.b16 %v3469, %v3465
        %v3518 = vpack.c.b16 %v3470, %v3466
        %v3519 = vpack.c.b16 %v3471, %v3467
        %v3520 = vpack.c.b16 %v3476, %v3472
        %v3521 = vpack.c.b16 %v3477, %v3473
        %v3522 = vpack.c.b16 %v3478, %v3474
        %v3523 = vpack.c.b16 %v3479, %v3475
        %v3524 = vpack.c.b16 %v3484, %v3480
        %v3525 = vpack.c.b16 %v3485, %v3481
        %v3526 = vpack.c.b16 %v3486, %v3482
        %v3527 = vpack.c.b16 %v3487, %v3483
        %v3528 = vpack.c.b16 %v3492, %v3488
        %v3529 = vpack.c.b16 %v3493, %v3489
        %v3530 = vpack.c.b16 %v3494, %v3490
        %v3531 = vpack.c.b16 %v3495, %v3491
        %v3532 = vpack.c.b16 %v3500, %v3496
        %v3533 = vpack.c.b16 %v3501, %v3497
        %v3534 = vpack.c.b16 %v3502, %v3498
        %v3535 = vpack.c.b16 %v3503, %v3499
        %3568 = vmatprep.subr.bf16.mxu0 %v3505
        %3569 = vmatpush1.bf16.msra.mxu0 %v3504
        %3570 = vmatprep.subr.bf16.mxu0 %v3509
        %3571 = vmatpush1.bf16.msra.mxu0 %v3508
        %3572 = vmatprep.subr.bf16.mxu0 %v3513
        %3573 = vmatpush1.bf16.msra.mxu0 %v3512
        %3574 = vmatprep.subr.bf16.mxu0 %v3517
        %3575 = vmatpush1.bf16.msra.mxu0 %v3516
        %3576 = vmatprep.subr.bf16.mxu0 %v3521
        %3577 = vmatpush1.bf16.msra.mxu0 %v3520
        %3578 = vmatprep.subr.bf16.mxu0 %v3525
        %3579 = vmatpush1.bf16.msra.mxu0 %v3524
        %3580 = vmatprep.subr.bf16.mxu0 %v3529
        %3581 = vmatpush1.bf16.msra.mxu0 %v3528
        %3582 = vmatprep.subr.bf16.mxu0 %v3533
        %3583 = vmatpush1.bf16.msra.mxu0 %v3532
        %3584 = vmatprep.subr.bf16.mxu0 0
        %3585 = vmatpush1.bf16.msra.mxu0 0
        %3586 = vmatprep.subr.bf16.mxu0 0
        %3587 = vmatpush1.bf16.msra.mxu0 0
        %3588 = vmatprep.subr.bf16.mxu0 0
        %3589 = vmatpush1.bf16.msra.mxu0 0
        %3590 = vmatprep.subr.bf16.mxu0 0
        %3591 = vmatpush1.bf16.msra.mxu0 0
        %3592 = vmatprep.subr.bf16.mxu0 0
        %3593 = vmatpush1.bf16.msra.mxu0 0
        %3594 = vmatprep.subr.bf16.mxu0 0
        %3595 = vmatpush1.bf16.msra.mxu0 0
        %3596 = vmatprep.subr.bf16.mxu0 0
        %3597 = vmatpush1.bf16.msra.mxu0 0
        %3598 = vmatprep.subr.bf16.mxu0 0
        %3599 = vmatpush1.bf16.msra.mxu0 0
        %3600 = vmatprep.mubr.bf16.mxu0 0
        %3601 = vmatmul.mubr.bf16.gmra.mrb[0].mxu0 %v3379
        %v3602 = vpop.f32.mrb[0].mxu0
        %v3603 = vadd.f32 %v3391, %v3602
        %v3604 = vpop.f32.mrb[0].mxu0
        %v3605 = vadd.f32 %v3395, %v3604
        %v3606 = vpop.f32.mrb[0].mxu0
        %v3607 = vadd.f32 %v3391, %v3606
        %v3608 = vpop.f32.mrb[0].mxu0
        %v3609 = vadd.f32 %v3395, %v3608
        %3610 = vmatprep.mubr.bf16.mxu0 0
        %3611 = vmatmul.mubr.bf16.gmra.mrb[0].mxu0 %v3380
        %v3612 = vpop.f32.mrb[0].mxu0
        %v3613 = vadd.f32 %v3391, %v3612
        %v3614 = vpop.f32.mrb[0].mxu0
        %v3615 = vadd.f32 %v3395, %v3614
        %v3616 = vpop.f32.mrb[0].mxu0
        %v3617 = vadd.f32 %v3391, %v3616
        %v3618 = vpop.f32.mrb[0].mxu0
        %v3619 = vadd.f32 %v3395, %v3618
        %3620 = vmatprep.mubr.bf16.mxu0 0
        %3621 = vmatmul.mubr.bf16.gmra.mrb[0].mxu0 %v3381
        %v3622 = vpop.f32.mrb[0].mxu0
        %v3623 = vadd.f32 %v3391, %v3622
        %v3624 = vpop.f32.mrb[0].mxu0
        %v3625 = vadd.f32 %v3395, %v3624
        %v3626 = vpop.f32.mrb[0].mxu0
        %v3627 = vadd.f32 %v3391, %v3626
        %v3628 = vpop.f32.mrb[0].mxu0
        %v3629 = vadd.f32 %v3395, %v3628
        %3630 = vmatprep.mubr.bf16.mxu0 0
        %3631 = vmatmul.mubr.bf16.gmra.mrb[0].mxu0 %v3382
        %v3632 = vpop.f32.mrb[0].mxu0
        %v3633 = vadd.f32 %v3391, %v3632
        %v3634 = vpop.f32.mrb[0].mxu0
        %v3635 = vadd.f32 %v3395, %v3634
        %v3636 = vpop.f32.mrb[0].mxu0
        %v3637 = vadd.f32 %v3391, %v3636
        %v3638 = vpop.f32.mrb[0].mxu0
        %v3639 = vadd.f32 %v3395, %v3638
        %3640 = vmatprep.mubr.bf16.mxu0 0
        %3641 = vmatmul.mubr.bf16.gmra.mrb[0].mxu0 %v3383
        %v3642 = vpop.f32.mrb[0].mxu0
        %v3643 = vadd.f32 %v3391, %v3642
        %v3644 = vpop.f32.mrb[0].mxu0
        %v3645 = vadd.f32 %v3395, %v3644
        %v3646 = vpop.f32.mrb[0].mxu0
        %v3647 = vadd.f32 %v3391, %v3646
        %v3648 = vpop.f32.mrb[0].mxu0
        %v3649 = vadd.f32 %v3395, %v3648
        %3650 = vmatprep.mubr.bf16.mxu0 0
        %3651 = vmatmul.mubr.bf16.gmra.mrb[0].mxu0 %v3384
        %v3652 = vpop.f32.mrb[0].mxu0
        %v3653 = vadd.f32 %v3391, %v3652
        %v3654 = vpop.f32.mrb[0].mxu0
        %v3655 = vadd.f32 %v3395, %v3654
        %v3656 = vpop.f32.mrb[0].mxu0
        %v3657 = vadd.f32 %v3391, %v3656
        %v3658 = vpop.f32.mrb[0].mxu0
        %v3659 = vadd.f32 %v3395, %v3658
        %3660 = vmatprep.mubr.bf16.mxu0 0
        %3661 = vmatmul.mubr.bf16.gmra.mrb[0].mxu0 %v3385
        %v3662 = vpop.f32.mrb[0].mxu0
        %v3663 = vadd.f32 %v3391, %v3662
        %v3664 = vpop.f32.mrb[0].mxu0
        %v3665 = vadd.f32 %v3395, %v3664
        %v3666 = vpop.f32.mrb[0].mxu0
        %v3667 = vadd.f32 %v3391, %v3666
        %v3668 = vpop.f32.mrb[0].mxu0
        %v3669 = vadd.f32 %v3395, %v3668
        %3670 = vmatprep.mubr.bf16.mxu0 0
        %3671 = vmatmul.mubr.bf16.gmra.mrb[0].mxu0 %v3386
        %v3672 = vpop.f32.mrb[0].mxu0
        %v3673 = vadd.f32 %v3391, %v3672
        %v3674 = vpop.f32.mrb[0].mxu0
        %v3675 = vadd.f32 %v3395, %v3674
        %v3676 = vpop.f32.mrb[0].mxu0
        %v3677 = vadd.f32 %v3391, %v3676
        %v3678 = vpop.f32.mrb[0].mxu0
        %v3679 = vadd.f32 %v3395, %v3678
        %3680 = vdwg.mxu0
        %3681 = vmatprep.subr.bf16.mxu0 %v3507
        %3682 = vmatpush1.bf16.msra.mxu0 %v3506
        %3683 = vmatprep.subr.bf16.mxu0 %v3511
        %3684 = vmatpush1.bf16.msra.mxu0 %v3510
        %3685 = vmatprep.subr.bf16.mxu0 %v3515
        %3686 = vmatpush1.bf16.msra.mxu0 %v3514
        %3687 = vmatprep.subr.bf16.mxu0 %v3519
        %3688 = vmatpush1.bf16.msra.mxu0 %v3518
        %3689 = vmatprep.subr.bf16.mxu0 %v3523
        %3690 = vmatpush1.bf16.msra.mxu0 %v3522
        %3691 = vmatprep.subr.bf16.mxu0 %v3527
        %3692 = vmatpush1.bf16.msra.mxu0 %v3526
        %3693 = vmatprep.subr.bf16.mxu0 %v3531
        %3694 = vmatpush1.bf16.msra.mxu0 %v3530
        %3695 = vmatprep.subr.bf16.mxu0 %v3535
        %3696 = vmatpush1.bf16.msra.mxu0 %v3534
        %3697 = vmatprep.subr.bf16.mxu0 0
        %3698 = vmatpush1.bf16.msra.mxu0 0
        %3699 = vmatprep.subr.bf16.mxu0 0
        %3700 = vmatpush1.bf16.msra.mxu0 0
        %3701 = vmatprep.subr.bf16.mxu0 0
        %3702 = vmatpush1.bf16.msra.mxu0 0
        %3703 = vmatprep.subr.bf16.mxu0 0
        %3704 = vmatpush1.bf16.msra.mxu0 0
        %3705 = vmatprep.subr.bf16.mxu0 0
        %3706 = vmatpush1.bf16.msra.mxu0 0
        %3707 = vmatprep.subr.bf16.mxu0 0
        %3708 = vmatpush1.bf16.msra.mxu0 0
        %3709 = vmatprep.subr.bf16.mxu0 0
        %3710 = vmatpush1.bf16.msra.mxu0 0
        %3711 = vmatprep.subr.bf16.mxu0 0
        %3712 = vmatpush1.bf16.msra.mxu0 0
        %3713 = vmatprep.mubr.bf16.mxu0 0
        %3714 = vmatmul.mubr.bf16.gmra.mrb[0].mxu0 %v3379
        %v3715 = vpop.f32.mrb[0].mxu0
        %v3716 = vadd.f32 %v3399, %v3715
        %v3717 = vpop.f32.mrb[0].mxu0
        %v3718 = vadd.f32 %v3403, %v3717
        %v3719 = vpop.f32.mrb[0].mxu0
        %v3720 = vadd.f32 %v3399, %v3719
        %v3721 = vpop.f32.mrb[0].mxu0
        %v3722 = vadd.f32 %v3403, %v3721
        %3723 = vmatprep.mubr.bf16.mxu0 0
        %3724 = vmatmul.mubr.bf16.gmra.mrb[0].mxu0 %v3380
        %v3725 = vpop.f32.mrb[0].mxu0
        %v3726 = vadd.f32 %v3399, %v3725
        %v3727 = vpop.f32.mrb[0].mxu0
        %v3728 = vadd.f32 %v3403, %v3727
        %v3729 = vpop.f32.mrb[0].mxu0
        %v3730 = vadd.f32 %v3399, %v3729
        %v3731 = vpop.f32.mrb[0].mxu0
        %v3732 = vadd.f32 %v3403, %v3731
        %3733 = vmatprep.mubr.bf16.mxu0 0
        %3734 = vmatmul.mubr.bf16.gmra.mrb[0].mxu0 %v3381
        %v3735 = vpop.f32.mrb[0].mxu0
        %v3736 = vadd.f32 %v3399, %v3735
        %v3737 = vpop.f32.mrb[0].mxu0
        %v3738 = vadd.f32 %v3403, %v3737
        %v3739 = vpop.f32.mrb[0].mxu0
        %v3740 = vadd.f32 %v3399, %v3739
        %v3741 = vpop.f32.mrb[0].mxu0
        %v3742 = vadd.f32 %v3403, %v3741
        %3743 = vmatprep.mubr.bf16.mxu0 0
        %3744 = vmatmul.mubr.bf16.gmra.mrb[0].mxu0 %v3382
        %v3745 = vpop.f32.mrb[0].mxu0
        %v3746 = vadd.f32 %v3399, %v3745
        %v3747 = vpop.f32.mrb[0].mxu0
        %v3748 = vadd.f32 %v3403, %v3747
        %v3749 = vpop.f32.mrb[0].mxu0
        %v3750 = vadd.f32 %v3399, %v3749
        %v3751 = vpop.f32.mrb[0].mxu0
        %v3752 = vadd.f32 %v3403, %v3751
        %3753 = vmatprep.mubr.bf16.mxu0 0
        %3754 = vmatmul.mubr.bf16.gmra.mrb[0].mxu0 %v3383
        %v3755 = vpop.f32.mrb[0].mxu0
        %v3756 = vadd.f32 %v3399, %v3755
        %v3757 = vpop.f32.mrb[0].mxu0
        %v3758 = vadd.f32 %v3403, %v3757
        %v3759 = vpop.f32.mrb[0].mxu0
        %v3760 = vadd.f32 %v3399, %v3759
        %v3761 = vpop.f32.mrb[0].mxu0
        %v3762 = vadd.f32 %v3403, %v3761
        %3763 = vmatprep.mubr.bf16.mxu0 0
        %3764 = vmatmul.mubr.bf16.gmra.mrb[0].mxu0 %v3384
        %v3765 = vpop.f32.mrb[0].mxu0
        %v3766 = vadd.f32 %v3399, %v3765
        %v3767 = vpop.f32.mrb[0].mxu0
        %v3768 = vadd.f32 %v3403, %v3767
        %v3769 = vpop.f32.mrb[0].mxu0
        %v3770 = vadd.f32 %v3399, %v3769
        %v3771 = vpop.f32.mrb[0].mxu0
        %v3772 = vadd.f32 %v3403, %v3771
        %3773 = vmatprep.mubr.bf16.mxu0 0
        %3774 = vmatmul.mubr.bf16.gmra.mrb[0].mxu0 %v3385
        %v3775 = vpop.f32.mrb[0].mxu0
        %v3776 = vadd.f32 %v3399, %v3775
        %v3777 = vpop.f32.mrb[0].mxu0
        %v3778 = vadd.f32 %v3403, %v3777
        %v3779 = vpop.f32.mrb[0].mxu0
        %v3780 = vadd.f32 %v3399, %v3779
        %v3781 = vpop.f32.mrb[0].mxu0
        %v3782 = vadd.f32 %v3403, %v3781
        %3783 = vmatprep.mubr.bf16.mxu0 0
        %3784 = vmatmul.mubr.bf16.gmra.mrb[0].mxu0 %v3386
        %v3785 = vpop.f32.mrb[0].mxu0
        %v3786 = vadd.f32 %v3399, %v3785
        %v3787 = vpop.f32.mrb[0].mxu0
        %v3788 = vadd.f32 %v3403, %v3787
        %v3789 = vpop.f32.mrb[0].mxu0
        %v3790 = vadd.f32 %v3399, %v3789
        %v3791 = vpop.f32.mrb[0].mxu0
        %v3792 = vadd.f32 %v3403, %v3791
        %3793 = vdwg.mxu0
        %v3794 = vmax.f32 %v3603, 0.0
        %v3795 = vmax.f32 %v3605, 0.0
        %v3796 = vmax.f32 %v3716, 0.0
        %v3797 = vmax.f32 %v3718, 0.0
        %v3798 = vmax.f32 %v3607, 0.0
        %v3799 = vmax.f32 %v3609, 0.0
        %v3800 = vmax.f32 %v3720, 0.0
        %v3801 = vmax.f32 %v3722, 0.0
        %v3802 = vmax.f32 %v3613, 0.0
        %v3803 = vmax.f32 %v3615, 0.0
        %v3804 = vmax.f32 %v3726, 0.0
        %v3805 = vmax.f32 %v3728, 0.0
        %v3806 = vmax.f32 %v3617, 0.0
        %v3807 = vmax.f32 %v3619, 0.0
        %v3808 = vmax.f32 %v3730, 0.0
        %v3809 = vmax.f32 %v3732, 0.0
        %v3810 = vmax.f32 %v3623, 0.0
        %v3811 = vmax.f32 %v3625, 0.0
        %v3812 = vmax.f32 %v3736, 0.0
        %v3813 = vmax.f32 %v3738, 0.0
        %v3814 = vmax.f32 %v3627, 0.0
        %v3815 = vmax.f32 %v3629, 0.0
        %v3816 = vmax.f32 %v3740, 0.0
        %v3817 = vmax.f32 %v3742, 0.0
        %v3818 = vmax.f32 %v3633, 0.0
        %v3819 = vmax.f32 %v3635, 0.0
        %v3820 = vmax.f32 %v3746, 0.0
        %v3821 = vmax.f32 %v3748, 0.0
        %v3822 = vmax.f32 %v3637, 0.0
        %v3823 = vmax.f32 %v3639, 0.0
        %v3824 = vmax.f32 %v3750, 0.0
        %v3825 = vmax.f32 %v3752, 0.0
        %v3826 = vmax.f32 %v3643, 0.0
        %v3827 = vmax.f32 %v3645, 0.0
        %v3828 = vmax.f32 %v3756, 0.0
        %v3829 = vmax.f32 %v3758, 0.0
        %v3830 = vmax.f32 %v3647, 0.0
        %v3831 = vmax.f32 %v3649, 0.0
        %v3832 = vmax.f32 %v3760, 0.0
        %v3833 = vmax.f32 %v3762, 0.0
        %v3834 = vmax.f32 %v3653, 0.0
        %v3835 = vmax.f32 %v3655, 0.0
        %v3836 = vmax.f32 %v3766, 0.0
        %v3837 = vmax.f32 %v3768, 0.0
        %v3838 = vmax.f32 %v3657, 0.0
        %v3839 = vmax.f32 %v3659, 0.0
        %v3840 = vmax.f32 %v3770, 0.0
        %v3841 = vmax.f32 %v3772, 0.0
        %v3842 = vmax.f32 %v3663, 0.0
        %v3843 = vmax.f32 %v3665, 0.0
        %v3844 = vmax.f32 %v3776, 0.0
        %v3845 = vmax.f32 %v3778, 0.0
        %v3846 = vmax.f32 %v3667, 0.0
        %v3847 = vmax.f32 %v3669, 0.0
        %v3848 = vmax.f32 %v3780, 0.0
        %v3849 = vmax.f32 %v3782, 0.0
        %v3850 = vmax.f32 %v3673, 0.0
        %v3851 = vmax.f32 %v3675, 0.0
        %v3852 = vmax.f32 %v3786, 0.0
        %v3853 = vmax.f32 %v3788, 0.0
        %v3854 = vmax.f32 %v3677, 0.0
        %v3855 = vmax.f32 %v3679, 0.0
        %v3856 = vmax.f32 %v3790, 0.0
        %v3857 = vmax.f32 %v3792, 0.0
        %v3858 = vpack.c.bf16 %v3798, %v3794
        %v3859 = vpack.c.bf16 %v3799, %v3795
        %v3860 = vpack.c.bf16 %v3800, %v3796
        %v3861 = vpack.c.bf16 %v3801, %v3797
        %v3862 = vpack.c.bf16 %v3806, %v3802
        %v3863 = vpack.c.bf16 %v3807, %v3803
        %v3864 = vpack.c.bf16 %v3808, %v3804
        %v3865 = vpack.c.bf16 %v3809, %v3805
        %v3866 = vpack.c.bf16 %v3814, %v3810
        %v3867 = vpack.c.bf16 %v3815, %v3811
        %v3868 = vpack.c.bf16 %v3816, %v3812
        %v3869 = vpack.c.bf16 %v3817, %v3813
        %v3870 = vpack.c.bf16 %v3822, %v3818
        %v3871 = vpack.c.bf16 %v3823, %v3819
        %v3872 = vpack.c.bf16 %v3824, %v3820
        %v3873 = vpack.c.bf16 %v3825, %v3821
        %v3874 = vpack.c.bf16 %v3830, %v3826
        %v3875 = vpack.c.bf16 %v3831, %v3827
        %v3876 = vpack.c.bf16 %v3832, %v3828
        %v3877 = vpack.c.bf16 %v3833, %v3829
        %v3878 = vpack.c.bf16 %v3838, %v3834
        %v3879 = vpack.c.bf16 %v3839, %v3835
        %v3880 = vpack.c.bf16 %v3840, %v3836
        %v3881 = vpack.c.bf16 %v3841, %v3837
        %v3882 = vpack.c.bf16 %v3846, %v3842
        %v3883 = vpack.c.bf16 %v3847, %v3843
        %v3884 = vpack.c.bf16 %v3848, %v3844
        %v3885 = vpack.c.bf16 %v3849, %v3845
        %v3886 = vpack.c.bf16 %v3854, %v3850
        %v3887 = vpack.c.bf16 %v3855, %v3851
        %v3888 = vpack.c.bf16 %v3856, %v3852
        %v3889 = vpack.c.bf16 %v3857, %v3853
        %v3891 = vlaneseq
        %v3892 = vshrl.u32 %v3891, 7
        %v3893 = vsub.s32 0, %v3892
        %v3894 = vrot.slane %v3378, %v3893
        %v3960 = vunpack.c.l.b16 %v3314
        %v3961 = vunpack.c.l.b16 %v3315
        %v3962 = vunpack.c.l.b16 %v3316
        %v3963 = vunpack.c.l.b16 %v3317
        %v3964 = vunpack.c.l.b16 %v3318
        %v3965 = vunpack.c.l.b16 %v3319
        %v3966 = vunpack.c.l.b16 %v3320
        %v3967 = vunpack.c.l.b16 %v3321
        %v3968 = vunpack.c.l.b16 %v3322
        %v3969 = vunpack.c.l.b16 %v3323
        %v3970 = vunpack.c.l.b16 %v3324
        %v3971 = vunpack.c.l.b16 %v3325
        %v3972 = vunpack.c.l.b16 %v3326
        %v3973 = vunpack.c.l.b16 %v3327
        %v3974 = vunpack.c.l.b16 %v3328
        %v3975 = vunpack.c.l.b16 %v3329
        %v3976 = vunpack.c.l.b16 %v3330
        %v3977 = vunpack.c.l.b16 %v3331
        %v3978 = vunpack.c.l.b16 %v3332
        %v3979 = vunpack.c.l.b16 %v3333
        %v3980 = vunpack.c.l.b16 %v3334
        %v3981 = vunpack.c.l.b16 %v3335
        %v3982 = vunpack.c.l.b16 %v3336
        %v3983 = vunpack.c.l.b16 %v3337
        %v3984 = vunpack.c.l.b16 %v3338
        %v3985 = vunpack.c.l.b16 %v3339
        %v3986 = vunpack.c.l.b16 %v3340
        %v3987 = vunpack.c.l.b16 %v3341
        %v3988 = vunpack.c.l.b16 %v3342
        %v3989 = vunpack.c.l.b16 %v3343
        %v3990 = vunpack.c.l.b16 %v3344
        %v3991 = vunpack.c.l.b16 %v3345
        %v3992 = vunpack.c.l.b16 %v3346
        %v3993 = vunpack.c.l.b16 %v3347
        %v3994 = vunpack.c.l.b16 %v3348
        %v3995 = vunpack.c.l.b16 %v3349
        %v3996 = vunpack.c.l.b16 %v3350
        %v3997 = vunpack.c.l.b16 %v3351
        %v3998 = vunpack.c.l.b16 %v3352
        %v3999 = vunpack.c.l.b16 %v3353
        %v4000 = vunpack.c.l.b16 %v3354
        %v4001 = vunpack.c.l.b16 %v3355
        %v4002 = vunpack.c.l.b16 %v3356
        %v4003 = vunpack.c.l.b16 %v3357
        %v4004 = vunpack.c.l.b16 %v3358
        %v4005 = vunpack.c.l.b16 %v3359
        %v4006 = vunpack.c.l.b16 %v3360
        %v4007 = vunpack.c.l.b16 %v3361
        %v4008 = vunpack.c.l.b16 %v3362
        %v4009 = vunpack.c.l.b16 %v3363
        %v4010 = vunpack.c.l.b16 %v3364
        %v4011 = vunpack.c.l.b16 %v3365
        %v4012 = vunpack.c.l.b16 %v3366
        %v4013 = vunpack.c.l.b16 %v3367
        %v4014 = vunpack.c.l.b16 %v3368
        %v4015 = vunpack.c.l.b16 %v3369
        %v4016 = vunpack.c.l.b16 %v3370
        %v4017 = vunpack.c.l.b16 %v3371
        %v4018 = vunpack.c.l.b16 %v3372
        %v4019 = vunpack.c.l.b16 %v3373
        %v4020 = vunpack.c.l.b16 %v3374
        %v4021 = vunpack.c.l.b16 %v3375
        %v4022 = vunpack.c.l.b16 %v3376
        %v4023 = vunpack.c.l.b16 %v3377
        %v4024 = vpack.c.b16 %v3961, %v3960
        %v4025 = vpack.c.b16 %v3963, %v3962
        %v4026 = vpack.c.b16 %v3965, %v3964
        %v4027 = vpack.c.b16 %v3967, %v3966
        %v4028 = vpack.c.b16 %v3969, %v3968
        %v4029 = vpack.c.b16 %v3971, %v3970
        %v4030 = vpack.c.b16 %v3973, %v3972
        %v4031 = vpack.c.b16 %v3975, %v3974
        %v4032 = vpack.c.b16 %v3977, %v3976
        %v4033 = vpack.c.b16 %v3979, %v3978
        %v4034 = vpack.c.b16 %v3981, %v3980
        %v4035 = vpack.c.b16 %v3983, %v3982
        %v4036 = vpack.c.b16 %v3985, %v3984
        %v4037 = vpack.c.b16 %v3987, %v3986
        %v4038 = vpack.c.b16 %v3989, %v3988
        %v4039 = vpack.c.b16 %v3991, %v3990
        %v4040 = vpack.c.b16 %v3993, %v3992
        %v4041 = vpack.c.b16 %v3995, %v3994
        %v4042 = vpack.c.b16 %v3997, %v3996
        %v4043 = vpack.c.b16 %v3999, %v3998
        %v4044 = vpack.c.b16 %v4001, %v4000
        %v4045 = vpack.c.b16 %v4003, %v4002
        %v4046 = vpack.c.b16 %v4005, %v4004
        %v4047 = vpack.c.b16 %v4007, %v4006
        %v4048 = vpack.c.b16 %v4009, %v4008
        %v4049 = vpack.c.b16 %v4011, %v4010
        %v4050 = vpack.c.b16 %v4013, %v4012
        %v4051 = vpack.c.b16 %v4015, %v4014
        %v4052 = vpack.c.b16 %v4017, %v4016
        %v4053 = vpack.c.b16 %v4019, %v4018
        %v4054 = vpack.c.b16 %v4021, %v4020
        %v4055 = vpack.c.b16 %v4023, %v4022
        %4088 = vmatprep.subr.bf16.mxu0 0
        %4089 = vmatpush1.bf16.msra.mxu0 %v4024
        %4090 = vmatprep.subr.bf16.mxu0 0
        %4091 = vmatpush1.bf16.msra.mxu0 %v4025
        %4092 = vmatprep.subr.bf16.mxu0 0
        %4093 = vmatpush1.bf16.msra.mxu0 %v4026
        %4094 = vmatprep.subr.bf16.mxu0 0
        %4095 = vmatpush1.bf16.msra.mxu0 %v4027
        %4096 = vmatprep.subr.bf16.mxu0 0
        %4097 = vmatpush1.bf16.msra.mxu0 %v4028
        %4098 = vmatprep.subr.bf16.mxu0 0
        %4099 = vmatpush1.bf16.msra.mxu0 %v4029
        %4100 = vmatprep.subr.bf16.mxu0 0
        %4101 = vmatpush1.bf16.msra.mxu0 %v4030
        %4102 = vmatprep.subr.bf16.mxu0 0
        %4103 = vmatpush1.bf16.msra.mxu0 %v4031
        %4104 = vmatprep.subr.bf16.mxu0 0
        %4105 = vmatpush1.bf16.msra.mxu0 %v4032
        %4106 = vmatprep.subr.bf16.mxu0 0
        %4107 = vmatpush1.bf16.msra.mxu0 %v4033
        %4108 = vmatprep.subr.bf16.mxu0 0
        %4109 = vmatpush1.bf16.msra.mxu0 %v4034
        %4110 = vmatprep.subr.bf16.mxu0 0
        %4111 = vmatpush1.bf16.msra.mxu0 %v4035
        %4112 = vmatprep.subr.bf16.mxu0 0
        %4113 = vmatpush1.bf16.msra.mxu0 %v4036
        %4114 = vmatprep.subr.bf16.mxu0 0
        %4115 = vmatpush1.bf16.msra.mxu0 %v4037
        %4116 = vmatprep.subr.bf16.mxu0 0
        %4117 = vmatpush1.bf16.msra.mxu0 %v4038
        %4118 = vmatprep.subr.bf16.mxu0 0
        %4119 = vmatpush1.bf16.msra.mxu0 %v4039
        %4120 = vmatprep.mubr.bf16.mxu0 %v3859
        %4121 = vmatmul.mubr.bf16.gmra.mrb[0].mxu0 %v3858
        %v4122 = vpop.f32.mrb[0].mxu0
        %v4123 = vadd.f32 %v3894, %v4122
        %v4124 = vpop.f32.mrb[0].mxu0
        %v4125 = vpop.f32.mrb[0].mxu0
        %v4126 = vadd.f32 %v3894, %v4125
        %v4127 = vpop.f32.mrb[0].mxu0
        %4128 = vmatprep.mubr.bf16.mxu0 %v3863
        %4129 = vmatmul.mubr.bf16.gmra.mrb[0].mxu0 %v3862
        %v4130 = vpop.f32.mrb[0].mxu0
        %v4131 = vadd.f32 %v3894, %v4130
        %v4132 = vpop.f32.mrb[0].mxu0
        %v4133 = vpop.f32.mrb[0].mxu0
        %v4134 = vadd.f32 %v3894, %v4133
        %v4135 = vpop.f32.mrb[0].mxu0
        %4136 = vmatprep.mubr.bf16.mxu0 %v3867
        %4137 = vmatmul.mubr.bf16.gmra.mrb[0].mxu0 %v3866
        %v4138 = vpop.f32.mrb[0].mxu0
        %v4139 = vadd.f32 %v3894, %v4138
        %v4140 = vpop.f32.mrb[0].mxu0
        %v4141 = vpop.f32.mrb[0].mxu0
        %v4142 = vadd.f32 %v3894, %v4141
        %v4143 = vpop.f32.mrb[0].mxu0
        %4144 = vmatprep.mubr.bf16.mxu0 %v3871
        %4145 = vmatmul.mubr.bf16.gmra.mrb[0].mxu0 %v3870
        %v4146 = vpop.f32.mrb[0].mxu0
        %v4147 = vadd.f32 %v3894, %v4146
        %v4148 = vpop.f32.mrb[0].mxu0
        %v4149 = vpop.f32.mrb[0].mxu0
        %v4150 = vadd.f32 %v3894, %v4149
        %v4151 = vpop.f32.mrb[0].mxu0
        %4152 = vmatprep.mubr.bf16.mxu0 %v3875
        %4153 = vmatmul.mubr.bf16.gmra.mrb[0].mxu0 %v3874
        %v4154 = vpop.f32.mrb[0].mxu0
        %v4155 = vadd.f32 %v3894, %v4154
        %v4156 = vpop.f32.mrb[0].mxu0
        %v4157 = vpop.f32.mrb[0].mxu0
        %v4158 = vadd.f32 %v3894, %v4157
        %v4159 = vpop.f32.mrb[0].mxu0
        %4160 = vmatprep.mubr.bf16.mxu0 %v3879
        %4161 = vmatmul.mubr.bf16.gmra.mrb[0].mxu0 %v3878
        %v4162 = vpop.f32.mrb[0].mxu0
        %v4163 = vadd.f32 %v3894, %v4162
        %v4164 = vpop.f32.mrb[0].mxu0
        %v4165 = vpop.f32.mrb[0].mxu0
        %v4166 = vadd.f32 %v3894, %v4165
        %v4167 = vpop.f32.mrb[0].mxu0
        %4168 = vmatprep.mubr.bf16.mxu0 %v3883
        %4169 = vmatmul.mubr.bf16.gmra.mrb[0].mxu0 %v3882
        %v4170 = vpop.f32.mrb[0].mxu0
        %v4171 = vadd.f32 %v3894, %v4170
        %v4172 = vpop.f32.mrb[0].mxu0
        %v4173 = vpop.f32.mrb[0].mxu0
        %v4174 = vadd.f32 %v3894, %v4173
        %v4175 = vpop.f32.mrb[0].mxu0
        %4176 = vmatprep.mubr.bf16.mxu0 %v3887
        %4177 = vmatmul.mubr.bf16.gmra.mrb[0].mxu0 %v3886
        %v4178 = vpop.f32.mrb[0].mxu0
        %v4179 = vadd.f32 %v3894, %v4178
        %v4180 = vpop.f32.mrb[0].mxu0
        %v4181 = vpop.f32.mrb[0].mxu0
        %v4182 = vadd.f32 %v3894, %v4181
        %v4183 = vpop.f32.mrb[0].mxu0
        %4184 = vdwg.mxu0
        %4185 = vmatprep.subr.bf16.mxu0 0
        %4186 = vmatpush1.bf16.msra.mxu0 %v4040
        %4187 = vmatprep.subr.bf16.mxu0 0
        %4188 = vmatpush1.bf16.msra.mxu0 %v4041
        %4189 = vmatprep.subr.bf16.mxu0 0
        %4190 = vmatpush1.bf16.msra.mxu0 %v4042
        %4191 = vmatprep.subr.bf16.mxu0 0
        %4192 = vmatpush1.bf16.msra.mxu0 %v4043
        %4193 = vmatprep.subr.bf16.mxu0 0
        %4194 = vmatpush1.bf16.msra.mxu0 %v4044
        %4195 = vmatprep.subr.bf16.mxu0 0
        %4196 = vmatpush1.bf16.msra.mxu0 %v4045
        %4197 = vmatprep.subr.bf16.mxu0 0
        %4198 = vmatpush1.bf16.msra.mxu0 %v4046
        %4199 = vmatprep.subr.bf16.mxu0 0
        %4200 = vmatpush1.bf16.msra.mxu0 %v4047
        %4201 = vmatprep.subr.bf16.mxu0 0
        %4202 = vmatpush1.bf16.msra.mxu0 %v4048
        %4203 = vmatprep.subr.bf16.mxu0 0
        %4204 = vmatpush1.bf16.msra.mxu0 %v4049
        %4205 = vmatprep.subr.bf16.mxu0 0
        %4206 = vmatpush1.bf16.msra.mxu0 %v4050
        %4207 = vmatprep.subr.bf16.mxu0 0
        %4208 = vmatpush1.bf16.msra.mxu0 %v4051
        %4209 = vmatprep.subr.bf16.mxu0 0
        %4210 = vmatpush1.bf16.msra.mxu0 %v4052
        %4211 = vmatprep.subr.bf16.mxu0 0
        %4212 = vmatpush1.bf16.msra.mxu0 %v4053
        %4213 = vmatprep.subr.bf16.mxu0 0
        %4214 = vmatpush1.bf16.msra.mxu0 %v4054
        %4215 = vmatprep.subr.bf16.mxu0 0
        %4216 = vmatpush1.bf16.msra.mxu0 %v4055
        %4217 = vmatprep.mubr.bf16.mxu0 %v3861
        %4218 = vmatmul.mubr.bf16.gmra.mrb[0].mxu0 %v3860
        %v4219 = vpop.f32.mrb[0].mxu0
        %v4220 = vadd.f32 %v4123, %v4219
        %v4221 = vpop.f32.mrb[0].mxu0
        %v4222 = vpop.f32.mrb[0].mxu0
        %v4223 = vadd.f32 %v4126, %v4222
        %v4224 = vpop.f32.mrb[0].mxu0
        %4225 = vmatprep.mubr.bf16.mxu0 %v3865
        %4226 = vmatmul.mubr.bf16.gmra.mrb[0].mxu0 %v3864
        %v4227 = vpop.f32.mrb[0].mxu0
        %v4228 = vadd.f32 %v4131, %v4227
        %v4229 = vpop.f32.mrb[0].mxu0
        %v4230 = vpop.f32.mrb[0].mxu0
        %v4231 = vadd.f32 %v4134, %v4230
        %v4232 = vpop.f32.mrb[0].mxu0
        %4233 = vmatprep.mubr.bf16.mxu0 %v3869
        %4234 = vmatmul.mubr.bf16.gmra.mrb[0].mxu0 %v3868
        %v4235 = vpop.f32.mrb[0].mxu0
        %v4236 = vadd.f32 %v4139, %v4235
        %v4237 = vpop.f32.mrb[0].mxu0
        %v4238 = vpop.f32.mrb[0].mxu0
        %v4239 = vadd.f32 %v4142, %v4238
        %v4240 = vpop.f32.mrb[0].mxu0
        %4241 = vmatprep.mubr.bf16.mxu0 %v3873
        %4242 = vmatmul.mubr.bf16.gmra.mrb[0].mxu0 %v3872
        %v4243 = vpop.f32.mrb[0].mxu0
        %v4244 = vadd.f32 %v4147, %v4243
        %v4245 = vpop.f32.mrb[0].mxu0
        %v4246 = vpop.f32.mrb[0].mxu0
        %v4247 = vadd.f32 %v4150, %v4246
        %v4248 = vpop.f32.mrb[0].mxu0
        %4249 = vmatprep.mubr.bf16.mxu0 %v3877
        %4250 = vmatmul.mubr.bf16.gmra.mrb[0].mxu0 %v3876
        %v4251 = vpop.f32.mrb[0].mxu0
        %v4252 = vadd.f32 %v4155, %v4251
        %v4253 = vpop.f32.mrb[0].mxu0
        %v4254 = vpop.f32.mrb[0].mxu0
        %v4255 = vadd.f32 %v4158, %v4254
        %v4256 = vpop.f32.mrb[0].mxu0
        %4257 = vmatprep.mubr.bf16.mxu0 %v3881
        %4258 = vmatmul.mubr.bf16.gmra.mrb[0].mxu0 %v3880
        %v4259 = vpop.f32.mrb[0].mxu0
        %v4260 = vadd.f32 %v4163, %v4259
        %v4261 = vpop.f32.mrb[0].mxu0
        %v4262 = vpop.f32.mrb[0].mxu0
        %v4263 = vadd.f32 %v4166, %v4262
        %v4264 = vpop.f32.mrb[0].mxu0
        %4265 = vmatprep.mubr.bf16.mxu0 %v3885
        %4266 = vmatmul.mubr.bf16.gmra.mrb[0].mxu0 %v3884
        %v4267 = vpop.f32.mrb[0].mxu0
        %v4268 = vadd.f32 %v4171, %v4267
        %v4269 = vpop.f32.mrb[0].mxu0
        %v4270 = vpop.f32.mrb[0].mxu0
        %v4271 = vadd.f32 %v4174, %v4270
        %v4272 = vpop.f32.mrb[0].mxu0
        %4273 = vmatprep.mubr.bf16.mxu0 %v3889
        %4274 = vmatmul.mubr.bf16.gmra.mrb[0].mxu0 %v3888
        %v4275 = vpop.f32.mrb[0].mxu0
        %v4276 = vadd.f32 %v4179, %v4275
        %v4277 = vpop.f32.mrb[0].mxu0
        %v4278 = vpop.f32.mrb[0].mxu0
        %v4279 = vadd.f32 %v4182, %v4278
        %v4280 = vpop.f32.mrb[0].mxu0
        %4281 = vdwg.mxu0
        %v4282 = vadd.f32 %v3265, %v4220
        %v4283 = vadd.f32 %v3266, %v4223
        %v4284 = vadd.f32 %v3267, %v4228
        %v4285 = vadd.f32 %v3268, %v4231
        %v4286 = vadd.f32 %v3269, %v4236
        %v4287 = vadd.f32 %v3270, %v4239
        %v4288 = vadd.f32 %v3271, %v4244
        %v4289 = vadd.f32 %v3272, %v4247
        %v4290 = vadd.f32 %v3273, %v4252
        %v4291 = vadd.f32 %v3274, %v4255
        %v4292 = vadd.f32 %v3275, %v4260
        %v4293 = vadd.f32 %v3276, %v4263
        %v4294 = vadd.f32 %v3277, %v4268
        %v4295 = vadd.f32 %v3278, %v4271
        %v4296 = vadd.f32 %v3279, %v4276
        %v4297 = vadd.f32 %v3280, %v4279
        %4298 = vst [vmem:[%s408] sm:$0xff] %v4282
        %4299 = vst [vmem:[%s408 + $0x8] sm:$0xff] %v4283
        %4300 = vst [vmem:[%s408 + $0x10] sm:$0xff] %v4284
        %4301 = vst [vmem:[%s408 + $0x18] sm:$0xff] %v4285
        %4302 = vst [vmem:[%s408 + $0x20] sm:$0xff] %v4286
        %4303 = vst [vmem:[%s408 + $0x28] sm:$0xff] %v4287
        %4304 = vst [vmem:[%s408 + $0x30] sm:$0xff] %v4288
        %4305 = vst [vmem:[%s408 + $0x38] sm:$0xff] %v4289
        %4306 = vst [vmem:[%s408 + $0x40] sm:$0xff] %v4290
        %4307 = vst [vmem:[%s408 + $0x48] sm:$0xff] %v4291
        %4308 = vst [vmem:[%s408 + $0x50] sm:$0xff] %v4292
        %4309 = vst [vmem:[%s408 + $0x58] sm:$0xff] %v4293
        %4310 = vst [vmem:[%s408 + $0x60] sm:$0xff] %v4294
        %4311 = vst [vmem:[%s408 + $0x68] sm:$0xff] %v4295
        %4312 = vst [vmem:[%s408 + $0x70] sm:$0xff] %v4296
        %4313 = vst [vmem:[%s408 + $0x78] sm:$0xff] %v4297
        %s4314 = sand.u32 %s230, 1
        %s4315 = scalar_lea.sflag [#allocation4], %s4314
        %s4316 = sand.u32 %s230, 1
        %s4317 = smul.addr %s4316, 128
        %s4318 = scalar_lea.vmem [#allocation11], %s4317
        // Predicated region
        $region77: #{tpu_custom_call.1} parent=55 // pred_check
          %p4319 = pneg %p240
        $region78: #{tpu_custom_call.1} parent=55 // pred_check_branch
          %4321 = sbr.rel (%p4319) target = $region80
        $region79: #{tpu_custom_call.1} parent=55 // pred_region
          %s4323 = ssub.s32 2048, 2048
          %4324 = vsyncadd %s4315, %s4323
          %s4325 = smul.addr %s28, 16
          %s4326 = smul.addr %s4325, 128
          %s4327 = scalar_lea.hbm %s9, %s4326
          %s4328 = sshll.u32 %s4318, 4
          %s4329 = int_to_ptr.vmem [resolvable:$true] %s4328
          %4334 = dma.vmem_to_hbm [thread:$0]  %s4329, 2048, %s4327, %s4315, 128, 128, 8
        $region80: #{tpu_custom_call.1} parent=55 // pred_fallthru
          _
      $region56: #{tpu_custom_call.1} parent=5 // pred_fallthru
        _
      %p4335 = scmp.le.s32.totalorder 2, %s23
      // Predicated region
      $region81: #{tpu_custom_call.1} parent=5 // pred_check
        %p4336 = pneg %p4335
      $region82: #{tpu_custom_call.1} parent=5 // pred_check_branch
        %4338 = sbr.rel (%p4336) target = $region84
      $region83: #{tpu_custom_call.1} parent=5 // pred_region
        %s4339 = ssub.s32 %s23, 2
        // Predicated region
        $region85: #{tpu_custom_call.1} parent=83 // pred_check
          %p4340 = pneg %p246
        $region86: #{tpu_custom_call.1} parent=83 // pred_check_branch
          %4342 = sbr.rel (%p4340) target = $region88
        $region87: #{tpu_custom_call.1} parent=83 // pred_region
          %s4343 = sand.u32 %s231, 1
          %s4344 = scalar_lea.sflag [#allocation4], %s4343
          %s4345 = sand.u32 %s231, 1
          %s4346 = smul.addr %s4345, 128
          %s4347 = scalar_lea.vmem [#allocation11], %s4346
          %4348 = dma.done %s4344, 2048
        $region88: #{tpu_custom_call.1} parent=83 // pred_fallthru
          _
      $region84: #{tpu_custom_call.1} parent=5 // pred_fallthru
        _
    $region6: #{tpu_custom_call.1} parent=1 // loop_footer
      %s27 = sadd.s32 1, %s23
    $region7: #{tpu_custom_call.1} parent=1 // loop_footer_branch
      %22 = sbr.rel target = $region3
    $region8: #{tpu_custom_call.1} parent=1 // loop_exit
      _
    %4349 = vsyncpa [#allocation3], 1
    %s4350 = scalar_lea.sflag [#allocation3], 1
    %4351 = vsyncpa %s4350, 1
    %4352 = vsyncpa [#allocation6], 1
    %4353 = vsyncpa [#allocation9], 1
    %4354 = vsyncpa [#allocation4], 1
    %s4355 = scalar_lea.sflag [#allocation4], 1
    %4356 = vsyncpa %s4355, 1

</llo_original>
